<compile_context>
chip_gen: v6e
topology: v6e:2x2x1
jax: 0.10.0
libtpu: 0.0.40
codegen_flags: <defaults>
</compile_context>

<pallas_src>
import jax
import jax.numpy as jnp
from jax import lax
from jax.experimental import pallas as pl
from jax.experimental.pallas import tpu as pltpu

# ------------------------- small synthetic config ---------------------------
B = 2             # batch
C_IN = 4          # backbone output channels
H = W = 16        # feature-map spatial size
HW = H * W
D = 256           # hidden_dim (transformer.d_model)
N_GROUPS = 32     # GroupNorm(32, hidden_dim)
CG = D // N_GROUPS
H_BERT = 128      # bert hidden size (synthetic, real = 768)
L_TEXT = 8        # number of text tokens produced by the tokenizer
MAX_TEXT_LEN = 32  # max_text_len (real = 256)
NUM_Q = 16        # num_queries
NUM_DEC = 2       # transformer.num_decoder_layers
T_PAD = 64        # per-batch padded text width so B*T_PAD = 128 lanes
EPS_GN = 1e-5
EPS_INV_SIG = 1e-3

assert B * T_PAD % 128 == 0 and T_PAD >= MAX_TEXT_LEN


def _full_spec(shape):
    """Full-array block at the single grid point."""
    nd = len(shape)
    return pl.BlockSpec(shape, lambda i, _nd=nd: (0,) * _nd)


# ----------------------------- fused Pallas kernel ---------------------------
def _gdino_head_kernel(
        bert_ref, wfm_ref, bfm_ref,                               # feat_map
        img_ref, wpr_ref, bpr_ref, gam_ref, bet_ref,              # proj + GN
        hs_ref, refpt_ref,                                        # decoder out
        w1_ref, b1_ref, w2_ref, b2_ref, w3_ref, b3_ref,           # bbox MLP
        cmask_ref,                                                # (1, B*T_PAD)
        enc_out, src_out, coord_out, logit_out):
    f32 = jnp.float32
    bf16 = jnp.bfloat16

    # ---- feat_map: Linear(bert_hidden -> hidden_dim) ----
    x_txt = bert_ref[...].reshape(B * L_TEXT, H_BERT)
    enc = jnp.dot(x_txt, wfm_ref[...], preferred_element_type=f32) + bfm_ref[...]
    enc_out[...] = enc.reshape(B, L_TEXT, D)

    # ---- input_proj: 1x1 Conv2d(C_in -> D) + GroupNorm(32, D), token-major ----
    x_img = img_ref[...].reshape(B * HW, C_IN)
    y = jnp.dot(x_img, wpr_ref[...], preferred_element_type=f32) + bpr_ref[...]
    y3 = y.reshape(B, HW, D)

    # Iota-generated group-selection matrix sel[c, g] = 1 iff c // CG == g.
    # Replaces the previously DMA'd (D,D) group-projection constant.
    ch = lax.broadcasted_iota(jnp.int32, (D, N_GROUPS), 0)
    gr = lax.broadcasted_iota(jnp.int32, (D, N_GROUPS), 1)
    sel = ((ch >= gr * CG) & (ch < (gr + 1) * CG)).astype(f32)    # (D, 32)
    inv_n = 1.0 / float(HW * CG)

    s1 = jnp.sum(y3, axis=1)                                      # (B, D)
    mean_g = jnp.dot(s1, sel, preferred_element_type=f32) * inv_n  # (B, 32)
    mean_c = lax.dot_general(mean_g, sel, (((1,), (1,)), ((), ())),
                             preferred_element_type=f32)           # (B, D)
    cen = y3 - mean_c[:, None, :]
    s2 = jnp.sum(cen * cen, axis=1)                               # (B, D)
    var_g = jnp.dot(s2, sel, preferred_element_type=f32) * inv_n   # (B, 32)
    inv_g = lax.rsqrt(var_g + EPS_GN)
    inv_c = lax.dot_general(inv_g, sel, (((1,), (1,)), ((), ())),
                            preferred_element_type=f32)            # (B, D)
    src_out[...] = cen * inv_c[:, None, :] * gam_ref[...] + bet_ref[...]

    # ---- bbox MLP(D->D->D->4) + inverse_sigmoid(ref) + sigmoid ----
    # w1/w2 arrive as bf16 (halved DMA); accumulation stays f32.
    hs_flat = hs_ref[...].reshape(NUM_DEC * B * NUM_Q, D)          # (64, D) f32
    h = jnp.maximum(
        jnp.dot(hs_flat.astype(bf16), w1_ref[...],
                preferred_element_type=f32) + b1_ref[...], 0.0)
    h = jnp.maximum(
        jnp.dot(h.astype(bf16), w2_ref[...],
                preferred_element_type=f32) + b2_ref[...], 0.0)
    delta = jnp.dot(h, w3_ref[...], preferred_element_type=f32) + b3_ref[...]
    r = jnp.clip(refpt_ref[...].reshape(NUM_DEC * B * NUM_Q, 4), 0.0, 1.0)
    inv_sig = jnp.log(jnp.maximum(r, EPS_INV_SIG) /
                      jnp.maximum(1.0 - r, EPS_INV_SIG))
    coord_out[...] = jax.nn.sigmoid(delta + inv_sig)               # (64, 4)

    # ---- ContrastiveEmbed: one fused matmul across layers AND batches ----
    # RHS = batch-b text rows stacked at sublane offset b*T_PAD, zero padded.
    zpad = jnp.zeros((T_PAD - L_TEXT, D), f32)
    parts = []
    for b in range(B):                                             # B = 2, static
        parts.append(enc[b * L_TEXT:(b + 1) * L_TEXT])
        parts.append(zpad)
    txt_all = jnp.concatenate(parts, axis=0)                       # (B*T_PAD, D)
    logits = lax.dot_general(hs_flat, txt_all, (((1,), (1,)), ((), ())),
                             preferred_element_type=f32)           # (64, 128)
    # column mask: -inf where token is padding / masked (matches ContrastiveEmbed)
    logit_out[...] = jnp.where(cmask_ref[...] > 0, logits, -jnp.inf)


# ------------------------------ full head pass ------------------------------
@jax.jit
def grounding_dino_heads(backbone_feat_nchw, bert_last_hidden, text_token_mask,
                         hs, reference, params):
    """GroundingDINO-owned compute of forward(): feat_map, input_proj[l],
    bbox_embed + inverse_sigmoid + sigmoid, class_embed (ContrastiveEmbed),
    fused into one Pallas kernel."""
    # TODO(synk): backbone, BERT/tokenizer, deformable transformer and the CDN
    # denoising branch are external sub-modules; their outputs
    # (backbone_feat_nchw, bert_last_hidden, hs, reference) are synthesized.

    # NCHW -> [B, HW, C_in] once on the input side (channels on lanes).
    x_flat = jnp.transpose(backbone_feat_nchw, (0, 2, 3, 1)).reshape(B, HW, C_IN)

    # Column mask for the fused class head: lane b*T_PAD + k is valid iff
    # k < L_TEXT and text_token_mask[b, k].
    cmask = jnp.zeros((B, T_PAD), jnp.int32).at[:, :L_TEXT].set(
        text_token_mask.astype(jnp.int32))
    cmask = cmask.reshape(1, B * T_PAD)

    w1, b1, w2, b2, w3, b3 = params["bbox_mlp"]

    inputs = (
        bert_last_hidden,
        params["feat_map_w"], params["feat_map_b"].reshape(1, D),
        x_flat,
        params["proj_w"], params["proj_b"].reshape(1, D),
        params["gn_gamma"].reshape(1, D), params["gn_beta"].reshape(1, D),
        hs, reference,
        w1.astype(jnp.bfloat16), b1.reshape(1, D),
        w2.astype(jnp.bfloat16), b2.reshape(1, D),
        w3, b3.reshape(1, 4),
        cmask,
    )

    out_shape = (
        jax.ShapeDtypeStruct((B, L_TEXT, D), jnp.float32),                 # text
        jax.ShapeDtypeStruct((B, HW, D), jnp.float32),                     # src
        jax.ShapeDtypeStruct((NUM_DEC * B * NUM_Q, 4), jnp.float32),       # boxes
        jax.ShapeDtypeStruct((NUM_DEC * B * NUM_Q, B * T_PAD), jnp.float32),
    )

    encoded_text, src, coord_flat, logit_flat = pl.pallas_call(
        _gdino_head_kernel,
        out_shape=out_shape,
        grid=(1,),
        in_specs=[_full_spec(x.shape) for x in inputs],
        out_specs=tuple(_full_spec(s.shape) for s in out_shape),
        compiler_params=pltpu.CompilerParams(
            dimension_semantics=("arbitrary",)),
    )(*inputs)

    outputs_coord = coord_flat.reshape(NUM_DEC, B, NUM_Q, 4)
    lf = logit_flat.reshape(NUM_DEC, B, NUM_Q, B, T_PAD)
    outputs_class = jnp.stack(
        [lf[:, b, :, b, :MAX_TEXT_LEN] for b in range(B)], axis=1)

    return {
        "pred_logits": outputs_class[-1],       # (B, Q, max_text_len)
        "pred_boxes": outputs_coord[-1],        # (B, Q, 4)
        "outputs_class": outputs_class,
        "outputs_coord": outputs_coord,
        # token-major [B, HW, D]; the deformable transformer flattens spatial
        # anyway, so the lane-sparse NCHW back-transpose is dropped.
        "srcs": src,
        "encoded_text": encoded_text,
    }


# ------------------------------ pure-JAX reference --------------------------
def _reference(backbone_feat_nchw, bert_last_hidden, text_token_mask,
               hs, reference, params):
    PREC = jax.lax.Precision.HIGHEST
    enc_txt = jnp.einsum("blh,hd->bld", bert_last_hidden,
                         params["feat_map_w"], precision=PREC) + params["feat_map_b"]
    x_flat = jnp.transpose(backbone_feat_nchw, (0, 2, 3, 1)).reshape(B, HW, C_IN)
    y = jnp.einsum("bpc,cd->bpd", x_flat, params["proj_w"],
                   precision=PREC) + params["proj_b"]
    yg = y.reshape(B, HW, N_GROUPS, CG)
    mean = yg.mean(axis=(1, 3), keepdims=True)
    var = ((yg - mean) ** 2).mean(axis=(1, 3), keepdims=True)
    yn = ((yg - mean) / jnp.sqrt(var + EPS_GN)).reshape(B, HW, D)
    src = yn * params["gn_gamma"] + params["gn_beta"]             # (B, HW, D)

    w1, b1, w2, b2, w3, b3 = params["bbox_mlp"]
    h1 = jnp.maximum(jnp.einsum("lbqd,de->lbqe", hs, w1, precision=PREC) + b1, 0.0)
    h2 = jnp.maximum(jnp.einsum("lbqd,de->lbqe", h1, w2, precision=PREC) + b2, 0.0)
    delta = jnp.einsum("lbqd,de->lbqe", h2, w3, precision=PREC) + b3
    r = jnp.clip(reference, 0.0, 1.0)
    inv_sig = jnp.log(jnp.maximum(r, EPS_INV_SIG) /
                      jnp.maximum(1.0 - r, EPS_INV_SIG))
    coords = jax.nn.sigmoid(delta + inv_sig)

    logits = jnp.einsum("lbqd,bkd->lbqk", hs, enc_txt, precision=PREC)
    logits = jnp.where(text_token_mask[None, :, None, :] > 0, logits, -jnp.inf)
    logits = jnp.pad(logits, ((0, 0), (0, 0), (0, 0),
                              (0, MAX_TEXT_LEN - L_TEXT)),
                     constant_values=-jnp.inf)
    return coords, logits, src, enc_txt


# ----------------------------------- main ------------------------------------
if __name__ == "__main__":
    key = jax.random.PRNGKey(0)
    keys = jax.random.split(key, 12)

    def xavier(k, shape, fan_in, fan_out):
        bound = (6.0 / (fan_in + fan_out)) ** 0.5
        return jax.random.uniform(k, shape, jnp.float32, -bound, bound)

    params = {
        # feat_map = nn.Linear(bert_hidden, hidden_dim): xavier_uniform W, bias 0
        "feat_map_w": xavier(keys[0], (H_BERT, D), H_BERT, D),
        "feat_map_b": jnp.zeros((D,), jnp.float32),
        # input_proj[0] = Conv2d(C_in, D, 1) (xavier, bias 0) + GroupNorm(32, D)
        "proj_w": xavier(keys[1], (C_IN, D), C_IN, D),
        "proj_b": jnp.zeros((D,), jnp.float32),
        "gn_gamma": jnp.ones((D,), jnp.float32),
        "gn_beta": jnp.zeros((D,), jnp.float32),
        # bbox MLP(D, D, 4, 3 layers).  __init__ zeroes the last layer; we use
        # small random values instead so the MLP path is numerically exercised.
        "bbox_mlp": (
            xavier(keys[2], (D, D), D, D),
            0.01 * jax.random.normal(keys[3], (D,), jnp.float32),
            xavier(keys[4], (D, D), D, D),
            0.01 * jax.random.normal(keys[5], (D,), jnp.float32),
            0.01 * jax.random.normal(keys[10], (D, 4), jnp.float32),
            0.01 * jax.random.normal(keys[11], (4,), jnp.float32),
        ),
    }

    # ---- synthetic inputs standing in for external sub-modules ----
    backbone_feat = jax.random.normal(keys[6], (B, C_IN, H, W), jnp.float32)
    bert_last_hidden = jax.random.normal(keys[7], (B, L_TEXT, H_BERT), jnp.float32)
    text_token_mask = jnp.ones((B, L_TEXT), jnp.int32)
    hs = 0.1 * jax.random.normal(keys[8], (NUM_DEC, B, NUM_Q, D), jnp.float32)
    reference = jax.random.uniform(keys[9], (NUM_DEC, B, NUM_Q, 4), jnp.float32,
                                   0.05, 0.95)

    out = grounding_dino_heads(backbone_feat, bert_last_hidden, text_token_mask,
                               hs, reference, params)
    out = jax.tree_util.tree_map(jax.block_until_ready, out)

    coords_ref, logits_ref, src_ref, enc_ref = _reference(
        backbone_feat, bert_last_hidden, text_token_mask, hs, reference, params)

    assert out["pred_boxes"].shape == (B, NUM_Q, 4)
    assert out["pred_logits"].shape == (B, NUM_Q, MAX_TEXT_LEN)
    assert jnp.allclose(out["encoded_text"], enc_ref, rtol=1e-3, atol=1e-3)
    assert jnp.allclose(out["srcs"], src_ref, rtol=1e-3, atol=1e-3)
    assert jnp.allclose(out["outputs_coord"], coords_ref, rtol=1e-3, atol=1e-3)
    # compare logits only on valid (finite) positions; padding checked separately
    valid = jnp.isfinite(logits_ref)
    assert jnp.allclose(jnp.where(valid, out["outputs_class"], 0.0),
                        jnp.where(valid, logits_ref, 0.0),
                        rtol=1e-3, atol=1e-3)
    assert bool(jnp.all(jnp.isneginf(out["outputs_class"][..., L_TEXT:])))

    print("KERNEL_OK")
</pallas_src>

<mosaic_0001>
module attributes {stable_mosaic.version = 11 : i64} {
  func.func @_gdino_head_kernel(%arg0: i32, %arg1: memref<2x8x128xf32, #tpu.memory_space<vmem>>, %arg2: memref<128x256xf32, #tpu.memory_space<vmem>>, %arg3: memref<1x256xf32, #tpu.memory_space<vmem>>, %arg4: memref<2x256x4xf32, #tpu.memory_space<vmem>>, %arg5: memref<4x256xf32, #tpu.memory_space<vmem>>, %arg6: memref<1x256xf32, #tpu.memory_space<vmem>>, %arg7: memref<1x256xf32, #tpu.memory_space<vmem>>, %arg8: memref<1x256xf32, #tpu.memory_space<vmem>>, %arg9: memref<2x2x16x256xf32, #tpu.memory_space<vmem>>, %arg10: memref<2x2x16x4xf32, #tpu.memory_space<vmem>>, %arg11: memref<256x256xbf16, #tpu.memory_space<vmem>>, %arg12: memref<1x256xf32, #tpu.memory_space<vmem>>, %arg13: memref<256x256xbf16, #tpu.memory_space<vmem>>, %arg14: memref<1x256xf32, #tpu.memory_space<vmem>>, %arg15: memref<256x4xf32, #tpu.memory_space<vmem>>, %arg16: memref<1x4xf32, #tpu.memory_space<vmem>>, %arg17: memref<1x128xi32, #tpu.memory_space<vmem>>, %arg18: memref<2x8x256xf32, #tpu.memory_space<vmem>>, %arg19: memref<2x256x256xf32, #tpu.memory_space<vmem>>, %arg20: memref<64x4xf32, #tpu.memory_space<vmem>>, %arg21: memref<64x128xf32, #tpu.memory_space<vmem>>) attributes {dimension_semantics = [#tpu.dimension_semantics<arbitrary>], iteration_bounds = array<i64: 1>, scalar_prefetch = 0 : i64, scratch_operands = 0 : i64, tpu.core_type = #tpu.core_type<tc>, window_params = [{pipeline_mode = #tpu.pipeline_mode<synchronous>, transform_indices = @transform_0, window_bounds = array<i64: 2, 8, 128>}, {pipeline_mode = #tpu.pipeline_mode<synchronous>, transform_indices = @transform_1, window_bounds = array<i64: 128, 256>}, {pipeline_mode = #tpu.pipeline_mode<synchronous>, transform_indices = @transform_2, window_bounds = array<i64: 1, 256>}, {pipeline_mode = #tpu.pipeline_mode<synchronous>, transform_indices = @transform_3, window_bounds = array<i64: 2, 256, 4>}, {pipeline_mode = #tpu.pipeline_mode<synchronous>, transform_indices = @transform_4, window_bounds = array<i64: 4, 256>}, {pipeline_mode = #tpu.pipeline_mode<synchronous>, transform_indices = @transform_5, window_bounds = array<i64: 1, 256>}, {pipeline_mode = #tpu.pipeline_mode<synchronous>, transform_indices = @transform_6, window_bounds = array<i64: 1, 256>}, {pipeline_mode = #tpu.pipeline_mode<synchronous>, transform_indices = @transform_7, window_bounds = array<i64: 1, 256>}, {pipeline_mode = #tpu.pipeline_mode<synchronous>, transform_indices = @transform_8, window_bounds = array<i64: 2, 2, 16, 256>}, {pipeline_mode = #tpu.pipeline_mode<synchronous>, transform_indices = @transform_9, window_bounds = array<i64: 2, 2, 16, 4>}, {pipeline_mode = #tpu.pipeline_mode<synchronous>, transform_indices = @transform_10, window_bounds = array<i64: 256, 256>}, {pipeline_mode = #tpu.pipeline_mode<synchronous>, transform_indices = @transform_11, window_bounds = array<i64: 1, 256>}, {pipeline_mode = #tpu.pipeline_mode<synchronous>, transform_indices = @transform_12, window_bounds = array<i64: 256, 256>}, {pipeline_mode = #tpu.pipeline_mode<synchronous>, transform_indices = @transform_13, window_bounds = array<i64: 1, 256>}, {pipeline_mode = #tpu.pipeline_mode<synchronous>, transform_indices = @transform_14, window_bounds = array<i64: 256, 4>}, {pipeline_mode = #tpu.pipeline_mode<synchronous>, transform_indices = @transform_15, window_bounds = array<i64: 1, 4>}, {pipeline_mode = #tpu.pipeline_mode<synchronous>, transform_indices = @transform_16, window_bounds = array<i64: 1, 128>}, {pipeline_mode = #tpu.pipeline_mode<synchronous>, transform_indices = @transform_17, window_bounds = array<i64: 2, 8, 256>}, {pipeline_mode = #tpu.pipeline_mode<synchronous>, transform_indices = @transform_18, window_bounds = array<i64: 2, 256, 256>}, {pipeline_mode = #tpu.pipeline_mode<synchronous>, transform_indices = @transform_19, window_bounds = array<i64: 64, 4>}, {pipeline_mode = #tpu.pipeline_mode<synchronous>, transform_indices = @transform_20, window_bounds = array<i64: 64, 128>}]} {
    %c0 = arith.constant 0 : index
    %c0_0 = arith.constant 0 : index
    %c0_1 = arith.constant 0 : index
    %0 = vector.load %arg1[%c0, %c0_0, %c0_1] : memref<2x8x128xf32, #tpu.memory_space<vmem>>, vector<2x8x128xf32>
    %1 = vector.shape_cast %0 : vector<2x8x128xf32> to vector<16x128xf32>
    %c0_2 = arith.constant 0 : index
    %c0_3 = arith.constant 0 : index
    %2 = vector.load %arg2[%c0_2, %c0_3] : memref<128x256xf32, #tpu.memory_space<vmem>>, vector<128x256xf32>
    %cst = arith.constant dense<0.000000e+00> : vector<16x256xf32>
    %3 = tpu.matmul %1, %2, %cst {dimension_numbers = #tpu.dot_dimension_numbers<[1], [0], [0], [1], [0, 0, 1, 1], [], []>} : vector<16x128xf32>, vector<128x256xf32>, vector<16x256xf32> -> vector<16x256xf32>
    %c0_4 = arith.constant 0 : index
    %c0_5 = arith.constant 0 : index
    %4 = vector.load %arg3[%c0_4, %c0_5] : memref<1x256xf32, #tpu.memory_space<vmem>>, vector<1x256xf32>
    %5 = vector.broadcast %4 : vector<1x256xf32> to vector<16x256xf32>
    %6 = arith.addf %3, %5 : vector<16x256xf32>
    %7 = vector.shape_cast %6 : vector<16x256xf32> to vector<2x8x256xf32>
    %c0_6 = arith.constant 0 : index
    %c0_7 = arith.constant 0 : index
    %c0_8 = arith.constant 0 : index
    %8 = vector.load %arg18[%c0_6, %c0_7, %c0_8] : memref<2x8x256xf32, #tpu.memory_space<vmem>>, vector<2x8x256xf32>
    tpu.vector_store %arg18[%c0_6, %c0_7, %c0_8], %7 {strides = array<i32>} : memref<2x8x256xf32, #tpu.memory_space<vmem>>, vector<2x8x256xf32>,
    %c0_9 = arith.constant 0 : index
    %c0_10 = arith.constant 0 : index
    %c0_11 = arith.constant 0 : index
    %9 = vector.load %arg4[%c0_9, %c0_10, %c0_11] : memref<2x256x4xf32, #tpu.memory_space<vmem>>, vector<2x256x4xf32>
    %10 = vector.shape_cast %9 : vector<2x256x4xf32> to vector<512x4xf32>
    %c0_12 = arith.constant 0 : index
    %c0_13 = arith.constant 0 : index
    %11 = vector.load %arg5[%c0_12, %c0_13] : memref<4x256xf32, #tpu.memory_space<vmem>>, vector<4x256xf32>
    %cst_14 = arith.constant dense<0.000000e+00> : vector<512x256xf32>
    %12 = tpu.matmul %10, %11, %cst_14 {dimension_numbers = #tpu.dot_dimension_numbers<[1], [0], [0], [1], [0, 0, 1, 1], [], []>} : vector<512x4xf32>, vector<4x256xf32>, vector<512x256xf32> -> vector<512x256xf32>
    %c0_15 = arith.constant 0 : index
    %c0_16 = arith.constant 0 : index
    %13 = vector.load %arg6[%c0_15, %c0_16] : memref<1x256xf32, #tpu.memory_space<vmem>>, vector<1x256xf32>
    %14 = vector.broadcast %13 : vector<1x256xf32> to vector<512x256xf32>
    %15 = arith.addf %12, %14 : vector<512x256xf32>
    %16 = vector.shape_cast %15 : vector<512x256xf32> to vector<2x256x256xf32>
    %17 = tpu.iota {dimensions = array<i32: 0>} : vector<256x32xi32>
    %18 = tpu.iota {dimensions = array<i32: 1>} : vector<256x32xi32>
    %c8_i32 = arith.constant 8 : i32
    %19 = vector.broadcast %c8_i32 : i32 to vector<256x32xi32>
    %20 = arith.muli %18, %19 : vector<256x32xi32>
    %21 = arith.cmpi sge, %17, %20 : vector<256x32xi32>
    %c1_i32 = arith.constant 1 : i32
    %22 = vector.broadcast %c1_i32 : i32 to vector<256x32xi32>
    %23 = arith.addi %18, %22 : vector<256x32xi32>
    %c8_i32_17 = arith.constant 8 : i32
    %24 = vector.broadcast %c8_i32_17 : i32 to vector<256x32xi32>
    %25 = arith.muli %23, %24 : vector<256x32xi32>
    %26 = arith.cmpi slt, %17, %25 : vector<256x32xi32>
    %27 = arith.andi %21, %26 : vector<256x32xi1>
    %28 = arith.extui %27 : vector<256x32xi1> to vector<256x32xi32>
    %29 = arith.sitofp %28 : vector<256x32xi32> to vector<256x32xf32>
    %cst_18 = arith.constant dense<0.000000e+00> : vector<2x256xf32>
    %30 = vector.multi_reduction <add>, %16, %cst_18 [1] : vector<2x256x256xf32> to vector<2x256xf32>
    %cst_19 = arith.constant dense<0.000000e+00> : vector<2x32xf32>
    %31 = tpu.matmul %30, %29, %cst_19 {dimension_numbers = #tpu.dot_dimension_numbers<[1], [0], [0], [1], [0, 0, 1, 1], [], []>} : vector<2x256xf32>, vector<256x32xf32>, vector<2x32xf32> -> vector<2x32xf32>
    %cst_20 = arith.constant 4.8828125E-4 : f32
    %32 = vector.broadcast %cst_20 : f32 to vector<2x32xf32>
    %33 = arith.mulf %31, %32 : vector<2x32xf32>
    %cst_21 = arith.constant dense<0.000000e+00> : vector<2x256xf32>
    %34 = tpu.matmul %33, %29, %cst_21 {dimension_numbers = #tpu.dot_dimension_numbers<[1], [1], [0], [0], [0, 0, 1, 0], [], []>} : vector<2x32xf32>, vector<256x32xf32>, vector<2x256xf32> -> vector<2x256xf32>
    %35 = vector.shape_cast %34 : vector<2x256xf32> to vector<2x1x256xf32>
    %36 = vector.broadcast %35 : vector<2x1x256xf32> to vector<2x256x256xf32>
    %37 = arith.subf %16, %36 : vector<2x256x256xf32>
    %38 = arith.mulf %37, %37 : vector<2x256x256xf32>
    %cst_22 = arith.constant dense<0.000000e+00> : vector<2x256xf32>
    %39 = vector.multi_reduction <add>, %38, %cst_22 [1] : vector<2x256x256xf32> to vector<2x256xf32>
    %cst_23 = arith.constant dense<0.000000e+00> : vector<2x32xf32>
    %40 = tpu.matmul %39, %29, %cst_23 {dimension_numbers = #tpu.dot_dimension_numbers<[1], [0], [0], [1], [0, 0, 1, 1], [], []>} : vector<2x256xf32>, vector<256x32xf32>, vector<2x32xf32> -> vector<2x32xf32>
    %cst_24 = arith.constant 4.8828125E-4 : f32
    %41 = vector.broadcast %cst_24 : f32 to vector<2x32xf32>
    %42 = arith.mulf %40, %41 : vector<2x32xf32>
    %cst_25 = arith.constant 9.99999974E-6 : f32
    %43 = vector.broadcast %cst_25 : f32 to vector<2x32xf32>
    %44 = arith.addf %42, %43 : vector<2x32xf32>
    %45 = math.rsqrt %44 : vector<2x32xf32>
    %cst_26 = arith.constant dense<0.000000e+00> : vector<2x256xf32>
    %46 = tpu.matmul %45, %29, %cst_26 {dimension_numbers = #tpu.dot_dimension_numbers<[1], [1], [0], [0], [0, 0, 1, 0], [], []>} : vector<2x32xf32>, vector<256x32xf32>, vector<2x256xf32> -> vector<2x256xf32>
    %47 = vector.shape_cast %46 : vector<2x256xf32> to vector<2x1x256xf32>
    %48 = vector.broadcast %47 : vector<2x1x256xf32> to vector<2x256x256xf32>
    %49 = arith.mulf %37, %48 : vector<2x256x256xf32>
    %c0_27 = arith.constant 0 : index
    %c0_28 = arith.constant 0 : index
    %50 = vector.load %arg7[%c0_27, %c0_28] : memref<1x256xf32, #tpu.memory_space<vmem>>, vector<1x256xf32>
    %51 = vector.shape_cast %50 : vector<1x256xf32> to vector<1x1x256xf32>
    %52 = vector.broadcast %51 : vector<1x1x256xf32> to vector<2x256x256xf32>
    %53 = arith.mulf %49, %52 : vector<2x256x256xf32>
    %c0_29 = arith.constant 0 : index
    %c0_30 = arith.constant 0 : index
    %54 = vector.load %arg8[%c0_29, %c0_30] : memref<1x256xf32, #tpu.memory_space<vmem>>, vector<1x256xf32>
    %55 = vector.shape_cast %54 : vector<1x256xf32> to vector<1x1x256xf32>
    %56 = vector.broadcast %55 : vector<1x1x256xf32> to vector<2x256x256xf32>
    %57 = arith.addf %53, %56 : vector<2x256x256xf32>
    %c0_31 = arith.constant 0 : index
    %c0_32 = arith.constant 0 : index
    %c0_33 = arith.constant 0 : index
    %58 = vector.load %arg19[%c0_31, %c0_32, %c0_33] : memref<2x256x256xf32, #tpu.memory_space<vmem>>, vector<2x256x256xf32>
    tpu.vector_store %arg19[%c0_31, %c0_32, %c0_33], %57 {strides = array<i32>} : memref<2x256x256xf32, #tpu.memory_space<vmem>>, vector<2x256x256xf32>,
    %c0_34 = arith.constant 0 : index
    %c0_35 = arith.constant 0 : index
    %c0_36 = arith.constant 0 : index
    %c0_37 = arith.constant 0 : index
    %59 = vector.load %arg9[%c0_34, %c0_35, %c0_36, %c0_37] : memref<2x2x16x256xf32, #tpu.memory_space<vmem>>, vector<2x2x16x256xf32>
    %60 = vector.shape_cast %59 : vector<2x2x16x256xf32> to vector<64x256xf32>
    %61 = arith.truncf %60 : vector<64x256xf32> to vector<64x256xbf16>
    %c0_38 = arith.constant 0 : index
    %c0_39 = arith.constant 0 : index
    %62 = vector.load %arg11[%c0_38, %c0_39] : memref<256x256xbf16, #tpu.memory_space<vmem>>, vector<256x256xbf16>
    %cst_40 = arith.constant dense<0.000000e+00> : vector<64x256xf32>
    %63 = tpu.matmul %61, %62, %cst_40 {dimension_numbers = #tpu.dot_dimension_numbers<[1], [0], [0], [1], [0, 0, 1, 1], [], []>} : vector<64x256xbf16>, vector<256x256xbf16>, vector<64x256xf32> -> vector<64x256xf32>
    %c0_41 = arith.constant 0 : index
    %c0_42 = arith.constant 0 : index
    %64 = vector.load %arg12[%c0_41, %c0_42] : memref<1x256xf32, #tpu.memory_space<vmem>>, vector<1x256xf32>
    %65 = vector.broadcast %64 : vector<1x256xf32> to vector<64x256xf32>
    %66 = arith.addf %63, %65 : vector<64x256xf32>
    %cst_43 = arith.constant 0.000000e+00 : f32
    %67 = vector.broadcast %cst_43 : f32 to vector<64x256xf32>
    %68 = arith.maximumf %66, %67 : vector<64x256xf32>
    %69 = arith.truncf %68 : vector<64x256xf32> to vector<64x256xbf16>
    %c0_44 = arith.constant 0 : index
    %c0_45 = arith.constant 0 : index
    %70 = vector.load %arg13[%c0_44, %c0_45] : memref<256x256xbf16, #tpu.memory_space<vmem>>, vector<256x256xbf16>
    %cst_46 = arith.constant dense<0.000000e+00> : vector<64x256xf32>
    %71 = tpu.matmul %69, %70, %cst_46 {dimension_numbers = #tpu.dot_dimension_numbers<[1], [0], [0], [1], [0, 0, 1, 1], [], []>} : vector<64x256xbf16>, vector<256x256xbf16>, vector<64x256xf32> -> vector<64x256xf32>
    %c0_47 = arith.constant 0 : index
    %c0_48 = arith.constant 0 : index
    %72 = vector.load %arg14[%c0_47, %c0_48] : memref<1x256xf32, #tpu.memory_space<vmem>>, vector<1x256xf32>
    %73 = vector.broadcast %72 : vector<1x256xf32> to vector<64x256xf32>
    %74 = arith.addf %71, %73 : vector<64x256xf32>
    %cst_49 = arith.constant 0.000000e+00 : f32
    %75 = vector.broadcast %cst_49 : f32 to vector<64x256xf32>
    %76 = arith.maximumf %74, %75 : vector<64x256xf32>
    %c0_50 = arith.constant 0 : index
    %c0_51 = arith.constant 0 : index
    %77 = vector.load %arg15[%c0_50, %c0_51] : memref<256x4xf32, #tpu.memory_space<vmem>>, vector<256x4xf32>
    %cst_52 = arith.constant dense<0.000000e+00> : vector<64x4xf32>
    %78 = tpu.matmul %76, %77, %cst_52 {dimension_numbers = #tpu.dot_dimension_numbers<[1], [0], [0], [1], [0, 0, 1, 1], [], []>} : vector<64x256xf32>, vector<256x4xf32>, vector<64x4xf32> -> vector<64x4xf32>
    %c0_53 = arith.constant 0 : index
    %c0_54 = arith.constant 0 : index
    %79 = vector.load %arg16[%c0_53, %c0_54] : memref<1x4xf32, #tpu.memory_space<vmem>>, vector<1x4xf32>
    %80 = vector.broadcast %79 : vector<1x4xf32> to vector<64x4xf32>
    %81 = arith.addf %78, %80 : vector<64x4xf32>
    %c0_55 = arith.constant 0 : index
    %c0_56 = arith.constant 0 : index
    %c0_57 = arith.constant 0 : index
    %c0_58 = arith.constant 0 : index
    %82 = vector.load %arg10[%c0_55, %c0_56, %c0_57, %c0_58] : memref<2x2x16x4xf32, #tpu.memory_space<vmem>>, vector<2x2x16x4xf32>
    %83 = vector.shape_cast %82 : vector<2x2x16x4xf32> to vector<64x4xf32>
    %cst_59 = arith.constant 0.000000e+00 : f32
    %cst_60 = arith.constant 1.000000e+00 : f32
    %84 = vector.broadcast %cst_59 : f32 to vector<64x4xf32>
    %85 = arith.maximumf %84, %83 : vector<64x4xf32>
    %86 = vector.broadcast %cst_60 : f32 to vector<64x4xf32>
    %87 = arith.minimumf %86, %85 : vector<64x4xf32>
    %cst_61 = arith.constant 1.000000e-03 : f32
    %88 = vector.broadcast %cst_61 : f32 to vector<64x4xf32>
    %89 = arith.maximumf %87, %88 : vector<64x4xf32>
    %cst_62 = arith.constant 1.000000e+00 : f32
    %90 = vector.broadcast %cst_62 : f32 to vector<64x4xf32>
    %91 = arith.subf %90, %87 : vector<64x4xf32>
    %cst_63 = arith.constant 1.000000e-03 : f32
    %92 = vector.broadcast %cst_63 : f32 to vector<64x4xf32>
    %93 = arith.maximumf %91, %92 : vector<64x4xf32>
    %94 = arith.divf %89, %93 : vector<64x4xf32>
    %95 = math.log %94 : vector<64x4xf32>
    %96 = arith.addf %81, %95 : vector<64x4xf32>
    %97 = arith.negf %96 : vector<64x4xf32>
    %98 = math.exp %97 : vector<64x4xf32>
    %cst_64 = arith.constant 1.000000e+00 : f32
    %99 = vector.broadcast %cst_64 : f32 to vector<64x4xf32>
    %100 = arith.addf %99, %98 : vector<64x4xf32>
    %101 = arith.divf %99, %100 : vector<64x4xf32>
    %c0_65 = arith.constant 0 : index
    %c0_66 = arith.constant 0 : index
    %102 = vector.load %arg20[%c0_65, %c0_66] : memref<64x4xf32, #tpu.memory_space<vmem>>, vector<64x4xf32>
    tpu.vector_store %arg20[%c0_65, %c0_66], %101 {strides = array<i32>} : memref<64x4xf32, #tpu.memory_space<vmem>>, vector<64x4xf32>,
    %cst_67 = arith.constant 0.000000e+00 : f32
    %103 = vector.broadcast %cst_67 : f32 to vector<56x256xf32>
    %104 = vector.extract_strided_slice %6 {offsets = [0, 0], sizes = [8, 256], strides = [1, 1]} : vector<16x256xf32> to vector<8x256xf32>
    %105 = vector.extract_strided_slice %6 {offsets = [8, 0], sizes = [8, 256], strides = [1, 1]} : vector<16x256xf32> to vector<8x256xf32>
    %106 = tpu.concatenate %104, %103, %105, %103 in 0 : vector<8x256xf32>, vector<56x256xf32>, vector<8x256xf32>, vector<56x256xf32> -> vector<128x256xf32>
    %cst_68 = arith.constant dense<0.000000e+00> : vector<64x128xf32>
    %107 = tpu.matmul %60, %106, %cst_68 {dimension_numbers = #tpu.dot_dimension_numbers<[1], [1], [0], [0], [0, 0, 1, 0], [], []>} : vector<64x256xf32>, vector<128x256xf32>, vector<64x128xf32> -> vector<64x128xf32>
    %c0_69 = arith.constant 0 : index
    %c0_70 = arith.constant 0 : index
    %108 = vector.load %arg17[%c0_69, %c0_70] : memref<1x128xi32, #tpu.memory_space<vmem>>, vector<1x128xi32>
    %c0_i32 = arith.constant 0 : i32
    %109 = vector.broadcast %c0_i32 : i32 to vector<1x128xi32>
    %110 = arith.cmpi sgt, %108, %109 : vector<1x128xi32>
    %cst_71 = arith.constant 0xFF800000 : f32
    %111 = vector.shape_cast %110 : vector<1x128xi1> to vector<1x128xi1>
    %112 = vector.broadcast %111 : vector<1x128xi1> to vector<64x128xi1>
    %113 = vector.broadcast %cst_71 : f32 to vector<64x128xf32>
    %114 = arith.select %112, %107, %113 : vector<64x128xi1>, vector<64x128xf32>
    %c0_72 = arith.constant 0 : index
    %c0_73 = arith.constant 0 : index
    %115 = vector.load %arg21[%c0_72, %c0_73] : memref<64x128xf32, #tpu.memory_space<vmem>>, vector<64x128xf32>
    tpu.vector_store %arg21[%c0_72, %c0_73], %114 {strides = array<i32>} : memref<64x128xf32, #tpu.memory_space<vmem>>, vector<64x128xf32>,
    return
  }
  func.func @transform_0(%arg0: i32) -> (i32, i32, i32) {
    %c0_i32 = arith.constant 0 : i32
    %c0_i32_0 = arith.constant 0 : i32
    %c0_i32_1 = arith.constant 0 : i32
    %c0_i32_2 = arith.constant 0 : i32
    return %c0_i32, %c0_i32_0, %c0_i32_1 : i32, i32, i32
  }
  func.func @transform_1(%arg0: i32) -> (i32, i32) {
    %c0_i32 = arith.constant 0 : i32
    %c0_i32_0 = arith.constant 0 : i32
    %c0_i32_1 = arith.constant 0 : i32
    return %c0_i32, %c0_i32_0 : i32, i32
  }
  func.func @transform_2(%arg0: i32) -> (i32, i32) {
    %c0_i32 = arith.constant 0 : i32
    %c0_i32_0 = arith.constant 0 : i32
    %c0_i32_1 = arith.constant 0 : i32
    return %c0_i32, %c0_i32_0 : i32, i32
  }
  func.func @transform_3(%arg0: i32) -> (i32, i32, i32) {
    %c0_i32 = arith.constant 0 : i32
    %c0_i32_0 = arith.constant 0 : i32
    %c0_i32_1 = arith.constant 0 : i32
    %c0_i32_2 = arith.constant 0 : i32
    return %c0_i32, %c0_i32_0, %c0_i32_1 : i32, i32, i32
  }
  func.func @transform_4(%arg0: i32) -> (i32, i32) {
    %c0_i32 = arith.constant 0 : i32
    %c0_i32_0 = arith.constant 0 : i32
    %c0_i32_1 = arith.constant 0 : i32
    return %c0_i32, %c0_i32_0 : i32, i32
  }
  func.func @transform_5(%arg0: i32) -> (i32, i32) {
    %c0_i32 = arith.constant 0 : i32
    %c0_i32_0 = arith.constant 0 : i32
    %c0_i32_1 = arith.constant 0 : i32
    return %c0_i32, %c0_i32_0 : i32, i32
  }
  func.func @transform_6(%arg0: i32) -> (i32, i32) {
    %c0_i32 = arith.constant 0 : i32
    %c0_i32_0 = arith.constant 0 : i32
    %c0_i32_1 = arith.constant 0 : i32
    return %c0_i32, %c0_i32_0 : i32, i32
  }
  func.func @transform_7(%arg0: i32) -> (i32, i32) {
    %c0_i32 = arith.constant 0 : i32
    %c0_i32_0 = arith.constant 0 : i32
    %c0_i32_1 = arith.constant 0 : i32
    return %c0_i32, %c0_i32_0 : i32, i32
  }
  func.func @transform_8(%arg0: i32) -> (i32, i32, i32, i32) {
    %c0_i32 = arith.constant 0 : i32
    %c0_i32_0 = arith.constant 0 : i32
    %c0_i32_1 = arith.constant 0 : i32
    %c0_i32_2 = arith.constant 0 : i32
    %c0_i32_3 = arith.constant 0 : i32
    return %c0_i32, %c0_i32_0, %c0_i32_1, %c0_i32_2 : i32, i32, i32, i32
  }
  func.func @transform_9(%arg0: i32) -> (i32, i32, i32, i32) {
    %c0_i32 = arith.constant 0 : i32
    %c0_i32_0 = arith.constant 0 : i32
    %c0_i32_1 = arith.constant 0 : i32
    %c0_i32_2 = arith.constant 0 : i32
    %c0_i32_3 = arith.constant 0 : i32
    return %c0_i32, %c0_i32_0, %c0_i32_1, %c0_i32_2 : i32, i32, i32, i32
  }
  func.func @transform_10(%arg0: i32) -> (i32, i32) {
    %c0_i32 = arith.constant 0 : i32
    %c0_i32_0 = arith.constant 0 : i32
    %c0_i32_1 = arith.constant 0 : i32
    return %c0_i32, %c0_i32_0 : i32, i32
  }
  func.func @transform_11(%arg0: i32) -> (i32, i32) {
    %c0_i32 = arith.constant 0 : i32
    %c0_i32_0 = arith.constant 0 : i32
    %c0_i32_1 = arith.constant 0 : i32
    return %c0_i32, %c0_i32_0 : i32, i32
  }
  func.func @transform_12(%arg0: i32) -> (i32, i32) {
    %c0_i32 = arith.constant 0 : i32
    %c0_i32_0 = arith.constant 0 : i32
    %c0_i32_1 = arith.constant 0 : i32
    return %c0_i32, %c0_i32_0 : i32, i32
  }
  func.func @transform_13(%arg0: i32) -> (i32, i32) {
    %c0_i32 = arith.constant 0 : i32
    %c0_i32_0 = arith.constant 0 : i32
    %c0_i32_1 = arith.constant 0 : i32
    return %c0_i32, %c0_i32_0 : i32, i32
  }
  func.func @transform_14(%arg0: i32) -> (i32, i32) {
    %c0_i32 = arith.constant 0 : i32
    %c0_i32_0 = arith.constant 0 : i32
    %c0_i32_1 = arith.constant 0 : i32
    return %c0_i32, %c0_i32_0 : i32, i32
  }
  func.func @transform_15(%arg0: i32) -> (i32, i32) {
    %c0_i32 = arith.constant 0 : i32
    %c0_i32_0 = arith.constant 0 : i32
    %c0_i32_1 = arith.constant 0 : i32
    return %c0_i32, %c0_i32_0 : i32, i32
  }
  func.func @transform_16(%arg0: i32) -> (i32, i32) {
    %c0_i32 = arith.constant 0 : i32
    %c0_i32_0 = arith.constant 0 : i32
    %c0_i32_1 = arith.constant 0 : i32
    return %c0_i32, %c0_i32_0 : i32, i32
  }
  func.func @transform_17(%arg0: i32) -> (i32, i32, i32) {
    %c0_i32 = arith.constant 0 : i32
    %c0_i32_0 = arith.constant 0 : i32
    %c0_i32_1 = arith.constant 0 : i32
    %c0_i32_2 = arith.constant 0 : i32
    return %c0_i32, %c0_i32_0, %c0_i32_1 : i32, i32, i32
  }
  func.func @transform_18(%arg0: i32) -> (i32, i32, i32) {
    %c0_i32 = arith.constant 0 : i32
    %c0_i32_0 = arith.constant 0 : i32
    %c0_i32_1 = arith.constant 0 : i32
    %c0_i32_2 = arith.constant 0 : i32
    return %c0_i32, %c0_i32_0, %c0_i32_1 : i32, i32, i32
  }
  func.func @transform_19(%arg0: i32) -> (i32, i32) {
    %c0_i32 = arith.constant 0 : i32
    %c0_i32_0 = arith.constant 0 : i32
    %c0_i32_1 = arith.constant 0 : i32
    return %c0_i32, %c0_i32_0 : i32, i32
  }
  func.func @transform_20(%arg0: i32) -> (i32, i32) {
    %c0_i32 = arith.constant 0 : i32
    %c0_i32_0 = arith.constant 0 : i32
    %c0_i32_1 = arith.constant 0 : i32
    return %c0_i32, %c0_i32_0 : i32, i32
  }
}

</mosaic_0001>

<llo_original>
// kernel: grounding_dino_heads.1
$region0: #{grounding_dino_heads.1}
  #allocation0 [shape = 'u32[]', space=smem, size = 0x4, offset = 0x4, fixed_abs, tag = 'smem constant byte address 0x4 - core index']
  #allocation1 [shape = 'u32[144,128]{1,0:T(1,128)}', space=vmem, size = 0x12000, scoped, tag = 'internal scratch']
  %s0 = inlined_call_operand.vmem [shape: f32[2,8,128], index: 0, kind: input, shape index: {}]
  %s1 = inlined_call_operand.vmem [shape: f32[128,256], index: 1, kind: input, shape index: {}]
  %s2 = inlined_call_operand.vmem [shape: f32[1,256], index: 2, kind: input, shape index: {}]
  %s3 = inlined_call_operand.vmem [shape: f32[2,256,4], index: 3, kind: input, shape index: {}]
  %s4 = inlined_call_operand.vmem [shape: f32[4,256], index: 4, kind: input, shape index: {}]
  %s5 = inlined_call_operand.vmem [shape: f32[1,256], index: 5, kind: input, shape index: {}]
  %s6 = inlined_call_operand.vmem [shape: f32[1,256], index: 6, kind: input, shape index: {}]
  %s7 = inlined_call_operand.vmem [shape: f32[1,256], index: 7, kind: input, shape index: {}]
  %s8 = inlined_call_operand.vmem [shape: f32[2,2,16,256], index: 8, kind: input, shape index: {}]
  %s9 = inlined_call_operand.vmem [shape: f32[2,2,16,4], index: 9, kind: input, shape index: {}]
  %s10 = inlined_call_operand.vmem [shape: bf16[256,256], index: 10, kind: input, shape index: {}]
  %s11 = inlined_call_operand.vmem [shape: f32[1,256], index: 11, kind: input, shape index: {}]
  %s12 = inlined_call_operand.vmem [shape: bf16[256,256], index: 12, kind: input, shape index: {}]
  %s13 = inlined_call_operand.vmem [shape: f32[1,256], index: 13, kind: input, shape index: {}]
  %s14 = inlined_call_operand.vmem [shape: f32[256,4], index: 14, kind: input, shape index: {}]
  %s15 = inlined_call_operand.vmem [shape: f32[1,4], index: 15, kind: input, shape index: {}]
  %s16 = inlined_call_operand.vmem [shape: s32[1,128], index: 16, kind: input, shape index: {}]
  %s17 = inlined_call_operand.hbm [shape: f32[2,8,256], index: 17, kind: output, shape index: {0}]
  %s18 = inlined_call_operand.hbm [shape: f32[2,256,256], index: 18, kind: output, shape index: {1}]
  %s19 = inlined_call_operand.vmem [shape: f32[64,4], index: 19, kind: output, shape index: {2}]
  %s20 = inlined_call_operand.vmem [shape: f32[64,128], index: 20, kind: output, shape index: {3}]
  %21 = xla_tuple %s17, %s18, %s19, %s20
  %s22 = sld [smem:[#allocation0]]
  $region102: #{grounding_dino_heads.1} parent=0
    _
  %s24 = ssub.s32 1, %s22
  %s25 = scalar_select 0, %s24, %s22
  $region1: #{grounding_dino_heads.1} parent=0
    #allocation2 [shape = 'u8[16384]{0}', space=vmem, size = 0x4000, scoped, tag = 'output window, operand 0, single buffered']
    #allocation3 [shape = 's32[1]{0}', space=sflag, size = 0x4, scoped, tag = 'scoped memory for grounding_dino_heads.1']
    #allocation4 [shape = 'u8[524288]{0}', space=vmem, size = 0x80000, scoped, tag = 'output window, operand 1, single buffered']
    #allocation5 [shape = 's32[1]{0}', space=sflag, size = 0x4, scoped, tag = 'scoped memory for grounding_dino_heads.1']
    %26 = vsyncpa [#allocation3], 0
    %27 = vsyncpa [#allocation5], 0
    // Predicated region
    $region2: #{grounding_dino_heads.1} parent=1 // pred_check
      _
    $region3: #{grounding_dino_heads.1} parent=1 // pred_check_branch
      %29 = sbr.rel (0) target = $region5
    $region4: #{grounding_dino_heads.1} parent=1 // pred_region
      _
    $region5: #{grounding_dino_heads.1} parent=1 // pred_fallthru
      _
    // Predicated region
    $region6: #{grounding_dino_heads.1} parent=1 // pred_check
      _
    $region7: #{grounding_dino_heads.1} parent=1 // pred_check_branch
      %31 = sbr.rel (0) target = $region9
    $region8: #{grounding_dino_heads.1} parent=1 // pred_region
      _
    $region9: #{grounding_dino_heads.1} parent=1 // pred_fallthru
      _
    // Predicated region
    $region10: #{grounding_dino_heads.1} parent=1 // pred_check
      _
    $region11: #{grounding_dino_heads.1} parent=1 // pred_check_branch
      %33 = sbr.rel (0) target = $region13
    $region12: #{grounding_dino_heads.1} parent=1 // pred_region
      _
    $region13: #{grounding_dino_heads.1} parent=1 // pred_fallthru
      _
    // Predicated region
    $region14: #{grounding_dino_heads.1} parent=1 // pred_check
      _
    $region15: #{grounding_dino_heads.1} parent=1 // pred_check_branch
      %35 = sbr.rel (0) target = $region17
    $region16: #{grounding_dino_heads.1} parent=1 // pred_region
      _
    $region17: #{grounding_dino_heads.1} parent=1 // pred_fallthru
      _
    // Predicated region
    $region18: #{grounding_dino_heads.1} parent=1 // pred_check
      _
    $region19: #{grounding_dino_heads.1} parent=1 // pred_check_branch
      %37 = sbr.rel (0) target = $region21
    $region20: #{grounding_dino_heads.1} parent=1 // pred_region
      _
    $region21: #{grounding_dino_heads.1} parent=1 // pred_fallthru
      _
    // Predicated region
    $region22: #{grounding_dino_heads.1} parent=1 // pred_check
      _
    $region23: #{grounding_dino_heads.1} parent=1 // pred_check_branch
      %39 = sbr.rel (0) target = $region25
    $region24: #{grounding_dino_heads.1} parent=1 // pred_region
      _
    $region25: #{grounding_dino_heads.1} parent=1 // pred_fallthru
      _
    // Predicated region
    $region26: #{grounding_dino_heads.1} parent=1 // pred_check
      _
    $region27: #{grounding_dino_heads.1} parent=1 // pred_check_branch
      %41 = sbr.rel (0) target = $region29
    $region28: #{grounding_dino_heads.1} parent=1 // pred_region
      _
    $region29: #{grounding_dino_heads.1} parent=1 // pred_fallthru
      _
    // Predicated region
    $region30: #{grounding_dino_heads.1} parent=1 // pred_check
      _
    $region31: #{grounding_dino_heads.1} parent=1 // pred_check_branch
      %43 = sbr.rel (0) target = $region33
    $region32: #{grounding_dino_heads.1} parent=1 // pred_region
      _
    $region33: #{grounding_dino_heads.1} parent=1 // pred_fallthru
      _
    // Predicated region
    $region34: #{grounding_dino_heads.1} parent=1 // pred_check
      _
    $region35: #{grounding_dino_heads.1} parent=1 // pred_check_branch
      %45 = sbr.rel (0) target = $region37
    $region36: #{grounding_dino_heads.1} parent=1 // pred_region
      _
    $region37: #{grounding_dino_heads.1} parent=1 // pred_fallthru
      _
    // Predicated region
    $region38: #{grounding_dino_heads.1} parent=1 // pred_check
      _
    $region39: #{grounding_dino_heads.1} parent=1 // pred_check_branch
      %47 = sbr.rel (0) target = $region41
    $region40: #{grounding_dino_heads.1} parent=1 // pred_region
      _
    $region41: #{grounding_dino_heads.1} parent=1 // pred_fallthru
      _
    // Predicated region
    $region42: #{grounding_dino_heads.1} parent=1 // pred_check
      _
    $region43: #{grounding_dino_heads.1} parent=1 // pred_check_branch
      %49 = sbr.rel (0) target = $region45
    $region44: #{grounding_dino_heads.1} parent=1 // pred_region
      _
    $region45: #{grounding_dino_heads.1} parent=1 // pred_fallthru
      _
    // Predicated region
    $region46: #{grounding_dino_heads.1} parent=1 // pred_check
      _
    $region47: #{grounding_dino_heads.1} parent=1 // pred_check_branch
      %51 = sbr.rel (0) target = $region49
    $region48: #{grounding_dino_heads.1} parent=1 // pred_region
      _
    $region49: #{grounding_dino_heads.1} parent=1 // pred_fallthru
      _
    // Predicated region
    $region50: #{grounding_dino_heads.1} parent=1 // pred_check
      _
    $region51: #{grounding_dino_heads.1} parent=1 // pred_check_branch
      %53 = sbr.rel (0) target = $region53
    $region52: #{grounding_dino_heads.1} parent=1 // pred_region
      _
    $region53: #{grounding_dino_heads.1} parent=1 // pred_fallthru
      _
    // Predicated region
    $region54: #{grounding_dino_heads.1} parent=1 // pred_check
      _
    $region55: #{grounding_dino_heads.1} parent=1 // pred_check_branch
      %55 = sbr.rel (0) target = $region57
    $region56: #{grounding_dino_heads.1} parent=1 // pred_region
      _
    $region57: #{grounding_dino_heads.1} parent=1 // pred_fallthru
      _
    // Predicated region
    $region58: #{grounding_dino_heads.1} parent=1 // pred_check
      _
    $region59: #{grounding_dino_heads.1} parent=1 // pred_check_branch
      %57 = sbr.rel (0) target = $region61
    $region60: #{grounding_dino_heads.1} parent=1 // pred_region
      _
    $region61: #{grounding_dino_heads.1} parent=1 // pred_fallthru
      _
    // Predicated region
    $region62: #{grounding_dino_heads.1} parent=1 // pred_check
      _
    $region63: #{grounding_dino_heads.1} parent=1 // pred_check_branch
      %59 = sbr.rel (0) target = $region65
    $region64: #{grounding_dino_heads.1} parent=1 // pred_region
      _
    $region65: #{grounding_dino_heads.1} parent=1 // pred_fallthru
      _
    // Predicated region
    $region66: #{grounding_dino_heads.1} parent=1 // pred_check
      _
    $region67: #{grounding_dino_heads.1} parent=1 // pred_check_branch
      %61 = sbr.rel (0) target = $region69
    $region68: #{grounding_dino_heads.1} parent=1 // pred_region
      _
    $region69: #{grounding_dino_heads.1} parent=1 // pred_fallthru
      _
    %v62 = vld [vmem:[%s0] sm:$0xff]
    %v63 = vld [vmem:[%s0 + $0x8] sm:$0xff]
    %v64 = vld [vmem:[%s1] sm:$0xff]
    %v65 = vld [vmem:[%s1 + $0x8] sm:$0xff]
    %v66 = vld [vmem:[%s1 + $0x10] sm:$0xff]
    %v67 = vld [vmem:[%s1 + $0x18] sm:$0xff]
    %v68 = vld [vmem:[%s1 + $0x20] sm:$0xff]
    %v69 = vld [vmem:[%s1 + $0x28] sm:$0xff]
    %v70 = vld [vmem:[%s1 + $0x30] sm:$0xff]
    %v71 = vld [vmem:[%s1 + $0x38] sm:$0xff]
    %v72 = vld [vmem:[%s1 + $0x40] sm:$0xff]
    %v73 = vld [vmem:[%s1 + $0x48] sm:$0xff]
    %v74 = vld [vmem:[%s1 + $0x50] sm:$0xff]
    %v75 = vld [vmem:[%s1 + $0x58] sm:$0xff]
    %v76 = vld [vmem:[%s1 + $0x60] sm:$0xff]
    %v77 = vld [vmem:[%s1 + $0x68] sm:$0xff]
    %v78 = vld [vmem:[%s1 + $0x70] sm:$0xff]
    %v79 = vld [vmem:[%s1 + $0x78] sm:$0xff]
    %v80 = vld [vmem:[%s1 + $0x80] sm:$0xff]
    %v81 = vld [vmem:[%s1 + $0x88] sm:$0xff]
    %v82 = vld [vmem:[%s1 + $0x90] sm:$0xff]
    %v83 = vld [vmem:[%s1 + $0x98] sm:$0xff]
    %v84 = vld [vmem:[%s1 + $0xa0] sm:$0xff]
    %v85 = vld [vmem:[%s1 + $0xa8] sm:$0xff]
    %v86 = vld [vmem:[%s1 + $0xb0] sm:$0xff]
    %v87 = vld [vmem:[%s1 + $0xb8] sm:$0xff]
    %v88 = vld [vmem:[%s1 + $0xc0] sm:$0xff]
    %v89 = vld [vmem:[%s1 + $0xc8] sm:$0xff]
    %v90 = vld [vmem:[%s1 + $0xd0] sm:$0xff]
    %v91 = vld [vmem:[%s1 + $0xd8] sm:$0xff]
    %v92 = vld [vmem:[%s1 + $0xe0] sm:$0xff]
    %v93 = vld [vmem:[%s1 + $0xe8] sm:$0xff]
    %v94 = vld [vmem:[%s1 + $0xf0] sm:$0xff]
    %v95 = vld [vmem:[%s1 + $0xf8] sm:$0xff]
    %v96 = vld [vmem:[%s2] sm:$0x3]
    %v98 = vlaneseq
    %v99 = vshrl.u32 %v98, 7
    %v100 = vsub.s32 0, %v99
    %v101 = vrot.slane %v96, %v100
    %v102 = vlaneseq
    %v103 = vshrl.u32 %v102, 7
    %v104 = vsub.s32 1, %v103
    %v105 = vrot.slane %v96, %v104
    %108 = vmatprep.subr.mxu0 %v95
    %109 = vmatpush1.msra.mxu0 %v94
    %110 = vmatprep.subr.mxu0 %v93
    %111 = vmatpush1.msra.mxu0 %v92
    %112 = vmatprep.subr.mxu0 %v91
    %113 = vmatpush1.msra.mxu0 %v90
    %114 = vmatprep.subr.mxu0 %v89
    %115 = vmatpush1.msra.mxu0 %v88
    %116 = vmatprep.subr.mxu0 %v87
    %117 = vmatpush1.msra.mxu0 %v86
    %118 = vmatprep.subr.mxu0 %v85
    %119 = vmatpush1.msra.mxu0 %v84
    %120 = vmatprep.subr.mxu0 %v83
    %121 = vmatpush1.msra.mxu0 %v82
    %122 = vmatprep.subr.mxu0 %v81
    %123 = vmatpush1.msra.mxu0 %v80
    %124 = vmatprep.subr.mxu0 %v79
    %125 = vmatpush1.msra.mxu0 %v78
    %126 = vmatprep.subr.mxu0 %v77
    %127 = vmatpush1.msra.mxu0 %v76
    %128 = vmatprep.subr.mxu0 %v75
    %129 = vmatpush1.msra.mxu0 %v74
    %130 = vmatprep.subr.mxu0 %v73
    %131 = vmatpush1.msra.mxu0 %v72
    %132 = vmatprep.subr.mxu0 %v71
    %133 = vmatpush1.msra.mxu0 %v70
    %134 = vmatprep.subr.mxu0 %v69
    %135 = vmatpush1.msra.mxu0 %v68
    %136 = vmatprep.subr.mxu0 %v67
    %137 = vmatpush1.msra.mxu0 %v66
    %138 = vmatprep.subr.mxu0 %v65
    %139 = vmatpush1.msra.mxu0 %v64
    %140 = vmatprep.subr.mxu0 0.0
    %141 = vmatpush2.msra.mxu0 0.0
    %142 = vmatprep.subr.mxu0 0.0
    %143 = vmatpush2.msra.mxu0 0.0
    %144 = vmatprep.subr.mxu0 0.0
    %145 = vmatpush2.msra.mxu0 0.0
    %146 = vmatprep.subr.mxu0 0.0
    %147 = vmatpush2.msra.mxu0 0.0
    %148 = vmatprep.subr.mxu0 0.0
    %149 = vmatpush2.msra.mxu0 0.0
    %150 = vmatprep.subr.mxu0 0.0
    %151 = vmatpush2.msra.mxu0 0.0
    %152 = vmatprep.subr.mxu0 0.0
    %153 = vmatpush2.msra.mxu0 0.0
    %154 = vmatprep.subr.mxu0 0.0
    %155 = vmatpush2.msra.mxu0 0.0
    %156 = vmatprep.subr.mxu0 0.0
    %157 = vmatpush2.msra.mxu0 0.0
    %158 = vmatprep.subr.mxu0 0.0
    %159 = vmatpush2.msra.mxu0 0.0
    %160 = vmatprep.subr.mxu0 0.0
    %161 = vmatpush2.msra.mxu0 0.0
    %162 = vmatprep.subr.mxu0 0.0
    %163 = vmatpush2.msra.mxu0 0.0
    %164 = vmatprep.subr.mxu0 0.0
    %165 = vmatpush2.msra.mxu0 0.0
    %166 = vmatprep.subr.mxu0 0.0
    %167 = vmatpush2.msra.mxu0 0.0
    %168 = vmatprep.subr.mxu0 0.0
    %169 = vmatpush2.msra.mxu0 0.0
    %170 = vmatprep.subr.mxu0 0.0
    %171 = vmatpush2.msra.mxu0 0.0
    %172 = vmatprep.mubr.f32.mxu0 0.0
    %173 = vmatmul.mubr.f32.gmra.mxu0 %v62
    %v174 = vpop.f32.mrf.mxu0
    %v175 = vadd.f32 %v101, %v174
    %v176 = vpop.f32.mrf.mxu0
    %v177 = vadd.f32 %v105, %v176
    %178 = vmatprep.mubr.f32.mxu0 0.0
    %179 = vmatmul.mubr.f32.gmra.mxu0 %v63
    %v180 = vpop.f32.mrf.mxu0
    %v181 = vadd.f32 %v101, %v180
    %v182 = vpop.f32.mrf.mxu0
    %v183 = vadd.f32 %v105, %v182
    %184 = vdwg.mxu0
    %185 = vst [vmem:[#allocation2] sm:$0xff] %v175
    %186 = vst [vmem:[#allocation2 + $0x8] sm:$0xff] %v177
    %187 = vst [vmem:[#allocation2 + $0x10] sm:$0xff] %v181
    %188 = vst [vmem:[#allocation2 + $0x18] sm:$0xff] %v183
    %v189 = vld [vmem:[%s3] sm:$0xff]
    %v190 = vld [vmem:[%s3 + $0x8] sm:$0xff]
    %v191 = vld [vmem:[%s3 + $0x10] sm:$0xff]
    %v192 = vld [vmem:[%s3 + $0x18] sm:$0xff]
    %v193 = vld [vmem:[%s3 + $0x20] sm:$0xff]
    %v194 = vld [vmem:[%s3 + $0x28] sm:$0xff]
    %v195 = vld [vmem:[%s3 + $0x30] sm:$0xff]
    %v196 = vld [vmem:[%s3 + $0x38] sm:$0xff]
    %v197 = vld [vmem:[%s3 + $0x40] sm:$0xff]
    %v198 = vld [vmem:[%s3 + $0x48] sm:$0xff]
    %v199 = vld [vmem:[%s3 + $0x50] sm:$0xff]
    %v200 = vld [vmem:[%s3 + $0x58] sm:$0xff]
    %v201 = vld [vmem:[%s3 + $0x60] sm:$0xff]
    %v202 = vld [vmem:[%s3 + $0x68] sm:$0xff]
    %v203 = vld [vmem:[%s3 + $0x70] sm:$0xff]
    %v204 = vld [vmem:[%s3 + $0x78] sm:$0xff]
    %v205 = vld [vmem:[%s3 + $0x80] sm:$0xff]
    %v206 = vld [vmem:[%s3 + $0x88] sm:$0xff]
    %v207 = vld [vmem:[%s3 + $0x90] sm:$0xff]
    %v208 = vld [vmem:[%s3 + $0x98] sm:$0xff]
    %v209 = vld [vmem:[%s3 + $0xa0] sm:$0xff]
    %v210 = vld [vmem:[%s3 + $0xa8] sm:$0xff]
    %v211 = vld [vmem:[%s3 + $0xb0] sm:$0xff]
    %v212 = vld [vmem:[%s3 + $0xb8] sm:$0xff]
    %v213 = vld [vmem:[%s3 + $0xc0] sm:$0xff]
    %v214 = vld [vmem:[%s3 + $0xc8] sm:$0xff]
    %v215 = vld [vmem:[%s3 + $0xd0] sm:$0xff]
    %v216 = vld [vmem:[%s3 + $0xd8] sm:$0xff]
    %v217 = vld [vmem:[%s3 + $0xe0] sm:$0xff]
    %v218 = vld [vmem:[%s3 + $0xe8] sm:$0xff]
    %v219 = vld [vmem:[%s3 + $0xf0] sm:$0xff]
    %v220 = vld [vmem:[%s3 + $0xf8] sm:$0xff]
    %v221 = vld [vmem:[%s3 + $0x100] sm:$0xff]
    %v222 = vld [vmem:[%s3 + $0x108] sm:$0xff]
    %v223 = vld [vmem:[%s3 + $0x110] sm:$0xff]
    %v224 = vld [vmem:[%s3 + $0x118] sm:$0xff]
    %v225 = vld [vmem:[%s3 + $0x120] sm:$0xff]
    %v226 = vld [vmem:[%s3 + $0x128] sm:$0xff]
    %v227 = vld [vmem:[%s3 + $0x130] sm:$0xff]
    %v228 = vld [vmem:[%s3 + $0x138] sm:$0xff]
    %v229 = vld [vmem:[%s3 + $0x140] sm:$0xff]
    %v230 = vld [vmem:[%s3 + $0x148] sm:$0xff]
    %v231 = vld [vmem:[%s3 + $0x150] sm:$0xff]
    %v232 = vld [vmem:[%s3 + $0x158] sm:$0xff]
    %v233 = vld [vmem:[%s3 + $0x160] sm:$0xff]
    %v234 = vld [vmem:[%s3 + $0x168] sm:$0xff]
    %v235 = vld [vmem:[%s3 + $0x170] sm:$0xff]
    %v236 = vld [vmem:[%s3 + $0x178] sm:$0xff]
    %v237 = vld [vmem:[%s3 + $0x180] sm:$0xff]
    %v238 = vld [vmem:[%s3 + $0x188] sm:$0xff]
    %v239 = vld [vmem:[%s3 + $0x190] sm:$0xff]
    %v240 = vld [vmem:[%s3 + $0x198] sm:$0xff]
    %v241 = vld [vmem:[%s3 + $0x1a0] sm:$0xff]
    %v242 = vld [vmem:[%s3 + $0x1a8] sm:$0xff]
    %v243 = vld [vmem:[%s3 + $0x1b0] sm:$0xff]
    %v244 = vld [vmem:[%s3 + $0x1b8] sm:$0xff]
    %v245 = vld [vmem:[%s3 + $0x1c0] sm:$0xff]
    %v246 = vld [vmem:[%s3 + $0x1c8] sm:$0xff]
    %v247 = vld [vmem:[%s3 + $0x1d0] sm:$0xff]
    %v248 = vld [vmem:[%s3 + $0x1d8] sm:$0xff]
    %v249 = vld [vmem:[%s3 + $0x1e0] sm:$0xff]
    %v250 = vld [vmem:[%s3 + $0x1e8] sm:$0xff]
    %v251 = vld [vmem:[%s3 + $0x1f0] sm:$0xff]
    %v252 = vld [vmem:[%s3 + $0x1f8] sm:$0xff]
    %v253 = vld [vmem:[%s4] sm:$0xff]
    %v254 = vld [vmem:[%s5] sm:$0x3]
    %v256 = vlaneseq
    %v257 = vshrl.u32 %v256, 7
    %v258 = vsub.s32 0, %v257
    %v259 = vrot.slane %v254, %v258
    %v260 = vlaneseq
    %v261 = vshrl.u32 %v260, 7
    %v262 = vsub.s32 1, %v261
    %v263 = vrot.slane %v254, %v262
    %v267 = vcombine.high %v253, %v253
    %vm268 = vcmask 31744
    %v270 = vsel %vm268, %v189, 0
    %v273 = vsel %vm268, %v190, 0
    %v276 = vsel %vm268, %v191, 0
    %v279 = vsel %vm268, %v192, 0
    %v282 = vsel %vm268, %v193, 0
    %v285 = vsel %vm268, %v194, 0
    %v288 = vsel %vm268, %v195, 0
    %v291 = vsel %vm268, %v196, 0
    %v294 = vsel %vm268, %v197, 0
    %v297 = vsel %vm268, %v198, 0
    %v300 = vsel %vm268, %v199, 0
    %v303 = vsel %vm268, %v200, 0
    %v306 = vsel %vm268, %v201, 0
    %v309 = vsel %vm268, %v202, 0
    %v312 = vsel %vm268, %v203, 0
    %v315 = vsel %vm268, %v204, 0
    %v318 = vsel %vm268, %v205, 0
    %v321 = vsel %vm268, %v206, 0
    %v324 = vsel %vm268, %v207, 0
    %v327 = vsel %vm268, %v208, 0
    %v330 = vsel %vm268, %v209, 0
    %v333 = vsel %vm268, %v210, 0
    %v336 = vsel %vm268, %v211, 0
    %v339 = vsel %vm268, %v212, 0
    %v342 = vsel %vm268, %v213, 0
    %v345 = vsel %vm268, %v214, 0
    %v348 = vsel %vm268, %v215, 0
    %v351 = vsel %vm268, %v216, 0
    %v354 = vsel %vm268, %v217, 0
    %v357 = vsel %vm268, %v218, 0
    %v360 = vsel %vm268, %v219, 0
    %v363 = vsel %vm268, %v220, 0
    %v366 = vsel %vm268, %v221, 0
    %v369 = vsel %vm268, %v222, 0
    %v372 = vsel %vm268, %v223, 0
    %v375 = vsel %vm268, %v224, 0
    %v378 = vsel %vm268, %v225, 0
    %v381 = vsel %vm268, %v226, 0
    %v384 = vsel %vm268, %v227, 0
    %v387 = vsel %vm268, %v228, 0
    %v390 = vsel %vm268, %v229, 0
    %v393 = vsel %vm268, %v230, 0
    %v396 = vsel %vm268, %v231, 0
    %v399 = vsel %vm268, %v232, 0
    %v402 = vsel %vm268, %v233, 0
    %v405 = vsel %vm268, %v234, 0
    %v408 = vsel %vm268, %v235, 0
    %v411 = vsel %vm268, %v236, 0
    %v414 = vsel %vm268, %v237, 0
    %v417 = vsel %vm268, %v238, 0
    %v420 = vsel %vm268, %v239, 0
    %v423 = vsel %vm268, %v240, 0
    %v426 = vsel %vm268, %v241, 0
    %v429 = vsel %vm268, %v242, 0
    %v432 = vsel %vm268, %v243, 0
    %v435 = vsel %vm268, %v244, 0
    %v438 = vsel %vm268, %v245, 0
    %v441 = vsel %vm268, %v246, 0
    %v444 = vsel %vm268, %v247, 0
    %v447 = vsel %vm268, %v248, 0
    %v450 = vsel %vm268, %v249, 0
    %v453 = vsel %vm268, %v250, 0
    %v456 = vsel %vm268, %v251, 0
    %v459 = vsel %vm268, %v252, 0
    %vm461 = vcmask 1043456
    %v462 = vsel %vm461, %v253, 0
    %v464 = vsel %vm461, %v267, 0
    %466 = vmatprep.subr.mxu0 0.0
    %467 = vmatpush1.msra.mxu0 0.0
    %468 = vmatprep.subr.mxu0 0.0
    %469 = vmatpush1.msra.mxu0 0.0
    %470 = vmatprep.subr.mxu0 0.0
    %471 = vmatpush1.msra.mxu0 0.0
    %472 = vmatprep.subr.mxu0 0.0
    %473 = vmatpush1.msra.mxu0 0.0
    %474 = vmatprep.subr.mxu0 0.0
    %475 = vmatpush1.msra.mxu0 0.0
    %476 = vmatprep.subr.mxu0 0.0
    %477 = vmatpush1.msra.mxu0 0.0
    %478 = vmatprep.subr.mxu0 0.0
    %479 = vmatpush1.msra.mxu0 0.0
    %480 = vmatprep.subr.mxu0 0.0
    %481 = vmatpush1.msra.mxu0 0.0
    %482 = vmatprep.subr.mxu0 0.0
    %483 = vmatpush1.msra.mxu0 0.0
    %484 = vmatprep.subr.mxu0 0.0
    %485 = vmatpush1.msra.mxu0 0.0
    %486 = vmatprep.subr.mxu0 0.0
    %487 = vmatpush1.msra.mxu0 0.0
    %488 = vmatprep.subr.mxu0 0.0
    %489 = vmatpush1.msra.mxu0 0.0
    %490 = vmatprep.subr.mxu0 0.0
    %491 = vmatpush1.msra.mxu0 0.0
    %492 = vmatprep.subr.mxu0 0.0
    %493 = vmatpush1.msra.mxu0 0.0
    %494 = vmatprep.subr.mxu0 0.0
    %495 = vmatpush1.msra.mxu0 0.0
    %496 = vmatprep.subr.mxu0 %v464
    %497 = vmatpush1.msra.mxu0 %v462
    %498 = vmatprep.subr.mxu0 0.0
    %499 = vmatpush2.msra.mxu0 0.0
    %500 = vmatprep.subr.mxu0 0.0
    %501 = vmatpush2.msra.mxu0 0.0
    %502 = vmatprep.subr.mxu0 0.0
    %503 = vmatpush2.msra.mxu0 0.0
    %504 = vmatprep.subr.mxu0 0.0
    %505 = vmatpush2.msra.mxu0 0.0
    %506 = vmatprep.subr.mxu0 0.0
    %507 = vmatpush2.msra.mxu0 0.0
    %508 = vmatprep.subr.mxu0 0.0
    %509 = vmatpush2.msra.mxu0 0.0
    %510 = vmatprep.subr.mxu0 0.0
    %511 = vmatpush2.msra.mxu0 0.0
    %512 = vmatprep.subr.mxu0 0.0
    %513 = vmatpush2.msra.mxu0 0.0
    %514 = vmatprep.subr.mxu0 0.0
    %515 = vmatpush2.msra.mxu0 0.0
    %516 = vmatprep.subr.mxu0 0.0
    %517 = vmatpush2.msra.mxu0 0.0
    %518 = vmatprep.subr.mxu0 0.0
    %519 = vmatpush2.msra.mxu0 0.0
    %520 = vmatprep.subr.mxu0 0.0
    %521 = vmatpush2.msra.mxu0 0.0
    %522 = vmatprep.subr.mxu0 0.0
    %523 = vmatpush2.msra.mxu0 0.0
    %524 = vmatprep.subr.mxu0 0.0
    %525 = vmatpush2.msra.mxu0 0.0
    %526 = vmatprep.subr.mxu0 0.0
    %527 = vmatpush2.msra.mxu0 0.0
    %528 = vmatprep.subr.mxu0 0.0
    %529 = vmatpush2.msra.mxu0 0.0
    %530 = vmatprep.mubr.f32.mxu0 0.0
    %531 = vmatmul.mubr.f32.gmra.mxu0 %v270
    %v532 = vpop.f32.mrf.mxu0
    %v533 = vadd.f32 %v259, %v532
    %v534 = vpop.f32.mrf.mxu0
    %v535 = vadd.f32 %v263, %v534
    %536 = vmatprep.mubr.f32.mxu0 0.0
    %537 = vmatmul.mubr.f32.gmra.mxu0 %v273
    %v538 = vpop.f32.mrf.mxu0
    %v539 = vadd.f32 %v259, %v538
    %v540 = vpop.f32.mrf.mxu0
    %v541 = vadd.f32 %v263, %v540
    %542 = vmatprep.mubr.f32.mxu0 0.0
    %543 = vmatmul.mubr.f32.gmra.mxu0 %v276
    %v544 = vpop.f32.mrf.mxu0
    %v545 = vadd.f32 %v259, %v544
    %v546 = vpop.f32.mrf.mxu0
    %v547 = vadd.f32 %v263, %v546
    %548 = vmatprep.mubr.f32.mxu0 0.0
    %549 = vmatmul.mubr.f32.gmra.mxu0 %v279
    %v550 = vpop.f32.mrf.mxu0
    %v551 = vadd.f32 %v259, %v550
    %v552 = vpop.f32.mrf.mxu0
    %v553 = vadd.f32 %v263, %v552
    %554 = vmatprep.mubr.f32.mxu0 0.0
    %555 = vmatmul.mubr.f32.gmra.mxu0 %v282
    %v556 = vpop.f32.mrf.mxu0
    %v557 = vadd.f32 %v259, %v556
    %v558 = vpop.f32.mrf.mxu0
    %v559 = vadd.f32 %v263, %v558
    %560 = vmatprep.mubr.f32.mxu0 0.0
    %561 = vmatmul.mubr.f32.gmra.mxu0 %v285
    %v562 = vpop.f32.mrf.mxu0
    %v563 = vadd.f32 %v259, %v562
    %v564 = vpop.f32.mrf.mxu0
    %v565 = vadd.f32 %v263, %v564
    %566 = vmatprep.mubr.f32.mxu0 0.0
    %567 = vmatmul.mubr.f32.gmra.mxu0 %v288
    %v568 = vpop.f32.mrf.mxu0
    %v569 = vadd.f32 %v259, %v568
    %v570 = vpop.f32.mrf.mxu0
    %v571 = vadd.f32 %v263, %v570
    %572 = vmatprep.mubr.f32.mxu0 0.0
    %573 = vmatmul.mubr.f32.gmra.mxu0 %v291
    %v574 = vpop.f32.mrf.mxu0
    %v575 = vadd.f32 %v259, %v574
    %v576 = vpop.f32.mrf.mxu0
    %v577 = vadd.f32 %v263, %v576
    %578 = vmatprep.mubr.f32.mxu0 0.0
    %579 = vmatmul.mubr.f32.gmra.mxu0 %v294
    %v580 = vpop.f32.mrf.mxu0
    %v581 = vadd.f32 %v259, %v580
    %v582 = vpop.f32.mrf.mxu0
    %v583 = vadd.f32 %v263, %v582
    %584 = vmatprep.mubr.f32.mxu0 0.0
    %585 = vmatmul.mubr.f32.gmra.mxu0 %v297
    %v586 = vpop.f32.mrf.mxu0
    %v587 = vadd.f32 %v259, %v586
    %v588 = vpop.f32.mrf.mxu0
    %v589 = vadd.f32 %v263, %v588
    %590 = vmatprep.mubr.f32.mxu0 0.0
    %591 = vmatmul.mubr.f32.gmra.mxu0 %v300
    %v592 = vpop.f32.mrf.mxu0
    %v593 = vadd.f32 %v259, %v592
    %v594 = vpop.f32.mrf.mxu0
    %v595 = vadd.f32 %v263, %v594
    %596 = vmatprep.mubr.f32.mxu0 0.0
    %597 = vmatmul.mubr.f32.gmra.mxu0 %v303
    %v598 = vpop.f32.mrf.mxu0
    %v599 = vadd.f32 %v259, %v598
    %v600 = vpop.f32.mrf.mxu0
    %v601 = vadd.f32 %v263, %v600
    %602 = vmatprep.mubr.f32.mxu0 0.0
    %603 = vmatmul.mubr.f32.gmra.mxu0 %v306
    %v604 = vpop.f32.mrf.mxu0
    %v605 = vadd.f32 %v259, %v604
    %v606 = vpop.f32.mrf.mxu0
    %v607 = vadd.f32 %v263, %v606
    %608 = vmatprep.mubr.f32.mxu0 0.0
    %609 = vmatmul.mubr.f32.gmra.mxu0 %v309
    %v610 = vpop.f32.mrf.mxu0
    %v611 = vadd.f32 %v259, %v610
    %v612 = vpop.f32.mrf.mxu0
    %v613 = vadd.f32 %v263, %v612
    %614 = vmatprep.mubr.f32.mxu0 0.0
    %615 = vmatmul.mubr.f32.gmra.mxu0 %v312
    %v616 = vpop.f32.mrf.mxu0
    %v617 = vadd.f32 %v259, %v616
    %v618 = vpop.f32.mrf.mxu0
    %v619 = vadd.f32 %v263, %v618
    %620 = vmatprep.mubr.f32.mxu0 0.0
    %621 = vmatmul.mubr.f32.gmra.mxu0 %v315
    %v622 = vpop.f32.mrf.mxu0
    %v623 = vadd.f32 %v259, %v622
    %v624 = vpop.f32.mrf.mxu0
    %v625 = vadd.f32 %v263, %v624
    %626 = vmatprep.mubr.f32.mxu0 0.0
    %627 = vmatmul.mubr.f32.gmra.mxu0 %v318
    %v628 = vpop.f32.mrf.mxu0
    %v629 = vadd.f32 %v259, %v628
    %v630 = vpop.f32.mrf.mxu0
    %v631 = vadd.f32 %v263, %v630
    %632 = vmatprep.mubr.f32.mxu0 0.0
    %633 = vmatmul.mubr.f32.gmra.mxu0 %v321
    %v634 = vpop.f32.mrf.mxu0
    %v635 = vadd.f32 %v259, %v634
    %v636 = vpop.f32.mrf.mxu0
    %v637 = vadd.f32 %v263, %v636
    %638 = vmatprep.mubr.f32.mxu0 0.0
    %639 = vmatmul.mubr.f32.gmra.mxu0 %v324
    %v640 = vpop.f32.mrf.mxu0
    %v641 = vadd.f32 %v259, %v640
    %v642 = vpop.f32.mrf.mxu0
    %v643 = vadd.f32 %v263, %v642
    %644 = vmatprep.mubr.f32.mxu0 0.0
    %645 = vmatmul.mubr.f32.gmra.mxu0 %v327
    %v646 = vpop.f32.mrf.mxu0
    %v647 = vadd.f32 %v259, %v646
    %v648 = vpop.f32.mrf.mxu0
    %v649 = vadd.f32 %v263, %v648
    %650 = vmatprep.mubr.f32.mxu0 0.0
    %651 = vmatmul.mubr.f32.gmra.mxu0 %v330
    %v652 = vpop.f32.mrf.mxu0
    %v653 = vadd.f32 %v259, %v652
    %v654 = vpop.f32.mrf.mxu0
    %v655 = vadd.f32 %v263, %v654
    %656 = vmatprep.mubr.f32.mxu0 0.0
    %657 = vmatmul.mubr.f32.gmra.mxu0 %v333
    %v658 = vpop.f32.mrf.mxu0
    %v659 = vadd.f32 %v259, %v658
    %v660 = vpop.f32.mrf.mxu0
    %v661 = vadd.f32 %v263, %v660
    %662 = vmatprep.mubr.f32.mxu0 0.0
    %663 = vmatmul.mubr.f32.gmra.mxu0 %v336
    %v664 = vpop.f32.mrf.mxu0
    %v665 = vadd.f32 %v259, %v664
    %v666 = vpop.f32.mrf.mxu0
    %v667 = vadd.f32 %v263, %v666
    %668 = vmatprep.mubr.f32.mxu0 0.0
    %669 = vmatmul.mubr.f32.gmra.mxu0 %v339
    %v670 = vpop.f32.mrf.mxu0
    %v671 = vadd.f32 %v259, %v670
    %v672 = vpop.f32.mrf.mxu0
    %v673 = vadd.f32 %v263, %v672
    %674 = vmatprep.mubr.f32.mxu0 0.0
    %675 = vmatmul.mubr.f32.gmra.mxu0 %v342
    %v676 = vpop.f32.mrf.mxu0
    %v677 = vadd.f32 %v259, %v676
    %v678 = vpop.f32.mrf.mxu0
    %v679 = vadd.f32 %v263, %v678
    %680 = vmatprep.mubr.f32.mxu0 0.0
    %681 = vmatmul.mubr.f32.gmra.mxu0 %v345
    %v682 = vpop.f32.mrf.mxu0
    %v683 = vadd.f32 %v259, %v682
    %v684 = vpop.f32.mrf.mxu0
    %v685 = vadd.f32 %v263, %v684
    %686 = vmatprep.mubr.f32.mxu0 0.0
    %687 = vmatmul.mubr.f32.gmra.mxu0 %v348
    %v688 = vpop.f32.mrf.mxu0
    %v689 = vadd.f32 %v259, %v688
    %v690 = vpop.f32.mrf.mxu0
    %v691 = vadd.f32 %v263, %v690
    %692 = vmatprep.mubr.f32.mxu0 0.0
    %693 = vmatmul.mubr.f32.gmra.mxu0 %v351
    %v694 = vpop.f32.mrf.mxu0
    %v695 = vadd.f32 %v259, %v694
    %v696 = vpop.f32.mrf.mxu0
    %v697 = vadd.f32 %v263, %v696
    %698 = vmatprep.mubr.f32.mxu0 0.0
    %699 = vmatmul.mubr.f32.gmra.mxu0 %v354
    %v700 = vpop.f32.mrf.mxu0
    %v701 = vadd.f32 %v259, %v700
    %v702 = vpop.f32.mrf.mxu0
    %v703 = vadd.f32 %v263, %v702
    %704 = vmatprep.mubr.f32.mxu0 0.0
    %705 = vmatmul.mubr.f32.gmra.mxu0 %v357
    %v706 = vpop.f32.mrf.mxu0
    %v707 = vadd.f32 %v259, %v706
    %v708 = vpop.f32.mrf.mxu0
    %v709 = vadd.f32 %v263, %v708
    %710 = vmatprep.mubr.f32.mxu0 0.0
    %711 = vmatmul.mubr.f32.gmra.mxu0 %v360
    %v712 = vpop.f32.mrf.mxu0
    %v713 = vadd.f32 %v259, %v712
    %v714 = vpop.f32.mrf.mxu0
    %v715 = vadd.f32 %v263, %v714
    %716 = vmatprep.mubr.f32.mxu0 0.0
    %717 = vmatmul.mubr.f32.gmra.mxu0 %v363
    %v718 = vpop.f32.mrf.mxu0
    %v719 = vadd.f32 %v259, %v718
    %v720 = vpop.f32.mrf.mxu0
    %v721 = vadd.f32 %v263, %v720
    %722 = vmatprep.mubr.f32.mxu0 0.0
    %723 = vmatmul.mubr.f32.gmra.mxu0 %v366
    %v724 = vpop.f32.mrf.mxu0
    %v725 = vadd.f32 %v259, %v724
    %v726 = vpop.f32.mrf.mxu0
    %v727 = vadd.f32 %v263, %v726
    %728 = vmatprep.mubr.f32.mxu0 0.0
    %729 = vmatmul.mubr.f32.gmra.mxu0 %v369
    %v730 = vpop.f32.mrf.mxu0
    %v731 = vadd.f32 %v259, %v730
    %v732 = vpop.f32.mrf.mxu0
    %v733 = vadd.f32 %v263, %v732
    %734 = vmatprep.mubr.f32.mxu0 0.0
    %735 = vmatmul.mubr.f32.gmra.mxu0 %v372
    %v736 = vpop.f32.mrf.mxu0
    %v737 = vadd.f32 %v259, %v736
    %v738 = vpop.f32.mrf.mxu0
    %v739 = vadd.f32 %v263, %v738
    %740 = vmatprep.mubr.f32.mxu0 0.0
    %741 = vmatmul.mubr.f32.gmra.mxu0 %v375
    %v742 = vpop.f32.mrf.mxu0
    %v743 = vadd.f32 %v259, %v742
    %v744 = vpop.f32.mrf.mxu0
    %v745 = vadd.f32 %v263, %v744
    %746 = vmatprep.mubr.f32.mxu0 0.0
    %747 = vmatmul.mubr.f32.gmra.mxu0 %v378
    %v748 = vpop.f32.mrf.mxu0
    %v749 = vadd.f32 %v259, %v748
    %v750 = vpop.f32.mrf.mxu0
    %v751 = vadd.f32 %v263, %v750
    %752 = vmatprep.mubr.f32.mxu0 0.0
    %753 = vmatmul.mubr.f32.gmra.mxu0 %v381
    %v754 = vpop.f32.mrf.mxu0
    %v755 = vadd.f32 %v259, %v754
    %v756 = vpop.f32.mrf.mxu0
    %v757 = vadd.f32 %v263, %v756
    %758 = vmatprep.mubr.f32.mxu0 0.0
    %759 = vmatmul.mubr.f32.gmra.mxu0 %v384
    %v760 = vpop.f32.mrf.mxu0
    %v761 = vadd.f32 %v259, %v760
    %v762 = vpop.f32.mrf.mxu0
    %v763 = vadd.f32 %v263, %v762
    %764 = vmatprep.mubr.f32.mxu0 0.0
    %765 = vmatmul.mubr.f32.gmra.mxu0 %v387
    %v766 = vpop.f32.mrf.mxu0
    %v767 = vadd.f32 %v259, %v766
    %v768 = vpop.f32.mrf.mxu0
    %v769 = vadd.f32 %v263, %v768
    %770 = vmatprep.mubr.f32.mxu0 0.0
    %771 = vmatmul.mubr.f32.gmra.mxu0 %v390
    %v772 = vpop.f32.mrf.mxu0
    %v773 = vadd.f32 %v259, %v772
    %v774 = vpop.f32.mrf.mxu0
    %v775 = vadd.f32 %v263, %v774
    %776 = vmatprep.mubr.f32.mxu0 0.0
    %777 = vmatmul.mubr.f32.gmra.mxu0 %v393
    %v778 = vpop.f32.mrf.mxu0
    %v779 = vadd.f32 %v259, %v778
    %v780 = vpop.f32.mrf.mxu0
    %v781 = vadd.f32 %v263, %v780
    %782 = vmatprep.mubr.f32.mxu0 0.0
    %783 = vmatmul.mubr.f32.gmra.mxu0 %v396
    %v784 = vpop.f32.mrf.mxu0
    %v785 = vadd.f32 %v259, %v784
    %v786 = vpop.f32.mrf.mxu0
    %v787 = vadd.f32 %v263, %v786
    %788 = vmatprep.mubr.f32.mxu0 0.0
    %789 = vmatmul.mubr.f32.gmra.mxu0 %v399
    %v790 = vpop.f32.mrf.mxu0
    %v791 = vadd.f32 %v259, %v790
    %v792 = vpop.f32.mrf.mxu0
    %v793 = vadd.f32 %v263, %v792
    %794 = vmatprep.mubr.f32.mxu0 0.0
    %795 = vmatmul.mubr.f32.gmra.mxu0 %v402
    %v796 = vpop.f32.mrf.mxu0
    %v797 = vadd.f32 %v259, %v796
    %v798 = vpop.f32.mrf.mxu0
    %v799 = vadd.f32 %v263, %v798
    %800 = vmatprep.mubr.f32.mxu0 0.0
    %801 = vmatmul.mubr.f32.gmra.mxu0 %v405
    %v802 = vpop.f32.mrf.mxu0
    %v803 = vadd.f32 %v259, %v802
    %v804 = vpop.f32.mrf.mxu0
    %v805 = vadd.f32 %v263, %v804
    %806 = vmatprep.mubr.f32.mxu0 0.0
    %807 = vmatmul.mubr.f32.gmra.mxu0 %v408
    %v808 = vpop.f32.mrf.mxu0
    %v809 = vadd.f32 %v259, %v808
    %v810 = vpop.f32.mrf.mxu0
    %v811 = vadd.f32 %v263, %v810
    %812 = vmatprep.mubr.f32.mxu0 0.0
    %813 = vmatmul.mubr.f32.gmra.mxu0 %v411
    %v814 = vpop.f32.mrf.mxu0
    %v815 = vadd.f32 %v259, %v814
    %v816 = vpop.f32.mrf.mxu0
    %v817 = vadd.f32 %v263, %v816
    %818 = vmatprep.mubr.f32.mxu0 0.0
    %819 = vmatmul.mubr.f32.gmra.mxu0 %v414
    %v820 = vpop.f32.mrf.mxu0
    %v821 = vadd.f32 %v259, %v820
    %v822 = vpop.f32.mrf.mxu0
    %v823 = vadd.f32 %v263, %v822
    %824 = vmatprep.mubr.f32.mxu0 0.0
    %825 = vmatmul.mubr.f32.gmra.mxu0 %v417
    %v826 = vpop.f32.mrf.mxu0
    %v827 = vadd.f32 %v259, %v826
    %v828 = vpop.f32.mrf.mxu0
    %v829 = vadd.f32 %v263, %v828
    %830 = vmatprep.mubr.f32.mxu0 0.0
    %831 = vmatmul.mubr.f32.gmra.mxu0 %v420
    %v832 = vpop.f32.mrf.mxu0
    %v833 = vadd.f32 %v259, %v832
    %v834 = vpop.f32.mrf.mxu0
    %v835 = vadd.f32 %v263, %v834
    %836 = vmatprep.mubr.f32.mxu0 0.0
    %837 = vmatmul.mubr.f32.gmra.mxu0 %v423
    %v838 = vpop.f32.mrf.mxu0
    %v839 = vadd.f32 %v259, %v838
    %v840 = vpop.f32.mrf.mxu0
    %v841 = vadd.f32 %v263, %v840
    %842 = vmatprep.mubr.f32.mxu0 0.0
    %843 = vmatmul.mubr.f32.gmra.mxu0 %v426
    %v844 = vpop.f32.mrf.mxu0
    %v845 = vadd.f32 %v259, %v844
    %v846 = vpop.f32.mrf.mxu0
    %v847 = vadd.f32 %v263, %v846
    %848 = vmatprep.mubr.f32.mxu0 0.0
    %849 = vmatmul.mubr.f32.gmra.mxu0 %v429
    %v850 = vpop.f32.mrf.mxu0
    %v851 = vadd.f32 %v259, %v850
    %v852 = vpop.f32.mrf.mxu0
    %v853 = vadd.f32 %v263, %v852
    %854 = vmatprep.mubr.f32.mxu0 0.0
    %855 = vmatmul.mubr.f32.gmra.mxu0 %v432
    %v856 = vpop.f32.mrf.mxu0
    %v857 = vadd.f32 %v259, %v856
    %v858 = vpop.f32.mrf.mxu0
    %v859 = vadd.f32 %v263, %v858
    %860 = vmatprep.mubr.f32.mxu0 0.0
    %861 = vmatmul.mubr.f32.gmra.mxu0 %v435
    %v862 = vpop.f32.mrf.mxu0
    %v863 = vadd.f32 %v259, %v862
    %v864 = vpop.f32.mrf.mxu0
    %v865 = vadd.f32 %v263, %v864
    %866 = vmatprep.mubr.f32.mxu0 0.0
    %867 = vmatmul.mubr.f32.gmra.mxu0 %v438
    %v868 = vpop.f32.mrf.mxu0
    %v869 = vadd.f32 %v259, %v868
    %v870 = vpop.f32.mrf.mxu0
    %v871 = vadd.f32 %v263, %v870
    %872 = vmatprep.mubr.f32.mxu0 0.0
    %873 = vmatmul.mubr.f32.gmra.mxu0 %v441
    %v874 = vpop.f32.mrf.mxu0
    %v875 = vadd.f32 %v259, %v874
    %v876 = vpop.f32.mrf.mxu0
    %v877 = vadd.f32 %v263, %v876
    %878 = vmatprep.mubr.f32.mxu0 0.0
    %879 = vmatmul.mubr.f32.gmra.mxu0 %v444
    %v880 = vpop.f32.mrf.mxu0
    %v881 = vadd.f32 %v259, %v880
    %v882 = vpop.f32.mrf.mxu0
    %v883 = vadd.f32 %v263, %v882
    %884 = vmatprep.mubr.f32.mxu0 0.0
    %885 = vmatmul.mubr.f32.gmra.mxu0 %v447
    %v886 = vpop.f32.mrf.mxu0
    %v887 = vadd.f32 %v259, %v886
    %v888 = vpop.f32.mrf.mxu0
    %v889 = vadd.f32 %v263, %v888
    %890 = vmatprep.mubr.f32.mxu0 0.0
    %891 = vmatmul.mubr.f32.gmra.mxu0 %v450
    %v892 = vpop.f32.mrf.mxu0
    %v893 = vadd.f32 %v259, %v892
    %v894 = vpop.f32.mrf.mxu0
    %v895 = vadd.f32 %v263, %v894
    %896 = vmatprep.mubr.f32.mxu0 0.0
    %897 = vmatmul.mubr.f32.gmra.mxu0 %v453
    %v898 = vpop.f32.mrf.mxu0
    %v899 = vadd.f32 %v259, %v898
    %v900 = vpop.f32.mrf.mxu0
    %v901 = vadd.f32 %v263, %v900
    %902 = vmatprep.mubr.f32.mxu0 0.0
    %903 = vmatmul.mubr.f32.gmra.mxu0 %v456
    %v904 = vpop.f32.mrf.mxu0
    %v905 = vadd.f32 %v259, %v904
    %v906 = vpop.f32.mrf.mxu0
    %v907 = vadd.f32 %v263, %v906
    %908 = vmatprep.mubr.f32.mxu0 0.0
    %909 = vmatmul.mubr.f32.gmra.mxu0 %v459
    %v910 = vpop.f32.mrf.mxu0
    %v911 = vadd.f32 %v259, %v910
    %v912 = vpop.f32.mrf.mxu0
    %v913 = vadd.f32 %v263, %v912
    %914 = vdwg.mxu0
    %v915 = vlaneseq
    %v916 = vshrl.u32 %v915, 7
    %v917 = vadd.s32 %v916, 8
    %v918 = vadd.s32 %v916, 16
    %v919 = vadd.s32 %v916, 24
    %v920 = vadd.s32 %v916, 32
    %v921 = vadd.s32 %v916, 40
    %v922 = vadd.s32 %v916, 48
    %v923 = vadd.s32 %v916, 56
    %v924 = vadd.s32 %v916, 64
    %v925 = vadd.s32 %v916, 72
    %v926 = vadd.s32 %v916, 80
    %v927 = vadd.s32 %v916, 88
    %v928 = vadd.s32 %v916, 96
    %v929 = vadd.s32 %v916, 104
    %v930 = vadd.s32 %v916, 112
    %v931 = vadd.s32 %v916, 120
    %v932 = vadd.s32 %v916, 128
    %v933 = vadd.s32 %v916, 136
    %v934 = vadd.s32 %v916, 144
    %v935 = vadd.s32 %v916, 152
    %v936 = vadd.s32 %v916, 160
    %v937 = vadd.s32 %v916, 168
    %v938 = vadd.s32 %v916, 176
    %v939 = vadd.s32 %v916, 184
    %v940 = vadd.s32 %v916, 192
    %v941 = vadd.s32 %v916, 200
    %v942 = vadd.s32 %v916, 208
    %v943 = vadd.s32 %v916, 216
    %v944 = vadd.s32 %v916, 224
    %v945 = vadd.s32 %v916, 232
    %v946 = vadd.s32 %v916, 240
    %v947 = vadd.s32 %v916, 248
    %v948 = vlaneseq
    %v949 = vand.u32 %v948, 127
    %v950 = vmul.u32 %v949, 8
    %vm951 = vcmp.ge.s32.totalorder %v916, %v950
    %vm952 = vcmp.ge.s32.totalorder %v917, %v950
    %vm953 = vcmp.ge.s32.totalorder %v918, %v950
    %vm954 = vcmp.ge.s32.totalorder %v919, %v950
    %vm955 = vcmp.ge.s32.totalorder %v920, %v950
    %vm956 = vcmp.ge.s32.totalorder %v921, %v950
    %vm957 = vcmp.ge.s32.totalorder %v922, %v950
    %vm958 = vcmp.ge.s32.totalorder %v923, %v950
    %vm959 = vcmp.ge.s32.totalorder %v924, %v950
    %vm960 = vcmp.ge.s32.totalorder %v925, %v950
    %vm961 = vcmp.ge.s32.totalorder %v926, %v950
    %vm962 = vcmp.ge.s32.totalorder %v927, %v950
    %vm963 = vcmp.ge.s32.totalorder %v928, %v950
    %vm964 = vcmp.ge.s32.totalorder %v929, %v950
    %vm965 = vcmp.ge.s32.totalorder %v930, %v950
    %vm966 = vcmp.ge.s32.totalorder %v931, %v950
    %vm967 = vcmp.ge.s32.totalorder %v932, %v950
    %vm968 = vcmp.ge.s32.totalorder %v933, %v950
    %vm969 = vcmp.ge.s32.totalorder %v934, %v950
    %vm970 = vcmp.ge.s32.totalorder %v935, %v950
    %vm971 = vcmp.ge.s32.totalorder %v936, %v950
    %vm972 = vcmp.ge.s32.totalorder %v937, %v950
    %vm973 = vcmp.ge.s32.totalorder %v938, %v950
    %vm974 = vcmp.ge.s32.totalorder %v939, %v950
    %vm975 = vcmp.ge.s32.totalorder %v940, %v950
    %vm976 = vcmp.ge.s32.totalorder %v941, %v950
    %vm977 = vcmp.ge.s32.totalorder %v942, %v950
    %vm978 = vcmp.ge.s32.totalorder %v943, %v950
    %vm979 = vcmp.ge.s32.totalorder %v944, %v950
    %vm980 = vcmp.ge.s32.totalorder %v945, %v950
    %vm981 = vcmp.ge.s32.totalorder %v946, %v950
    %vm982 = vcmp.ge.s32.totalorder %v947, %v950
    %v983 = vadd.s32 %v949, 1
    %v984 = vmul.u32 %v983, 8
    %vm985 = vcmp.lt.s32.totalorder %v916, %v984
    %vm986 = vcmp.lt.s32.totalorder %v917, %v984
    %vm987 = vcmp.lt.s32.totalorder %v918, %v984
    %vm988 = vcmp.lt.s32.totalorder %v919, %v984
    %vm989 = vcmp.lt.s32.totalorder %v920, %v984
    %vm990 = vcmp.lt.s32.totalorder %v921, %v984
    %vm991 = vcmp.lt.s32.totalorder %v922, %v984
    %vm992 = vcmp.lt.s32.totalorder %v923, %v984
    %vm993 = vcmp.lt.s32.totalorder %v924, %v984
    %vm994 = vcmp.lt.s32.totalorder %v925, %v984
    %vm995 = vcmp.lt.s32.totalorder %v926, %v984
    %vm996 = vcmp.lt.s32.totalorder %v927, %v984
    %vm997 = vcmp.lt.s32.totalorder %v928, %v984
    %vm998 = vcmp.lt.s32.totalorder %v929, %v984
    %vm999 = vcmp.lt.s32.totalorder %v930, %v984
    %vm1000 = vcmp.lt.s32.totalorder %v931, %v984
    %vm1001 = vcmp.lt.s32.totalorder %v932, %v984
    %vm1002 = vcmp.lt.s32.totalorder %v933, %v984
    %vm1003 = vcmp.lt.s32.totalorder %v934, %v984
    %vm1004 = vcmp.lt.s32.totalorder %v935, %v984
    %vm1005 = vcmp.lt.s32.totalorder %v936, %v984
    %vm1006 = vcmp.lt.s32.totalorder %v937, %v984
    %vm1007 = vcmp.lt.s32.totalorder %v938, %v984
    %vm1008 = vcmp.lt.s32.totalorder %v939, %v984
    %vm1009 = vcmp.lt.s32.totalorder %v940, %v984
    %vm1010 = vcmp.lt.s32.totalorder %v941, %v984
    %vm1011 = vcmp.lt.s32.totalorder %v942, %v984
    %vm1012 = vcmp.lt.s32.totalorder %v943, %v984
    %vm1013 = vcmp.lt.s32.totalorder %v944, %v984
    %vm1014 = vcmp.lt.s32.totalorder %v945, %v984
    %vm1015 = vcmp.lt.s32.totalorder %v946, %v984
    %vm1016 = vcmp.lt.s32.totalorder %v947, %v984
    %vm1017 = vmand %vm951, %vm985
    %vm1018 = vmand %vm952, %vm986
    %vm1019 = vmand %vm953, %vm987
    %vm1020 = vmand %vm954, %vm988
    %vm1021 = vmand %vm955, %vm989
    %vm1022 = vmand %vm956, %vm990
    %vm1023 = vmand %vm957, %vm991
    %vm1024 = vmand %vm958, %vm992
    %vm1025 = vmand %vm959, %vm993
    %vm1026 = vmand %vm960, %vm994
    %vm1027 = vmand %vm961, %vm995
    %vm1028 = vmand %vm962, %vm996
    %vm1029 = vmand %vm963, %vm997
    %vm1030 = vmand %vm964, %vm998
    %vm1031 = vmand %vm965, %vm999
    %vm1032 = vmand %vm966, %vm1000
    %vm1033 = vmand %vm967, %vm1001
    %vm1034 = vmand %vm968, %vm1002
    %vm1035 = vmand %vm969, %vm1003
    %vm1036 = vmand %vm970, %vm1004
    %vm1037 = vmand %vm971, %vm1005
    %vm1038 = vmand %vm972, %vm1006
    %vm1039 = vmand %vm973, %vm1007
    %vm1040 = vmand %vm974, %vm1008
    %vm1041 = vmand %vm975, %vm1009
    %vm1042 = vmand %vm976, %vm1010
    %vm1043 = vmand %vm977, %vm1011
    %vm1044 = vmand %vm978, %vm1012
    %vm1045 = vmand %vm979, %vm1013
    %vm1046 = vmand %vm980, %vm1014
    %vm1047 = vmand %vm981, %vm1015
    %vm1048 = vmand %vm982, %vm1016
    %v1049 = vsel %vm1017, 1, 0
    %v1050 = vsel %vm1018, 1, 0
    %v1051 = vsel %vm1019, 1, 0
    %v1052 = vsel %vm1020, 1, 0
    %v1053 = vsel %vm1021, 1, 0
    %v1054 = vsel %vm1022, 1, 0
    %v1055 = vsel %vm1023, 1, 0
    %v1056 = vsel %vm1024, 1, 0
    %v1057 = vsel %vm1025, 1, 0
    %v1058 = vsel %vm1026, 1, 0
    %v1059 = vsel %vm1027, 1, 0
    %v1060 = vsel %vm1028, 1, 0
    %v1061 = vsel %vm1029, 1, 0
    %v1062 = vsel %vm1030, 1, 0
    %v1063 = vsel %vm1031, 1, 0
    %v1064 = vsel %vm1032, 1, 0
    %v1065 = vsel %vm1033, 1, 0
    %v1066 = vsel %vm1034, 1, 0
    %v1067 = vsel %vm1035, 1, 0
    %v1068 = vsel %vm1036, 1, 0
    %v1069 = vsel %vm1037, 1, 0
    %v1070 = vsel %vm1038, 1, 0
    %v1071 = vsel %vm1039, 1, 0
    %v1072 = vsel %vm1040, 1, 0
    %v1073 = vsel %vm1041, 1, 0
    %v1074 = vsel %vm1042, 1, 0
    %v1075 = vsel %vm1043, 1, 0
    %v1076 = vsel %vm1044, 1, 0
    %v1077 = vsel %vm1045, 1, 0
    %v1078 = vsel %vm1046, 1, 0
    %v1079 = vsel %vm1047, 1, 0
    %v1080 = vsel %vm1048, 1, 0
    %v1081 = vcvt.s32.f32 %v1049
    %v1082 = vcvt.s32.f32 %v1050
    %v1083 = vcvt.s32.f32 %v1051
    %v1084 = vcvt.s32.f32 %v1052
    %v1085 = vcvt.s32.f32 %v1053
    %v1086 = vcvt.s32.f32 %v1054
    %v1087 = vcvt.s32.f32 %v1055
    %v1088 = vcvt.s32.f32 %v1056
    %v1089 = vcvt.s32.f32 %v1057
    %v1090 = vcvt.s32.f32 %v1058
    %v1091 = vcvt.s32.f32 %v1059
    %v1092 = vcvt.s32.f32 %v1060
    %v1093 = vcvt.s32.f32 %v1061
    %v1094 = vcvt.s32.f32 %v1062
    %v1095 = vcvt.s32.f32 %v1063
    %v1096 = vcvt.s32.f32 %v1064
    %v1097 = vcvt.s32.f32 %v1065
    %v1098 = vcvt.s32.f32 %v1066
    %v1099 = vcvt.s32.f32 %v1067
    %v1100 = vcvt.s32.f32 %v1068
    %v1101 = vcvt.s32.f32 %v1069
    %v1102 = vcvt.s32.f32 %v1070
    %v1103 = vcvt.s32.f32 %v1071
    %v1104 = vcvt.s32.f32 %v1072
    %v1105 = vcvt.s32.f32 %v1073
    %v1106 = vcvt.s32.f32 %v1074
    %v1107 = vcvt.s32.f32 %v1075
    %v1108 = vcvt.s32.f32 %v1076
    %v1109 = vcvt.s32.f32 %v1077
    %v1110 = vcvt.s32.f32 %v1078
    %v1111 = vcvt.s32.f32 %v1079
    %v1112 = vcvt.s32.f32 %v1080
    %v1113 = vadd.f32 %v533, %v539
    %v1114 = vadd.f32 %v1113, %v545
    %v1115 = vadd.f32 %v1114, %v551
    %v1116 = vadd.f32 %v1115, %v557
    %v1117 = vadd.f32 %v1116, %v563
    %v1118 = vadd.f32 %v1117, %v569
    %v1119 = vadd.f32 %v1118, %v575
    %v1120 = vadd.f32 %v1119, %v581
    %v1121 = vadd.f32 %v1120, %v587
    %v1122 = vadd.f32 %v1121, %v593
    %v1123 = vadd.f32 %v1122, %v599
    %v1124 = vadd.f32 %v1123, %v605
    %v1125 = vadd.f32 %v1124, %v611
    %v1126 = vadd.f32 %v1125, %v617
    %v1127 = vadd.f32 %v1126, %v623
    %v1128 = vadd.f32 %v1127, %v629
    %v1129 = vadd.f32 %v1128, %v635
    %v1130 = vadd.f32 %v1129, %v641
    %v1131 = vadd.f32 %v1130, %v647
    %v1132 = vadd.f32 %v1131, %v653
    %v1133 = vadd.f32 %v1132, %v659
    %v1134 = vadd.f32 %v1133, %v665
    %v1135 = vadd.f32 %v1134, %v671
    %v1136 = vadd.f32 %v1135, %v677
    %v1137 = vadd.f32 %v1136, %v683
    %v1138 = vadd.f32 %v1137, %v689
    %v1139 = vadd.f32 %v1138, %v695
    %v1140 = vadd.f32 %v1139, %v701
    %v1141 = vadd.f32 %v1140, %v707
    %v1142 = vadd.f32 %v1141, %v713
    %v1143 = vadd.f32 %v1142, %v719
    %v1144 = vrot.slane %v1143, 4
    %v1145 = vadd.f32 %v1143, %v1144
    %v1146 = vrot.slane %v1145, 2
    %v1147 = vadd.f32 %v1145, %v1146
    %v1148 = vrot.slane %v1147, 1
    %v1149 = vadd.f32 %v1147, %v1148
    %v1150 = vadd.f32 %v535, %v541
    %v1151 = vadd.f32 %v1150, %v547
    %v1152 = vadd.f32 %v1151, %v553
    %v1153 = vadd.f32 %v1152, %v559
    %v1154 = vadd.f32 %v1153, %v565
    %v1155 = vadd.f32 %v1154, %v571
    %v1156 = vadd.f32 %v1155, %v577
    %v1157 = vadd.f32 %v1156, %v583
    %v1158 = vadd.f32 %v1157, %v589
    %v1159 = vadd.f32 %v1158, %v595
    %v1160 = vadd.f32 %v1159, %v601
    %v1161 = vadd.f32 %v1160, %v607
    %v1162 = vadd.f32 %v1161, %v613
    %v1163 = vadd.f32 %v1162, %v619
    %v1164 = vadd.f32 %v1163, %v625
    %v1165 = vadd.f32 %v1164, %v631
    %v1166 = vadd.f32 %v1165, %v637
    %v1167 = vadd.f32 %v1166, %v643
    %v1168 = vadd.f32 %v1167, %v649
    %v1169 = vadd.f32 %v1168, %v655
    %v1170 = vadd.f32 %v1169, %v661
    %v1171 = vadd.f32 %v1170, %v667
    %v1172 = vadd.f32 %v1171, %v673
    %v1173 = vadd.f32 %v1172, %v679
    %v1174 = vadd.f32 %v1173, %v685
    %v1175 = vadd.f32 %v1174, %v691
    %v1176 = vadd.f32 %v1175, %v697
    %v1177 = vadd.f32 %v1176, %v703
    %v1178 = vadd.f32 %v1177, %v709
    %v1179 = vadd.f32 %v1178, %v715
    %v1180 = vadd.f32 %v1179, %v721
    %v1181 = vrot.slane %v1180, 4
    %v1182 = vadd.f32 %v1180, %v1181
    %v1183 = vrot.slane %v1182, 2
    %v1184 = vadd.f32 %v1182, %v1183
    %v1185 = vrot.slane %v1184, 1
    %v1186 = vadd.f32 %v1184, %v1185
    %v1187 = vadd.f32 %v725, %v731
    %v1188 = vadd.f32 %v1187, %v737
    %v1189 = vadd.f32 %v1188, %v743
    %v1190 = vadd.f32 %v1189, %v749
    %v1191 = vadd.f32 %v1190, %v755
    %v1192 = vadd.f32 %v1191, %v761
    %v1193 = vadd.f32 %v1192, %v767
    %v1194 = vadd.f32 %v1193, %v773
    %v1195 = vadd.f32 %v1194, %v779
    %v1196 = vadd.f32 %v1195, %v785
    %v1197 = vadd.f32 %v1196, %v791
    %v1198 = vadd.f32 %v1197, %v797
    %v1199 = vadd.f32 %v1198, %v803
    %v1200 = vadd.f32 %v1199, %v809
    %v1201 = vadd.f32 %v1200, %v815
    %v1202 = vadd.f32 %v1201, %v821
    %v1203 = vadd.f32 %v1202, %v827
    %v1204 = vadd.f32 %v1203, %v833
    %v1205 = vadd.f32 %v1204, %v839
    %v1206 = vadd.f32 %v1205, %v845
    %v1207 = vadd.f32 %v1206, %v851
    %v1208 = vadd.f32 %v1207, %v857
    %v1209 = vadd.f32 %v1208, %v863
    %v1210 = vadd.f32 %v1209, %v869
    %v1211 = vadd.f32 %v1210, %v875
    %v1212 = vadd.f32 %v1211, %v881
    %v1213 = vadd.f32 %v1212, %v887
    %v1214 = vadd.f32 %v1213, %v893
    %v1215 = vadd.f32 %v1214, %v899
    %v1216 = vadd.f32 %v1215, %v905
    %v1217 = vadd.f32 %v1216, %v911
    %v1218 = vrot.slane %v1217, 4
    %v1219 = vadd.f32 %v1217, %v1218
    %v1220 = vrot.slane %v1219, 2
    %v1221 = vadd.f32 %v1219, %v1220
    %v1222 = vrot.slane %v1221, 1
    %v1223 = vadd.f32 %v1221, %v1222
    %v1224 = vadd.f32 %v727, %v733
    %v1225 = vadd.f32 %v1224, %v739
    %v1226 = vadd.f32 %v1225, %v745
    %v1227 = vadd.f32 %v1226, %v751
    %v1228 = vadd.f32 %v1227, %v757
    %v1229 = vadd.f32 %v1228, %v763
    %v1230 = vadd.f32 %v1229, %v769
    %v1231 = vadd.f32 %v1230, %v775
    %v1232 = vadd.f32 %v1231, %v781
    %v1233 = vadd.f32 %v1232, %v787
    %v1234 = vadd.f32 %v1233, %v793
    %v1235 = vadd.f32 %v1234, %v799
    %v1236 = vadd.f32 %v1235, %v805
    %v1237 = vadd.f32 %v1236, %v811
    %v1238 = vadd.f32 %v1237, %v817
    %v1239 = vadd.f32 %v1238, %v823
    %v1240 = vadd.f32 %v1239, %v829
    %v1241 = vadd.f32 %v1240, %v835
    %v1242 = vadd.f32 %v1241, %v841
    %v1243 = vadd.f32 %v1242, %v847
    %v1244 = vadd.f32 %v1243, %v853
    %v1245 = vadd.f32 %v1244, %v859
    %v1246 = vadd.f32 %v1245, %v865
    %v1247 = vadd.f32 %v1246, %v871
    %v1248 = vadd.f32 %v1247, %v877
    %v1249 = vadd.f32 %v1248, %v883
    %v1250 = vadd.f32 %v1249, %v889
    %v1251 = vadd.f32 %v1250, %v895
    %v1252 = vadd.f32 %v1251, %v901
    %v1253 = vadd.f32 %v1252, %v907
    %v1254 = vadd.f32 %v1253, %v913
    %v1255 = vrot.slane %v1254, 4
    %v1256 = vadd.f32 %v1254, %v1255
    %v1257 = vrot.slane %v1256, 2
    %v1258 = vadd.f32 %v1256, %v1257
    %v1259 = vrot.slane %v1258, 1
    %v1260 = vadd.f32 %v1258, %v1259
    %vm1265 = vcmask 1041409
    %v1266 = vsel %vm1265, %v1223, %v1149
    %v1267 = vsel %vm1265, %v1260, %v1186
    %1270 = vmatprep.subr.mxu0 0.0
    %1271 = vmatpush1.msra.mxu0 %v1096
    %1272 = vmatprep.subr.mxu0 0.0
    %1273 = vmatpush1.msra.mxu0 %v1095
    %1274 = vmatprep.subr.mxu0 0.0
    %1275 = vmatpush1.msra.mxu0 %v1094
    %1276 = vmatprep.subr.mxu0 0.0
    %1277 = vmatpush1.msra.mxu0 %v1093
    %1278 = vmatprep.subr.mxu0 0.0
    %1279 = vmatpush1.msra.mxu0 %v1092
    %1280 = vmatprep.subr.mxu0 0.0
    %1281 = vmatpush1.msra.mxu0 %v1091
    %1282 = vmatprep.subr.mxu0 0.0
    %1283 = vmatpush1.msra.mxu0 %v1090
    %1284 = vmatprep.subr.mxu0 0.0
    %1285 = vmatpush1.msra.mxu0 %v1089
    %1286 = vmatprep.subr.mxu0 0.0
    %1287 = vmatpush1.msra.mxu0 %v1088
    %1288 = vmatprep.subr.mxu0 0.0
    %1289 = vmatpush1.msra.mxu0 %v1087
    %1290 = vmatprep.subr.mxu0 0.0
    %1291 = vmatpush1.msra.mxu0 %v1086
    %1292 = vmatprep.subr.mxu0 0.0
    %1293 = vmatpush1.msra.mxu0 %v1085
    %1294 = vmatprep.subr.mxu0 0.0
    %1295 = vmatpush1.msra.mxu0 %v1084
    %1296 = vmatprep.subr.mxu0 0.0
    %1297 = vmatpush1.msra.mxu0 %v1083
    %1298 = vmatprep.subr.mxu0 0.0
    %1299 = vmatpush1.msra.mxu0 %v1082
    %1300 = vmatprep.subr.mxu0 0.0
    %1301 = vmatpush1.msra.mxu0 %v1081
    %1302 = vmatprep.subr.mxu0 0.0
    %1303 = vmatpush2.msra.mxu0 %v1112
    %1304 = vmatprep.subr.mxu0 0.0
    %1305 = vmatpush2.msra.mxu0 %v1111
    %1306 = vmatprep.subr.mxu0 0.0
    %1307 = vmatpush2.msra.mxu0 %v1110
    %1308 = vmatprep.subr.mxu0 0.0
    %1309 = vmatpush2.msra.mxu0 %v1109
    %1310 = vmatprep.subr.mxu0 0.0
    %1311 = vmatpush2.msra.mxu0 %v1108
    %1312 = vmatprep.subr.mxu0 0.0
    %1313 = vmatpush2.msra.mxu0 %v1107
    %1314 = vmatprep.subr.mxu0 0.0
    %1315 = vmatpush2.msra.mxu0 %v1106
    %1316 = vmatprep.subr.mxu0 0.0
    %1317 = vmatpush2.msra.mxu0 %v1105
    %1318 = vmatprep.subr.mxu0 0.0
    %1319 = vmatpush2.msra.mxu0 %v1104
    %1320 = vmatprep.subr.mxu0 0.0
    %1321 = vmatpush2.msra.mxu0 %v1103
    %1322 = vmatprep.subr.mxu0 0.0
    %1323 = vmatpush2.msra.mxu0 %v1102
    %1324 = vmatprep.subr.mxu0 0.0
    %1325 = vmatpush2.msra.mxu0 %v1101
    %1326 = vmatprep.subr.mxu0 0.0
    %1327 = vmatpush2.msra.mxu0 %v1100
    %1328 = vmatprep.subr.mxu0 0.0
    %1329 = vmatpush2.msra.mxu0 %v1099
    %1330 = vmatprep.subr.mxu0 0.0
    %1331 = vmatpush2.msra.mxu0 %v1098
    %1332 = vmatprep.subr.mxu0 0.0
    %1333 = vmatpush2.msra.mxu0 %v1097
    %1334 = vmatprep.mubr.f32.mxu0 %v1267
    %1335 = vmatmul.mubr.f32.gmra.mxu0 %v1266
    %v1336 = vpop.f32.mrf.mxu0
    %v1337 = vadd.f32 0.0, %v1336
    %v1338 = vpop.f32.mrf.mxu0
    %1339 = vdwg.mxu0
    %v1340 = vmul.f32 %v1337, 0.00048828125
    %vm1341 = vcmask 261120
    %v1343 = vsel %vm1341, %v1340, 0
    %v1346 = vsel %vm1341, %v1081, 0
    %v1349 = vsel %vm1341, %v1082, 0
    %v1352 = vsel %vm1341, %v1083, 0
    %v1355 = vsel %vm1341, %v1084, 0
    %v1358 = vsel %vm1341, %v1085, 0
    %v1361 = vsel %vm1341, %v1086, 0
    %v1364 = vsel %vm1341, %v1087, 0
    %v1367 = vsel %vm1341, %v1088, 0
    %v1370 = vsel %vm1341, %v1089, 0
    %v1373 = vsel %vm1341, %v1090, 0
    %v1376 = vsel %vm1341, %v1091, 0
    %v1379 = vsel %vm1341, %v1092, 0
    %v1382 = vsel %vm1341, %v1093, 0
    %v1385 = vsel %vm1341, %v1094, 0
    %v1388 = vsel %vm1341, %v1095, 0
    %v1391 = vsel %vm1341, %v1096, 0
    %v1394 = vsel %vm1341, %v1097, 0
    %v1397 = vsel %vm1341, %v1098, 0
    %v1400 = vsel %vm1341, %v1099, 0
    %v1403 = vsel %vm1341, %v1100, 0
    %v1406 = vsel %vm1341, %v1101, 0
    %v1409 = vsel %vm1341, %v1102, 0
    %v1412 = vsel %vm1341, %v1103, 0
    %v1415 = vsel %vm1341, %v1104, 0
    %v1418 = vsel %vm1341, %v1105, 0
    %v1421 = vsel %vm1341, %v1106, 0
    %v1424 = vsel %vm1341, %v1107, 0
    %v1427 = vsel %vm1341, %v1108, 0
    %v1430 = vsel %vm1341, %v1109, 0
    %v1433 = vsel %vm1341, %v1110, 0
    %v1436 = vsel %vm1341, %v1111, 0
    %v1439 = vsel %vm1341, %v1112, 0
    %1441 = vmatprep.subr.mxu0 0.0
    %1442 = vmatpush1.xpose.msra.mxu0 %v1391
    %1443 = vmatprep.subr.mxu0 0.0
    %1444 = vmatpush1.xpose.msra.mxu0 %v1388
    %1445 = vmatprep.subr.mxu0 0.0
    %1446 = vmatpush1.xpose.msra.mxu0 %v1385
    %1447 = vmatprep.subr.mxu0 0.0
    %1448 = vmatpush1.xpose.msra.mxu0 %v1382
    %1449 = vmatprep.subr.mxu0 0.0
    %1450 = vmatpush1.xpose.msra.mxu0 %v1379
    %1451 = vmatprep.subr.mxu0 0.0
    %1452 = vmatpush1.xpose.msra.mxu0 %v1376
    %1453 = vmatprep.subr.mxu0 0.0
    %1454 = vmatpush1.xpose.msra.mxu0 %v1373
    %1455 = vmatprep.subr.mxu0 0.0
    %1456 = vmatpush1.xpose.msra.mxu0 %v1370
    %1457 = vmatprep.subr.mxu0 0.0
    %1458 = vmatpush1.xpose.msra.mxu0 %v1367
    %1459 = vmatprep.subr.mxu0 0.0
    %1460 = vmatpush1.xpose.msra.mxu0 %v1364
    %1461 = vmatprep.subr.mxu0 0.0
    %1462 = vmatpush1.xpose.msra.mxu0 %v1361
    %1463 = vmatprep.subr.mxu0 0.0
    %1464 = vmatpush1.xpose.msra.mxu0 %v1358
    %1465 = vmatprep.subr.mxu0 0.0
    %1466 = vmatpush1.xpose.msra.mxu0 %v1355
    %1467 = vmatprep.subr.mxu0 0.0
    %1468 = vmatpush1.xpose.msra.mxu0 %v1352
    %1469 = vmatprep.subr.mxu0 0.0
    %1470 = vmatpush1.xpose.msra.mxu0 %v1349
    %1471 = vmatprep.subr.mxu0 0.0
    %1472 = vmatpush1.xpose.msra.mxu0 %v1346
    %1473 = vmatprep.subr.mxu0 0.0
    %1474 = vmatpush2.xpose.msra.mxu0 %v1439
    %1475 = vmatprep.subr.mxu0 0.0
    %1476 = vmatpush2.xpose.msra.mxu0 %v1436
    %1477 = vmatprep.subr.mxu0 0.0
    %1478 = vmatpush2.xpose.msra.mxu0 %v1433
    %1479 = vmatprep.subr.mxu0 0.0
    %1480 = vmatpush2.xpose.msra.mxu0 %v1430
    %1481 = vmatprep.subr.mxu0 0.0
    %1482 = vmatpush2.xpose.msra.mxu0 %v1427
    %1483 = vmatprep.subr.mxu0 0.0
    %1484 = vmatpush2.xpose.msra.mxu0 %v1424
    %1485 = vmatprep.subr.mxu0 0.0
    %1486 = vmatpush2.xpose.msra.mxu0 %v1421
    %1487 = vmatprep.subr.mxu0 0.0
    %1488 = vmatpush2.xpose.msra.mxu0 %v1418
    %1489 = vmatprep.subr.mxu0 0.0
    %1490 = vmatpush2.xpose.msra.mxu0 %v1415
    %1491 = vmatprep.subr.mxu0 0.0
    %1492 = vmatpush2.xpose.msra.mxu0 %v1412
    %1493 = vmatprep.subr.mxu0 0.0
    %1494 = vmatpush2.xpose.msra.mxu0 %v1409
    %1495 = vmatprep.subr.mxu0 0.0
    %1496 = vmatpush2.xpose.msra.mxu0 %v1406
    %1497 = vmatprep.subr.mxu0 0.0
    %1498 = vmatpush2.xpose.msra.mxu0 %v1403
    %1499 = vmatprep.subr.mxu0 0.0
    %1500 = vmatpush2.xpose.msra.mxu0 %v1400
    %1501 = vmatprep.subr.mxu0 0.0
    %1502 = vmatpush2.xpose.msra.mxu0 %v1397
    %1503 = vmatprep.subr.mxu0 0.0
    %1504 = vmatpush2.xpose.msra.mxu0 %v1394
    %1505 = vmatprep.mubr.f32.mxu0 0.0
    %1506 = vmatmul.mubr.f32.gmra.mxu0 %v1343
    %v1507 = vpop.f32.mrf.mxu0
    %v1508 = vadd.f32 0.0, %v1507
    %v1509 = vpop.f32.mrf.mxu0
    %v1510 = vadd.f32 0.0, %v1509
    %1511 = vdwg.mxu0
    %v1514 = vcombine.low %v1508, %v1510
    %v1516 = vunpack.c.l.s4 1966171168
    %v1517 = vunpack.c.0.s8 %v1516
    %v1518 = vlaneseq
    %v1519 = vshrl.u32 %v1518, 7
    %v1520 = vsub.s32 %v1517, %v1519
    %v1521 = vrot.slane %v1514, %v1520
    %v1522 = vcombine.high %v1521, %v1521
    %v1524 = vunpack.c.l.s4 1966171168
    %v1525 = vunpack.c.0.s8 %v1524
    %v1526 = vlaneseq
    %v1527 = vshrl.u32 %v1526, 7
    %v1528 = vsub.s32 %v1525, %v1527
    %v1529 = vrot.slane %v1521, %v1528
    %v1531 = vunpack.c.l.s4 1966171168
    %v1532 = vunpack.c.0.s8 %v1531
    %v1533 = vlaneseq
    %v1534 = vshrl.u32 %v1533, 7
    %v1535 = vsub.s32 %v1532, %v1534
    %v1536 = vrot.slane %v1522, %v1535
    %v1537 = vlaneseq
    %v1538 = vshrl.u32 %v1537, 7
    %v1539 = vsub.s32 0, %v1538
    %v1540 = vrot.slane %v1529, %v1539
    %v1541 = vlaneseq
    %v1542 = vshrl.u32 %v1541, 7
    %v1543 = vsub.s32 1, %v1542
    %v1544 = vrot.slane %v1529, %v1543
    %v1545 = vlaneseq
    %v1546 = vshrl.u32 %v1545, 7
    %v1547 = vsub.s32 0, %v1546
    %v1548 = vrot.slane %v1536, %v1547
    %v1549 = vlaneseq
    %v1550 = vshrl.u32 %v1549, 7
    %v1551 = vsub.s32 1, %v1550
    %v1552 = vrot.slane %v1536, %v1551
    %v1557 = vsub.f32 %v533, %v1540
    %v1558 = vsub.f32 %v535, %v1544
    %v1559 = vsub.f32 %v539, %v1540
    %v1560 = vsub.f32 %v541, %v1544
    %v1561 = vsub.f32 %v545, %v1540
    %v1562 = vsub.f32 %v547, %v1544
    %v1563 = vsub.f32 %v551, %v1540
    %v1564 = vsub.f32 %v553, %v1544
    %v1565 = vsub.f32 %v557, %v1540
    %v1566 = vsub.f32 %v559, %v1544
    %v1567 = vsub.f32 %v563, %v1540
    %v1568 = vsub.f32 %v565, %v1544
    %v1569 = vsub.f32 %v569, %v1540
    %v1570 = vsub.f32 %v571, %v1544
    %v1571 = vsub.f32 %v575, %v1540
    %v1572 = vsub.f32 %v577, %v1544
    %v1573 = vsub.f32 %v581, %v1540
    %v1574 = vsub.f32 %v583, %v1544
    %v1575 = vsub.f32 %v587, %v1540
    %v1576 = vsub.f32 %v589, %v1544
    %v1577 = vsub.f32 %v593, %v1540
    %v1578 = vsub.f32 %v595, %v1544
    %v1579 = vsub.f32 %v599, %v1540
    %v1580 = vsub.f32 %v601, %v1544
    %v1581 = vsub.f32 %v605, %v1540
    %v1582 = vsub.f32 %v607, %v1544
    %v1583 = vsub.f32 %v611, %v1540
    %v1584 = vsub.f32 %v613, %v1544
    %v1585 = vsub.f32 %v617, %v1540
    %v1586 = vsub.f32 %v619, %v1544
    %v1587 = vsub.f32 %v623, %v1540
    %v1588 = vsub.f32 %v625, %v1544
    %v1589 = vsub.f32 %v629, %v1540
    %v1590 = vsub.f32 %v631, %v1544
    %v1591 = vsub.f32 %v635, %v1540
    %v1592 = vsub.f32 %v637, %v1544
    %v1593 = vsub.f32 %v641, %v1540
    %v1594 = vsub.f32 %v643, %v1544
    %v1595 = vsub.f32 %v647, %v1540
    %v1596 = vsub.f32 %v649, %v1544
    %v1597 = vsub.f32 %v653, %v1540
    %v1598 = vsub.f32 %v655, %v1544
    %v1599 = vsub.f32 %v659, %v1540
    %v1600 = vsub.f32 %v661, %v1544
    %v1601 = vsub.f32 %v665, %v1540
    %v1602 = vsub.f32 %v667, %v1544
    %v1603 = vsub.f32 %v671, %v1540
    %v1604 = vsub.f32 %v673, %v1544
    %v1605 = vsub.f32 %v677, %v1540
    %v1606 = vsub.f32 %v679, %v1544
    %v1607 = vsub.f32 %v683, %v1540
    %v1608 = vsub.f32 %v685, %v1544
    %v1609 = vsub.f32 %v689, %v1540
    %v1610 = vsub.f32 %v691, %v1544
    %v1611 = vsub.f32 %v695, %v1540
    %v1612 = vsub.f32 %v697, %v1544
    %v1613 = vsub.f32 %v701, %v1540
    %v1614 = vsub.f32 %v703, %v1544
    %v1615 = vsub.f32 %v707, %v1540
    %v1616 = vsub.f32 %v709, %v1544
    %v1617 = vsub.f32 %v713, %v1540
    %v1618 = vsub.f32 %v715, %v1544
    %v1619 = vsub.f32 %v719, %v1540
    %v1620 = vsub.f32 %v721, %v1544
    %v1621 = vsub.f32 %v725, %v1548
    %v1622 = vsub.f32 %v727, %v1552
    %v1623 = vsub.f32 %v731, %v1548
    %v1624 = vsub.f32 %v733, %v1552
    %v1625 = vsub.f32 %v737, %v1548
    %v1626 = vsub.f32 %v739, %v1552
    %v1627 = vsub.f32 %v743, %v1548
    %v1628 = vsub.f32 %v745, %v1552
    %v1629 = vsub.f32 %v749, %v1548
    %v1630 = vsub.f32 %v751, %v1552
    %v1631 = vsub.f32 %v755, %v1548
    %v1632 = vsub.f32 %v757, %v1552
    %v1633 = vsub.f32 %v761, %v1548
    %v1634 = vsub.f32 %v763, %v1552
    %v1635 = vsub.f32 %v767, %v1548
    %v1636 = vsub.f32 %v769, %v1552
    %v1637 = vsub.f32 %v773, %v1548
    %v1638 = vsub.f32 %v775, %v1552
    %v1639 = vsub.f32 %v779, %v1548
    %v1640 = vsub.f32 %v781, %v1552
    %v1641 = vsub.f32 %v785, %v1548
    %v1642 = vsub.f32 %v787, %v1552
    %v1643 = vsub.f32 %v791, %v1548
    %v1644 = vsub.f32 %v793, %v1552
    %v1645 = vsub.f32 %v797, %v1548
    %v1646 = vsub.f32 %v799, %v1552
    %v1647 = vsub.f32 %v803, %v1548
    %v1648 = vsub.f32 %v805, %v1552
    %v1649 = vsub.f32 %v809, %v1548
    %v1650 = vsub.f32 %v811, %v1552
    %v1651 = vsub.f32 %v815, %v1548
    %v1652 = vsub.f32 %v817, %v1552
    %v1653 = vsub.f32 %v821, %v1548
    %v1654 = vsub.f32 %v823, %v1552
    %v1655 = vsub.f32 %v827, %v1548
    %v1656 = vsub.f32 %v829, %v1552
    %v1657 = vsub.f32 %v833, %v1548
    %v1658 = vsub.f32 %v835, %v1552
    %v1659 = vsub.f32 %v839, %v1548
    %v1660 = vsub.f32 %v841, %v1552
    %v1661 = vsub.f32 %v845, %v1548
    %v1662 = vsub.f32 %v847, %v1552
    %v1663 = vsub.f32 %v851, %v1548
    %v1664 = vsub.f32 %v853, %v1552
    %v1665 = vsub.f32 %v857, %v1548
    %v1666 = vsub.f32 %v859, %v1552
    %v1667 = vsub.f32 %v863, %v1548
    %v1668 = vsub.f32 %v865, %v1552
    %v1669 = vsub.f32 %v869, %v1548
    %v1670 = vsub.f32 %v871, %v1552
    %v1671 = vsub.f32 %v875, %v1548
    %v1672 = vsub.f32 %v877, %v1552
    %v1673 = vsub.f32 %v881, %v1548
    %v1674 = vsub.f32 %v883, %v1552
    %v1675 = vsub.f32 %v887, %v1548
    %v1676 = vsub.f32 %v889, %v1552
    %v1677 = vsub.f32 %v893, %v1548
    %v1678 = vsub.f32 %v895, %v1552
    %v1679 = vsub.f32 %v899, %v1548
    %v1680 = vsub.f32 %v901, %v1552
    %v1681 = vsub.f32 %v905, %v1548
    %v1682 = vsub.f32 %v907, %v1552
    %v1683 = vsub.f32 %v911, %v1548
    %v1684 = vsub.f32 %v913, %v1552
    %v1685 = vmul.f32 %v1557, %v1557
    %v1686 = vmul.f32 %v1558, %v1558
    %v1687 = vmul.f32 %v1559, %v1559
    %v1688 = vmul.f32 %v1560, %v1560
    %v1689 = vmul.f32 %v1561, %v1561
    %v1690 = vmul.f32 %v1562, %v1562
    %v1691 = vmul.f32 %v1563, %v1563
    %v1692 = vmul.f32 %v1564, %v1564
    %v1693 = vmul.f32 %v1565, %v1565
    %v1694 = vmul.f32 %v1566, %v1566
    %v1695 = vmul.f32 %v1567, %v1567
    %v1696 = vmul.f32 %v1568, %v1568
    %v1697 = vmul.f32 %v1569, %v1569
    %v1698 = vmul.f32 %v1570, %v1570
    %v1699 = vmul.f32 %v1571, %v1571
    %v1700 = vmul.f32 %v1572, %v1572
    %v1701 = vmul.f32 %v1573, %v1573
    %v1702 = vmul.f32 %v1574, %v1574
    %v1703 = vmul.f32 %v1575, %v1575
    %v1704 = vmul.f32 %v1576, %v1576
    %v1705 = vmul.f32 %v1577, %v1577
    %v1706 = vmul.f32 %v1578, %v1578
    %v1707 = vmul.f32 %v1579, %v1579
    %v1708 = vmul.f32 %v1580, %v1580
    %v1709 = vmul.f32 %v1581, %v1581
    %v1710 = vmul.f32 %v1582, %v1582
    %v1711 = vmul.f32 %v1583, %v1583
    %v1712 = vmul.f32 %v1584, %v1584
    %v1713 = vmul.f32 %v1585, %v1585
    %v1714 = vmul.f32 %v1586, %v1586
    %v1715 = vmul.f32 %v1587, %v1587
    %v1716 = vmul.f32 %v1588, %v1588
    %v1717 = vmul.f32 %v1589, %v1589
    %v1718 = vmul.f32 %v1590, %v1590
    %v1719 = vmul.f32 %v1591, %v1591
    %v1720 = vmul.f32 %v1592, %v1592
    %v1721 = vmul.f32 %v1593, %v1593
    %v1722 = vmul.f32 %v1594, %v1594
    %v1723 = vmul.f32 %v1595, %v1595
    %v1724 = vmul.f32 %v1596, %v1596
    %v1725 = vmul.f32 %v1597, %v1597
    %v1726 = vmul.f32 %v1598, %v1598
    %v1727 = vmul.f32 %v1599, %v1599
    %v1728 = vmul.f32 %v1600, %v1600
    %v1729 = vmul.f32 %v1601, %v1601
    %v1730 = vmul.f32 %v1602, %v1602
    %v1731 = vmul.f32 %v1603, %v1603
    %v1732 = vmul.f32 %v1604, %v1604
    %v1733 = vmul.f32 %v1605, %v1605
    %v1734 = vmul.f32 %v1606, %v1606
    %v1735 = vmul.f32 %v1607, %v1607
    %v1736 = vmul.f32 %v1608, %v1608
    %v1737 = vmul.f32 %v1609, %v1609
    %v1738 = vmul.f32 %v1610, %v1610
    %v1739 = vmul.f32 %v1611, %v1611
    %v1740 = vmul.f32 %v1612, %v1612
    %v1741 = vmul.f32 %v1613, %v1613
    %v1742 = vmul.f32 %v1614, %v1614
    %v1743 = vmul.f32 %v1615, %v1615
    %v1744 = vmul.f32 %v1616, %v1616
    %v1745 = vmul.f32 %v1617, %v1617
    %v1746 = vmul.f32 %v1618, %v1618
    %v1747 = vmul.f32 %v1619, %v1619
    %v1748 = vmul.f32 %v1620, %v1620
    %v1749 = vmul.f32 %v1621, %v1621
    %v1750 = vmul.f32 %v1622, %v1622
    %v1751 = vmul.f32 %v1623, %v1623
    %v1752 = vmul.f32 %v1624, %v1624
    %v1753 = vmul.f32 %v1625, %v1625
    %v1754 = vmul.f32 %v1626, %v1626
    %v1755 = vmul.f32 %v1627, %v1627
    %v1756 = vmul.f32 %v1628, %v1628
    %v1757 = vmul.f32 %v1629, %v1629
    %v1758 = vmul.f32 %v1630, %v1630
    %v1759 = vmul.f32 %v1631, %v1631
    %v1760 = vmul.f32 %v1632, %v1632
    %v1761 = vmul.f32 %v1633, %v1633
    %v1762 = vmul.f32 %v1634, %v1634
    %v1763 = vmul.f32 %v1635, %v1635
    %v1764 = vmul.f32 %v1636, %v1636
    %v1765 = vmul.f32 %v1637, %v1637
    %v1766 = vmul.f32 %v1638, %v1638
    %v1767 = vmul.f32 %v1639, %v1639
    %v1768 = vmul.f32 %v1640, %v1640
    %v1769 = vmul.f32 %v1641, %v1641
    %v1770 = vmul.f32 %v1642, %v1642
    %v1771 = vmul.f32 %v1643, %v1643
    %v1772 = vmul.f32 %v1644, %v1644
    %v1773 = vmul.f32 %v1645, %v1645
    %v1774 = vmul.f32 %v1646, %v1646
    %v1775 = vmul.f32 %v1647, %v1647
    %v1776 = vmul.f32 %v1648, %v1648
    %v1777 = vmul.f32 %v1649, %v1649
    %v1778 = vmul.f32 %v1650, %v1650
    %v1779 = vmul.f32 %v1651, %v1651
    %v1780 = vmul.f32 %v1652, %v1652
    %v1781 = vmul.f32 %v1653, %v1653
    %v1782 = vmul.f32 %v1654, %v1654
    %v1783 = vmul.f32 %v1655, %v1655
    %v1784 = vmul.f32 %v1656, %v1656
    %v1785 = vmul.f32 %v1657, %v1657
    %v1786 = vmul.f32 %v1658, %v1658
    %v1787 = vmul.f32 %v1659, %v1659
    %v1788 = vmul.f32 %v1660, %v1660
    %v1789 = vmul.f32 %v1661, %v1661
    %v1790 = vmul.f32 %v1662, %v1662
    %v1791 = vmul.f32 %v1663, %v1663
    %v1792 = vmul.f32 %v1664, %v1664
    %v1793 = vmul.f32 %v1665, %v1665
    %v1794 = vmul.f32 %v1666, %v1666
    %v1795 = vmul.f32 %v1667, %v1667
    %v1796 = vmul.f32 %v1668, %v1668
    %v1797 = vmul.f32 %v1669, %v1669
    %v1798 = vmul.f32 %v1670, %v1670
    %v1799 = vmul.f32 %v1671, %v1671
    %v1800 = vmul.f32 %v1672, %v1672
    %v1801 = vmul.f32 %v1673, %v1673
    %v1802 = vmul.f32 %v1674, %v1674
    %v1803 = vmul.f32 %v1675, %v1675
    %v1804 = vmul.f32 %v1676, %v1676
    %v1805 = vmul.f32 %v1677, %v1677
    %v1806 = vmul.f32 %v1678, %v1678
    %v1807 = vmul.f32 %v1679, %v1679
    %v1808 = vmul.f32 %v1680, %v1680
    %v1809 = vmul.f32 %v1681, %v1681
    %v1810 = vmul.f32 %v1682, %v1682
    %v1811 = vmul.f32 %v1683, %v1683
    %v1812 = vmul.f32 %v1684, %v1684
    %v1813 = vadd.f32 %v1685, %v1687
    %v1814 = vadd.f32 %v1813, %v1689
    %v1815 = vadd.f32 %v1814, %v1691
    %v1816 = vadd.f32 %v1815, %v1693
    %v1817 = vadd.f32 %v1816, %v1695
    %v1818 = vadd.f32 %v1817, %v1697
    %v1819 = vadd.f32 %v1818, %v1699
    %v1820 = vadd.f32 %v1819, %v1701
    %v1821 = vadd.f32 %v1820, %v1703
    %v1822 = vadd.f32 %v1821, %v1705
    %v1823 = vadd.f32 %v1822, %v1707
    %v1824 = vadd.f32 %v1823, %v1709
    %v1825 = vadd.f32 %v1824, %v1711
    %v1826 = vadd.f32 %v1825, %v1713
    %v1827 = vadd.f32 %v1826, %v1715
    %v1828 = vadd.f32 %v1827, %v1717
    %v1829 = vadd.f32 %v1828, %v1719
    %v1830 = vadd.f32 %v1829, %v1721
    %v1831 = vadd.f32 %v1830, %v1723
    %v1832 = vadd.f32 %v1831, %v1725
    %v1833 = vadd.f32 %v1832, %v1727
    %v1834 = vadd.f32 %v1833, %v1729
    %v1835 = vadd.f32 %v1834, %v1731
    %v1836 = vadd.f32 %v1835, %v1733
    %v1837 = vadd.f32 %v1836, %v1735
    %v1838 = vadd.f32 %v1837, %v1737
    %v1839 = vadd.f32 %v1838, %v1739
    %v1840 = vadd.f32 %v1839, %v1741
    %v1841 = vadd.f32 %v1840, %v1743
    %v1842 = vadd.f32 %v1841, %v1745
    %v1843 = vadd.f32 %v1842, %v1747
    %v1844 = vrot.slane %v1843, 4
    %v1845 = vadd.f32 %v1843, %v1844
    %v1846 = vrot.slane %v1845, 2
    %v1847 = vadd.f32 %v1845, %v1846
    %v1848 = vrot.slane %v1847, 1
    %v1849 = vadd.f32 %v1847, %v1848
    %v1850 = vadd.f32 %v1686, %v1688
    %v1851 = vadd.f32 %v1850, %v1690
    %v1852 = vadd.f32 %v1851, %v1692
    %v1853 = vadd.f32 %v1852, %v1694
    %v1854 = vadd.f32 %v1853, %v1696
    %v1855 = vadd.f32 %v1854, %v1698
    %v1856 = vadd.f32 %v1855, %v1700
    %v1857 = vadd.f32 %v1856, %v1702
    %v1858 = vadd.f32 %v1857, %v1704
    %v1859 = vadd.f32 %v1858, %v1706
    %v1860 = vadd.f32 %v1859, %v1708
    %v1861 = vadd.f32 %v1860, %v1710
    %v1862 = vadd.f32 %v1861, %v1712
    %v1863 = vadd.f32 %v1862, %v1714
    %v1864 = vadd.f32 %v1863, %v1716
    %v1865 = vadd.f32 %v1864, %v1718
    %v1866 = vadd.f32 %v1865, %v1720
    %v1867 = vadd.f32 %v1866, %v1722
    %v1868 = vadd.f32 %v1867, %v1724
    %v1869 = vadd.f32 %v1868, %v1726
    %v1870 = vadd.f32 %v1869, %v1728
    %v1871 = vadd.f32 %v1870, %v1730
    %v1872 = vadd.f32 %v1871, %v1732
    %v1873 = vadd.f32 %v1872, %v1734
    %v1874 = vadd.f32 %v1873, %v1736
    %v1875 = vadd.f32 %v1874, %v1738
    %v1876 = vadd.f32 %v1875, %v1740
    %v1877 = vadd.f32 %v1876, %v1742
    %v1878 = vadd.f32 %v1877, %v1744
    %v1879 = vadd.f32 %v1878, %v1746
    %v1880 = vadd.f32 %v1879, %v1748
    %v1881 = vrot.slane %v1880, 4
    %v1882 = vadd.f32 %v1880, %v1881
    %v1883 = vrot.slane %v1882, 2
    %v1884 = vadd.f32 %v1882, %v1883
    %v1885 = vrot.slane %v1884, 1
    %v1886 = vadd.f32 %v1884, %v1885
    %v1887 = vadd.f32 %v1749, %v1751
    %v1888 = vadd.f32 %v1887, %v1753
    %v1889 = vadd.f32 %v1888, %v1755
    %v1890 = vadd.f32 %v1889, %v1757
    %v1891 = vadd.f32 %v1890, %v1759
    %v1892 = vadd.f32 %v1891, %v1761
    %v1893 = vadd.f32 %v1892, %v1763
    %v1894 = vadd.f32 %v1893, %v1765
    %v1895 = vadd.f32 %v1894, %v1767
    %v1896 = vadd.f32 %v1895, %v1769
    %v1897 = vadd.f32 %v1896, %v1771
    %v1898 = vadd.f32 %v1897, %v1773
    %v1899 = vadd.f32 %v1898, %v1775
    %v1900 = vadd.f32 %v1899, %v1777
    %v1901 = vadd.f32 %v1900, %v1779
    %v1902 = vadd.f32 %v1901, %v1781
    %v1903 = vadd.f32 %v1902, %v1783
    %v1904 = vadd.f32 %v1903, %v1785
    %v1905 = vadd.f32 %v1904, %v1787
    %v1906 = vadd.f32 %v1905, %v1789
    %v1907 = vadd.f32 %v1906, %v1791
    %v1908 = vadd.f32 %v1907, %v1793
    %v1909 = vadd.f32 %v1908, %v1795
    %v1910 = vadd.f32 %v1909, %v1797
    %v1911 = vadd.f32 %v1910, %v1799
    %v1912 = vadd.f32 %v1911, %v1801
    %v1913 = vadd.f32 %v1912, %v1803
    %v1914 = vadd.f32 %v1913, %v1805
    %v1915 = vadd.f32 %v1914, %v1807
    %v1916 = vadd.f32 %v1915, %v1809
    %v1917 = vadd.f32 %v1916, %v1811
    %v1918 = vrot.slane %v1917, 4
    %v1919 = vadd.f32 %v1917, %v1918
    %v1920 = vrot.slane %v1919, 2
    %v1921 = vadd.f32 %v1919, %v1920
    %v1922 = vrot.slane %v1921, 1
    %v1923 = vadd.f32 %v1921, %v1922
    %v1924 = vadd.f32 %v1750, %v1752
    %v1925 = vadd.f32 %v1924, %v1754
    %v1926 = vadd.f32 %v1925, %v1756
    %v1927 = vadd.f32 %v1926, %v1758
    %v1928 = vadd.f32 %v1927, %v1760
    %v1929 = vadd.f32 %v1928, %v1762
    %v1930 = vadd.f32 %v1929, %v1764
    %v1931 = vadd.f32 %v1930, %v1766
    %v1932 = vadd.f32 %v1931, %v1768
    %v1933 = vadd.f32 %v1932, %v1770
    %v1934 = vadd.f32 %v1933, %v1772
    %v1935 = vadd.f32 %v1934, %v1774
    %v1936 = vadd.f32 %v1935, %v1776
    %v1937 = vadd.f32 %v1936, %v1778
    %v1938 = vadd.f32 %v1937, %v1780
    %v1939 = vadd.f32 %v1938, %v1782
    %v1940 = vadd.f32 %v1939, %v1784
    %v1941 = vadd.f32 %v1940, %v1786
    %v1942 = vadd.f32 %v1941, %v1788
    %v1943 = vadd.f32 %v1942, %v1790
    %v1944 = vadd.f32 %v1943, %v1792
    %v1945 = vadd.f32 %v1944, %v1794
    %v1946 = vadd.f32 %v1945, %v1796
    %v1947 = vadd.f32 %v1946, %v1798
    %v1948 = vadd.f32 %v1947, %v1800
    %v1949 = vadd.f32 %v1948, %v1802
    %v1950 = vadd.f32 %v1949, %v1804
    %v1951 = vadd.f32 %v1950, %v1806
    %v1952 = vadd.f32 %v1951, %v1808
    %v1953 = vadd.f32 %v1952, %v1810
    %v1954 = vadd.f32 %v1953, %v1812
    %v1955 = vrot.slane %v1954, 4
    %v1956 = vadd.f32 %v1954, %v1955
    %v1957 = vrot.slane %v1956, 2
    %v1958 = vadd.f32 %v1956, %v1957
    %v1959 = vrot.slane %v1958, 1
    %v1960 = vadd.f32 %v1958, %v1959
    %v1965 = vsel %vm1265, %v1923, %v1849
    %v1966 = vsel %vm1265, %v1960, %v1886
    %1969 = vmatprep.subr.mxu0 0.0
    %1970 = vmatpush1.msra.mxu0 %v1096
    %1971 = vmatprep.subr.mxu0 0.0
    %1972 = vmatpush1.msra.mxu0 %v1095
    %1973 = vmatprep.subr.mxu0 0.0
    %1974 = vmatpush1.msra.mxu0 %v1094
    %1975 = vmatprep.subr.mxu0 0.0
    %1976 = vmatpush1.msra.mxu0 %v1093
    %1977 = vmatprep.subr.mxu0 0.0
    %1978 = vmatpush1.msra.mxu0 %v1092
    %1979 = vmatprep.subr.mxu0 0.0
    %1980 = vmatpush1.msra.mxu0 %v1091
    %1981 = vmatprep.subr.mxu0 0.0
    %1982 = vmatpush1.msra.mxu0 %v1090
    %1983 = vmatprep.subr.mxu0 0.0
    %1984 = vmatpush1.msra.mxu0 %v1089
    %1985 = vmatprep.subr.mxu0 0.0
    %1986 = vmatpush1.msra.mxu0 %v1088
    %1987 = vmatprep.subr.mxu0 0.0
    %1988 = vmatpush1.msra.mxu0 %v1087
    %1989 = vmatprep.subr.mxu0 0.0
    %1990 = vmatpush1.msra.mxu0 %v1086
    %1991 = vmatprep.subr.mxu0 0.0
    %1992 = vmatpush1.msra.mxu0 %v1085
    %1993 = vmatprep.subr.mxu0 0.0
    %1994 = vmatpush1.msra.mxu0 %v1084
    %1995 = vmatprep.subr.mxu0 0.0
    %1996 = vmatpush1.msra.mxu0 %v1083
    %1997 = vmatprep.subr.mxu0 0.0
    %1998 = vmatpush1.msra.mxu0 %v1082
    %1999 = vmatprep.subr.mxu0 0.0
    %2000 = vmatpush1.msra.mxu0 %v1081
    %2001 = vmatprep.subr.mxu0 0.0
    %2002 = vmatpush2.msra.mxu0 %v1112
    %2003 = vmatprep.subr.mxu0 0.0
    %2004 = vmatpush2.msra.mxu0 %v1111
    %2005 = vmatprep.subr.mxu0 0.0
    %2006 = vmatpush2.msra.mxu0 %v1110
    %2007 = vmatprep.subr.mxu0 0.0
    %2008 = vmatpush2.msra.mxu0 %v1109
    %2009 = vmatprep.subr.mxu0 0.0
    %2010 = vmatpush2.msra.mxu0 %v1108
    %2011 = vmatprep.subr.mxu0 0.0
    %2012 = vmatpush2.msra.mxu0 %v1107
    %2013 = vmatprep.subr.mxu0 0.0
    %2014 = vmatpush2.msra.mxu0 %v1106
    %2015 = vmatprep.subr.mxu0 0.0
    %2016 = vmatpush2.msra.mxu0 %v1105
    %2017 = vmatprep.subr.mxu0 0.0
    %2018 = vmatpush2.msra.mxu0 %v1104
    %2019 = vmatprep.subr.mxu0 0.0
    %2020 = vmatpush2.msra.mxu0 %v1103
    %2021 = vmatprep.subr.mxu0 0.0
    %2022 = vmatpush2.msra.mxu0 %v1102
    %2023 = vmatprep.subr.mxu0 0.0
    %2024 = vmatpush2.msra.mxu0 %v1101
    %2025 = vmatprep.subr.mxu0 0.0
    %2026 = vmatpush2.msra.mxu0 %v1100
    %2027 = vmatprep.subr.mxu0 0.0
    %2028 = vmatpush2.msra.mxu0 %v1099
    %2029 = vmatprep.subr.mxu0 0.0
    %2030 = vmatpush2.msra.mxu0 %v1098
    %2031 = vmatprep.subr.mxu0 0.0
    %2032 = vmatpush2.msra.mxu0 %v1097
    %2033 = vmatprep.mubr.f32.mxu0 %v1966
    %2034 = vmatmul.mubr.f32.gmra.mxu0 %v1965
    %v2035 = vpop.f32.mrf.mxu0
    %v2036 = vadd.f32 0.0, %v2035
    %v2037 = vpop.f32.mrf.mxu0
    %2038 = vdwg.mxu0
    %v2039 = vmul.f32 %v2036, 0.00048828125
    %v2040 = vadd.f32 %v2039, 1e-05
    %v2041 = vrsqrt.pop %v2040
    %v2043 = vsel %vm1341, %v2041, 0
    %2045 = vmatprep.subr.mxu0 0.0
    %2046 = vmatpush1.xpose.msra.mxu0 %v1391
    %2047 = vmatprep.subr.mxu0 0.0
    %2048 = vmatpush1.xpose.msra.mxu0 %v1388
    %2049 = vmatprep.subr.mxu0 0.0
    %2050 = vmatpush1.xpose.msra.mxu0 %v1385
    %2051 = vmatprep.subr.mxu0 0.0
    %2052 = vmatpush1.xpose.msra.mxu0 %v1382
    %2053 = vmatprep.subr.mxu0 0.0
    %2054 = vmatpush1.xpose.msra.mxu0 %v1379
    %2055 = vmatprep.subr.mxu0 0.0
    %2056 = vmatpush1.xpose.msra.mxu0 %v1376
    %2057 = vmatprep.subr.mxu0 0.0
    %2058 = vmatpush1.xpose.msra.mxu0 %v1373
    %2059 = vmatprep.subr.mxu0 0.0
    %2060 = vmatpush1.xpose.msra.mxu0 %v1370
    %2061 = vmatprep.subr.mxu0 0.0
    %2062 = vmatpush1.xpose.msra.mxu0 %v1367
    %2063 = vmatprep.subr.mxu0 0.0
    %2064 = vmatpush1.xpose.msra.mxu0 %v1364
    %2065 = vmatprep.subr.mxu0 0.0
    %2066 = vmatpush1.xpose.msra.mxu0 %v1361
    %2067 = vmatprep.subr.mxu0 0.0
    %2068 = vmatpush1.xpose.msra.mxu0 %v1358
    %2069 = vmatprep.subr.mxu0 0.0
    %2070 = vmatpush1.xpose.msra.mxu0 %v1355
    %2071 = vmatprep.subr.mxu0 0.0
    %2072 = vmatpush1.xpose.msra.mxu0 %v1352
    %2073 = vmatprep.subr.mxu0 0.0
    %2074 = vmatpush1.xpose.msra.mxu0 %v1349
    %2075 = vmatprep.subr.mxu0 0.0
    %2076 = vmatpush1.xpose.msra.mxu0 %v1346
    %2077 = vmatprep.subr.mxu0 0.0
    %2078 = vmatpush2.xpose.msra.mxu0 %v1439
    %2079 = vmatprep.subr.mxu0 0.0
    %2080 = vmatpush2.xpose.msra.mxu0 %v1436
    %2081 = vmatprep.subr.mxu0 0.0
    %2082 = vmatpush2.xpose.msra.mxu0 %v1433
    %2083 = vmatprep.subr.mxu0 0.0
    %2084 = vmatpush2.xpose.msra.mxu0 %v1430
    %2085 = vmatprep.subr.mxu0 0.0
    %2086 = vmatpush2.xpose.msra.mxu0 %v1427
    %2087 = vmatprep.subr.mxu0 0.0
    %2088 = vmatpush2.xpose.msra.mxu0 %v1424
    %2089 = vmatprep.subr.mxu0 0.0
    %2090 = vmatpush2.xpose.msra.mxu0 %v1421
    %2091 = vmatprep.subr.mxu0 0.0
    %2092 = vmatpush2.xpose.msra.mxu0 %v1418
    %2093 = vmatprep.subr.mxu0 0.0
    %2094 = vmatpush2.xpose.msra.mxu0 %v1415
    %2095 = vmatprep.subr.mxu0 0.0
    %2096 = vmatpush2.xpose.msra.mxu0 %v1412
    %2097 = vmatprep.subr.mxu0 0.0
    %2098 = vmatpush2.xpose.msra.mxu0 %v1409
    %2099 = vmatprep.subr.mxu0 0.0
    %2100 = vmatpush2.xpose.msra.mxu0 %v1406
    %2101 = vmatprep.subr.mxu0 0.0
    %2102 = vmatpush2.xpose.msra.mxu0 %v1403
    %2103 = vmatprep.subr.mxu0 0.0
    %2104 = vmatpush2.xpose.msra.mxu0 %v1400
    %2105 = vmatprep.subr.mxu0 0.0
    %2106 = vmatpush2.xpose.msra.mxu0 %v1397
    %2107 = vmatprep.subr.mxu0 0.0
    %2108 = vmatpush2.xpose.msra.mxu0 %v1394
    %2109 = vmatprep.mubr.f32.mxu0 0.0
    %2110 = vmatmul.mubr.f32.gmra.mxu0 %v2043
    %v2111 = vpop.f32.mrf.mxu0
    %v2112 = vadd.f32 0.0, %v2111
    %v2113 = vpop.f32.mrf.mxu0
    %v2114 = vadd.f32 0.0, %v2113
    %2115 = vdwg.mxu0
    %v2118 = vcombine.low %v2112, %v2114
    %v2120 = vunpack.c.l.s4 1966171168
    %v2121 = vunpack.c.0.s8 %v2120
    %v2122 = vlaneseq
    %v2123 = vshrl.u32 %v2122, 7
    %v2124 = vsub.s32 %v2121, %v2123
    %v2125 = vrot.slane %v2118, %v2124
    %v2126 = vcombine.high %v2125, %v2125
    %v2128 = vunpack.c.l.s4 1966171168
    %v2129 = vunpack.c.0.s8 %v2128
    %v2130 = vlaneseq
    %v2131 = vshrl.u32 %v2130, 7
    %v2132 = vsub.s32 %v2129, %v2131
    %v2133 = vrot.slane %v2125, %v2132
    %v2135 = vunpack.c.l.s4 1966171168
    %v2136 = vunpack.c.0.s8 %v2135
    %v2137 = vlaneseq
    %v2138 = vshrl.u32 %v2137, 7
    %v2139 = vsub.s32 %v2136, %v2138
    %v2140 = vrot.slane %v2126, %v2139
    %v2141 = vlaneseq
    %v2142 = vshrl.u32 %v2141, 7
    %v2143 = vsub.s32 0, %v2142
    %v2144 = vrot.slane %v2133, %v2143
    %v2145 = vlaneseq
    %v2146 = vshrl.u32 %v2145, 7
    %v2147 = vsub.s32 1, %v2146
    %v2148 = vrot.slane %v2133, %v2147
    %v2149 = vlaneseq
    %v2150 = vshrl.u32 %v2149, 7
    %v2151 = vsub.s32 0, %v2150
    %v2152 = vrot.slane %v2140, %v2151
    %v2153 = vlaneseq
    %v2154 = vshrl.u32 %v2153, 7
    %v2155 = vsub.s32 1, %v2154
    %v2156 = vrot.slane %v2140, %v2155
    %v2161 = vmul.f32 %v1557, %v2144
    %v2162 = vmul.f32 %v1558, %v2148
    %v2163 = vmul.f32 %v1559, %v2144
    %v2164 = vmul.f32 %v1560, %v2148
    %v2165 = vmul.f32 %v1561, %v2144
    %v2166 = vmul.f32 %v1562, %v2148
    %v2167 = vmul.f32 %v1563, %v2144
    %v2168 = vmul.f32 %v1564, %v2148
    %v2169 = vmul.f32 %v1565, %v2144
    %v2170 = vmul.f32 %v1566, %v2148
    %v2171 = vmul.f32 %v1567, %v2144
    %v2172 = vmul.f32 %v1568, %v2148
    %v2173 = vmul.f32 %v1569, %v2144
    %v2174 = vmul.f32 %v1570, %v2148
    %v2175 = vmul.f32 %v1571, %v2144
    %v2176 = vmul.f32 %v1572, %v2148
    %v2177 = vmul.f32 %v1573, %v2144
    %v2178 = vmul.f32 %v1574, %v2148
    %v2179 = vmul.f32 %v1575, %v2144
    %v2180 = vmul.f32 %v1576, %v2148
    %v2181 = vmul.f32 %v1577, %v2144
    %v2182 = vmul.f32 %v1578, %v2148
    %v2183 = vmul.f32 %v1579, %v2144
    %v2184 = vmul.f32 %v1580, %v2148
    %v2185 = vmul.f32 %v1581, %v2144
    %v2186 = vmul.f32 %v1582, %v2148
    %v2187 = vmul.f32 %v1583, %v2144
    %v2188 = vmul.f32 %v1584, %v2148
    %v2189 = vmul.f32 %v1585, %v2144
    %v2190 = vmul.f32 %v1586, %v2148
    %v2191 = vmul.f32 %v1587, %v2144
    %v2192 = vmul.f32 %v1588, %v2148
    %v2193 = vmul.f32 %v1589, %v2144
    %v2194 = vmul.f32 %v1590, %v2148
    %v2195 = vmul.f32 %v1591, %v2144
    %v2196 = vmul.f32 %v1592, %v2148
    %v2197 = vmul.f32 %v1593, %v2144
    %v2198 = vmul.f32 %v1594, %v2148
    %v2199 = vmul.f32 %v1595, %v2144
    %v2200 = vmul.f32 %v1596, %v2148
    %v2201 = vmul.f32 %v1597, %v2144
    %v2202 = vmul.f32 %v1598, %v2148
    %v2203 = vmul.f32 %v1599, %v2144
    %v2204 = vmul.f32 %v1600, %v2148
    %v2205 = vmul.f32 %v1601, %v2144
    %v2206 = vmul.f32 %v1602, %v2148
    %v2207 = vmul.f32 %v1603, %v2144
    %v2208 = vmul.f32 %v1604, %v2148
    %v2209 = vmul.f32 %v1605, %v2144
    %v2210 = vmul.f32 %v1606, %v2148
    %v2211 = vmul.f32 %v1607, %v2144
    %v2212 = vmul.f32 %v1608, %v2148
    %v2213 = vmul.f32 %v1609, %v2144
    %v2214 = vmul.f32 %v1610, %v2148
    %v2215 = vmul.f32 %v1611, %v2144
    %v2216 = vmul.f32 %v1612, %v2148
    %v2217 = vmul.f32 %v1613, %v2144
    %v2218 = vmul.f32 %v1614, %v2148
    %v2219 = vmul.f32 %v1615, %v2144
    %v2220 = vmul.f32 %v1616, %v2148
    %v2221 = vmul.f32 %v1617, %v2144
    %v2222 = vmul.f32 %v1618, %v2148
    %v2223 = vmul.f32 %v1619, %v2144
    %v2224 = vmul.f32 %v1620, %v2148
    %v2225 = vmul.f32 %v1621, %v2152
    %v2226 = vmul.f32 %v1622, %v2156
    %v2227 = vmul.f32 %v1623, %v2152
    %v2228 = vmul.f32 %v1624, %v2156
    %v2229 = vmul.f32 %v1625, %v2152
    %v2230 = vmul.f32 %v1626, %v2156
    %v2231 = vmul.f32 %v1627, %v2152
    %v2232 = vmul.f32 %v1628, %v2156
    %v2233 = vmul.f32 %v1629, %v2152
    %v2234 = vmul.f32 %v1630, %v2156
    %v2235 = vmul.f32 %v1631, %v2152
    %v2236 = vmul.f32 %v1632, %v2156
    %v2237 = vmul.f32 %v1633, %v2152
    %v2238 = vmul.f32 %v1634, %v2156
    %v2239 = vmul.f32 %v1635, %v2152
    %v2240 = vmul.f32 %v1636, %v2156
    %v2241 = vmul.f32 %v1637, %v2152
    %v2242 = vmul.f32 %v1638, %v2156
    %v2243 = vmul.f32 %v1639, %v2152
    %v2244 = vmul.f32 %v1640, %v2156
    %v2245 = vmul.f32 %v1641, %v2152
    %v2246 = vmul.f32 %v1642, %v2156
    %v2247 = vmul.f32 %v1643, %v2152
    %v2248 = vmul.f32 %v1644, %v2156
    %v2249 = vmul.f32 %v1645, %v2152
    %v2250 = vmul.f32 %v1646, %v2156
    %v2251 = vmul.f32 %v1647, %v2152
    %v2252 = vmul.f32 %v1648, %v2156
    %v2253 = vmul.f32 %v1649, %v2152
    %v2254 = vmul.f32 %v1650, %v2156
    %v2255 = vmul.f32 %v1651, %v2152
    %v2256 = vmul.f32 %v1652, %v2156
    %v2257 = vmul.f32 %v1653, %v2152
    %v2258 = vmul.f32 %v1654, %v2156
    %v2259 = vmul.f32 %v1655, %v2152
    %v2260 = vmul.f32 %v1656, %v2156
    %v2261 = vmul.f32 %v1657, %v2152
    %v2262 = vmul.f32 %v1658, %v2156
    %v2263 = vmul.f32 %v1659, %v2152
    %v2264 = vmul.f32 %v1660, %v2156
    %v2265 = vmul.f32 %v1661, %v2152
    %v2266 = vmul.f32 %v1662, %v2156
    %v2267 = vmul.f32 %v1663, %v2152
    %v2268 = vmul.f32 %v1664, %v2156
    %v2269 = vmul.f32 %v1665, %v2152
    %v2270 = vmul.f32 %v1666, %v2156
    %v2271 = vmul.f32 %v1667, %v2152
    %v2272 = vmul.f32 %v1668, %v2156
    %v2273 = vmul.f32 %v1669, %v2152
    %v2274 = vmul.f32 %v1670, %v2156
    %v2275 = vmul.f32 %v1671, %v2152
    %v2276 = vmul.f32 %v1672, %v2156
    %v2277 = vmul.f32 %v1673, %v2152
    %v2278 = vmul.f32 %v1674, %v2156
    %v2279 = vmul.f32 %v1675, %v2152
    %v2280 = vmul.f32 %v1676, %v2156
    %v2281 = vmul.f32 %v1677, %v2152
    %v2282 = vmul.f32 %v1678, %v2156
    %v2283 = vmul.f32 %v1679, %v2152
    %v2284 = vmul.f32 %v1680, %v2156
    %v2285 = vmul.f32 %v1681, %v2152
    %v2286 = vmul.f32 %v1682, %v2156
    %v2287 = vmul.f32 %v1683, %v2152
    %v2288 = vmul.f32 %v1684, %v2156
    %v2289 = vld [vmem:[%s6] sm:$0x3]
    %v2291 = vlaneseq
    %v2292 = vshrl.u32 %v2291, 7
    %v2293 = vsub.s32 0, %v2292
    %v2294 = vrot.slane %v2289, %v2293
    %v2295 = vlaneseq
    %v2296 = vshrl.u32 %v2295, 7
    %v2297 = vsub.s32 1, %v2296
    %v2298 = vrot.slane %v2289, %v2297
    %v2301 = vmul.f32 %v2161, %v2294
    %v2302 = vmul.f32 %v2162, %v2298
    %v2303 = vmul.f32 %v2163, %v2294
    %v2304 = vmul.f32 %v2164, %v2298
    %v2305 = vmul.f32 %v2165, %v2294
    %v2306 = vmul.f32 %v2166, %v2298
    %v2307 = vmul.f32 %v2167, %v2294
    %v2308 = vmul.f32 %v2168, %v2298
    %v2309 = vmul.f32 %v2169, %v2294
    %v2310 = vmul.f32 %v2170, %v2298
    %v2311 = vmul.f32 %v2171, %v2294
    %v2312 = vmul.f32 %v2172, %v2298
    %v2313 = vmul.f32 %v2173, %v2294
    %v2314 = vmul.f32 %v2174, %v2298
    %v2315 = vmul.f32 %v2175, %v2294
    %v2316 = vmul.f32 %v2176, %v2298
    %v2317 = vmul.f32 %v2177, %v2294
    %v2318 = vmul.f32 %v2178, %v2298
    %v2319 = vmul.f32 %v2179, %v2294
    %v2320 = vmul.f32 %v2180, %v2298
    %v2321 = vmul.f32 %v2181, %v2294
    %v2322 = vmul.f32 %v2182, %v2298
    %v2323 = vmul.f32 %v2183, %v2294
    %v2324 = vmul.f32 %v2184, %v2298
    %v2325 = vmul.f32 %v2185, %v2294
    %v2326 = vmul.f32 %v2186, %v2298
    %v2327 = vmul.f32 %v2187, %v2294
    %v2328 = vmul.f32 %v2188, %v2298
    %v2329 = vmul.f32 %v2189, %v2294
    %v2330 = vmul.f32 %v2190, %v2298
    %v2331 = vmul.f32 %v2191, %v2294
    %v2332 = vmul.f32 %v2192, %v2298
    %v2333 = vmul.f32 %v2193, %v2294
    %v2334 = vmul.f32 %v2194, %v2298
    %v2335 = vmul.f32 %v2195, %v2294
    %v2336 = vmul.f32 %v2196, %v2298
    %v2337 = vmul.f32 %v2197, %v2294
    %v2338 = vmul.f32 %v2198, %v2298
    %v2339 = vmul.f32 %v2199, %v2294
    %v2340 = vmul.f32 %v2200, %v2298
    %v2341 = vmul.f32 %v2201, %v2294
    %v2342 = vmul.f32 %v2202, %v2298
    %v2343 = vmul.f32 %v2203, %v2294
    %v2344 = vmul.f32 %v2204, %v2298
    %v2345 = vmul.f32 %v2205, %v2294
    %v2346 = vmul.f32 %v2206, %v2298
    %v2347 = vmul.f32 %v2207, %v2294
    %v2348 = vmul.f32 %v2208, %v2298
    %v2349 = vmul.f32 %v2209, %v2294
    %v2350 = vmul.f32 %v2210, %v2298
    %v2351 = vmul.f32 %v2211, %v2294
    %v2352 = vmul.f32 %v2212, %v2298
    %v2353 = vmul.f32 %v2213, %v2294
    %v2354 = vmul.f32 %v2214, %v2298
    %v2355 = vmul.f32 %v2215, %v2294
    %v2356 = vmul.f32 %v2216, %v2298
    %v2357 = vmul.f32 %v2217, %v2294
    %v2358 = vmul.f32 %v2218, %v2298
    %v2359 = vmul.f32 %v2219, %v2294
    %v2360 = vmul.f32 %v2220, %v2298
    %v2361 = vmul.f32 %v2221, %v2294
    %v2362 = vmul.f32 %v2222, %v2298
    %v2363 = vmul.f32 %v2223, %v2294
    %v2364 = vmul.f32 %v2224, %v2298
    %v2365 = vmul.f32 %v2225, %v2294
    %v2366 = vmul.f32 %v2226, %v2298
    %v2367 = vmul.f32 %v2227, %v2294
    %v2368 = vmul.f32 %v2228, %v2298
    %v2369 = vmul.f32 %v2229, %v2294
    %v2370 = vmul.f32 %v2230, %v2298
    %v2371 = vmul.f32 %v2231, %v2294
    %v2372 = vmul.f32 %v2232, %v2298
    %v2373 = vmul.f32 %v2233, %v2294
    %v2374 = vmul.f32 %v2234, %v2298
    %v2375 = vmul.f32 %v2235, %v2294
    %v2376 = vmul.f32 %v2236, %v2298
    %v2377 = vmul.f32 %v2237, %v2294
    %v2378 = vmul.f32 %v2238, %v2298
    %v2379 = vmul.f32 %v2239, %v2294
    %v2380 = vmul.f32 %v2240, %v2298
    %v2381 = vmul.f32 %v2241, %v2294
    %v2382 = vmul.f32 %v2242, %v2298
    %v2383 = vmul.f32 %v2243, %v2294
    %v2384 = vmul.f32 %v2244, %v2298
    %v2385 = vmul.f32 %v2245, %v2294
    %v2386 = vmul.f32 %v2246, %v2298
    %v2387 = vmul.f32 %v2247, %v2294
    %v2388 = vmul.f32 %v2248, %v2298
    %v2389 = vmul.f32 %v2249, %v2294
    %v2390 = vmul.f32 %v2250, %v2298
    %v2391 = vmul.f32 %v2251, %v2294
    %v2392 = vmul.f32 %v2252, %v2298
    %v2393 = vmul.f32 %v2253, %v2294
    %v2394 = vmul.f32 %v2254, %v2298
    %v2395 = vmul.f32 %v2255, %v2294
    %v2396 = vmul.f32 %v2256, %v2298
    %v2397 = vmul.f32 %v2257, %v2294
    %v2398 = vmul.f32 %v2258, %v2298
    %v2399 = vmul.f32 %v2259, %v2294
    %v2400 = vmul.f32 %v2260, %v2298
    %v2401 = vmul.f32 %v2261, %v2294
    %v2402 = vmul.f32 %v2262, %v2298
    %v2403 = vmul.f32 %v2263, %v2294
    %v2404 = vmul.f32 %v2264, %v2298
    %v2405 = vmul.f32 %v2265, %v2294
    %v2406 = vmul.f32 %v2266, %v2298
    %v2407 = vmul.f32 %v2267, %v2294
    %v2408 = vmul.f32 %v2268, %v2298
    %v2409 = vmul.f32 %v2269, %v2294
    %v2410 = vmul.f32 %v2270, %v2298
    %v2411 = vmul.f32 %v2271, %v2294
    %v2412 = vmul.f32 %v2272, %v2298
    %v2413 = vmul.f32 %v2273, %v2294
    %v2414 = vmul.f32 %v2274, %v2298
    %v2415 = vmul.f32 %v2275, %v2294
    %v2416 = vmul.f32 %v2276, %v2298
    %v2417 = vmul.f32 %v2277, %v2294
    %v2418 = vmul.f32 %v2278, %v2298
    %v2419 = vmul.f32 %v2279, %v2294
    %v2420 = vmul.f32 %v2280, %v2298
    %v2421 = vmul.f32 %v2281, %v2294
    %v2422 = vmul.f32 %v2282, %v2298
    %v2423 = vmul.f32 %v2283, %v2294
    %v2424 = vmul.f32 %v2284, %v2298
    %v2425 = vmul.f32 %v2285, %v2294
    %v2426 = vmul.f32 %v2286, %v2298
    %v2427 = vmul.f32 %v2287, %v2294
    %v2428 = vmul.f32 %v2288, %v2298
    %v2429 = vld [vmem:[%s7] sm:$0x3]
    %v2431 = vlaneseq
    %v2432 = vshrl.u32 %v2431, 7
    %v2433 = vsub.s32 0, %v2432
    %v2434 = vrot.slane %v2429, %v2433
    %v2435 = vlaneseq
    %v2436 = vshrl.u32 %v2435, 7
    %v2437 = vsub.s32 1, %v2436
    %v2438 = vrot.slane %v2429, %v2437
    %v2441 = vadd.f32 %v2301, %v2434
    %v2442 = vadd.f32 %v2302, %v2438
    %v2443 = vadd.f32 %v2303, %v2434
    %v2444 = vadd.f32 %v2304, %v2438
    %v2445 = vadd.f32 %v2305, %v2434
    %v2446 = vadd.f32 %v2306, %v2438
    %v2447 = vadd.f32 %v2307, %v2434
    %v2448 = vadd.f32 %v2308, %v2438
    %v2449 = vadd.f32 %v2309, %v2434
    %v2450 = vadd.f32 %v2310, %v2438
    %v2451 = vadd.f32 %v2311, %v2434
    %v2452 = vadd.f32 %v2312, %v2438
    %v2453 = vadd.f32 %v2313, %v2434
    %v2454 = vadd.f32 %v2314, %v2438
    %v2455 = vadd.f32 %v2315, %v2434
    %v2456 = vadd.f32 %v2316, %v2438
    %v2457 = vadd.f32 %v2317, %v2434
    %v2458 = vadd.f32 %v2318, %v2438
    %v2459 = vadd.f32 %v2319, %v2434
    %v2460 = vadd.f32 %v2320, %v2438
    %v2461 = vadd.f32 %v2321, %v2434
    %v2462 = vadd.f32 %v2322, %v2438
    %v2463 = vadd.f32 %v2323, %v2434
    %v2464 = vadd.f32 %v2324, %v2438
    %v2465 = vadd.f32 %v2325, %v2434
    %v2466 = vadd.f32 %v2326, %v2438
    %v2467 = vadd.f32 %v2327, %v2434
    %v2468 = vadd.f32 %v2328, %v2438
    %v2469 = vadd.f32 %v2329, %v2434
    %v2470 = vadd.f32 %v2330, %v2438
    %v2471 = vadd.f32 %v2331, %v2434
    %v2472 = vadd.f32 %v2332, %v2438
    %v2473 = vadd.f32 %v2333, %v2434
    %v2474 = vadd.f32 %v2334, %v2438
    %v2475 = vadd.f32 %v2335, %v2434
    %v2476 = vadd.f32 %v2336, %v2438
    %v2477 = vadd.f32 %v2337, %v2434
    %v2478 = vadd.f32 %v2338, %v2438
    %v2479 = vadd.f32 %v2339, %v2434
    %v2480 = vadd.f32 %v2340, %v2438
    %v2481 = vadd.f32 %v2341, %v2434
    %v2482 = vadd.f32 %v2342, %v2438
    %v2483 = vadd.f32 %v2343, %v2434
    %v2484 = vadd.f32 %v2344, %v2438
    %v2485 = vadd.f32 %v2345, %v2434
    %v2486 = vadd.f32 %v2346, %v2438
    %v2487 = vadd.f32 %v2347, %v2434
    %v2488 = vadd.f32 %v2348, %v2438
    %v2489 = vadd.f32 %v2349, %v2434
    %v2490 = vadd.f32 %v2350, %v2438
    %v2491 = vadd.f32 %v2351, %v2434
    %v2492 = vadd.f32 %v2352, %v2438
    %v2493 = vadd.f32 %v2353, %v2434
    %v2494 = vadd.f32 %v2354, %v2438
    %v2495 = vadd.f32 %v2355, %v2434
    %v2496 = vadd.f32 %v2356, %v2438
    %v2497 = vadd.f32 %v2357, %v2434
    %v2498 = vadd.f32 %v2358, %v2438
    %v2499 = vadd.f32 %v2359, %v2434
    %v2500 = vadd.f32 %v2360, %v2438
    %v2501 = vadd.f32 %v2361, %v2434
    %v2502 = vadd.f32 %v2362, %v2438
    %v2503 = vadd.f32 %v2363, %v2434
    %v2504 = vadd.f32 %v2364, %v2438
    %v2505 = vadd.f32 %v2365, %v2434
    %v2506 = vadd.f32 %v2366, %v2438
    %v2507 = vadd.f32 %v2367, %v2434
    %v2508 = vadd.f32 %v2368, %v2438
    %v2509 = vadd.f32 %v2369, %v2434
    %v2510 = vadd.f32 %v2370, %v2438
    %v2511 = vadd.f32 %v2371, %v2434
    %v2512 = vadd.f32 %v2372, %v2438
    %v2513 = vadd.f32 %v2373, %v2434
    %v2514 = vadd.f32 %v2374, %v2438
    %v2515 = vadd.f32 %v2375, %v2434
    %v2516 = vadd.f32 %v2376, %v2438
    %v2517 = vadd.f32 %v2377, %v2434
    %v2518 = vadd.f32 %v2378, %v2438
    %v2519 = vadd.f32 %v2379, %v2434
    %v2520 = vadd.f32 %v2380, %v2438
    %v2521 = vadd.f32 %v2381, %v2434
    %v2522 = vadd.f32 %v2382, %v2438
    %v2523 = vadd.f32 %v2383, %v2434
    %v2524 = vadd.f32 %v2384, %v2438
    %v2525 = vadd.f32 %v2385, %v2434
    %v2526 = vadd.f32 %v2386, %v2438
    %v2527 = vadd.f32 %v2387, %v2434
    %v2528 = vadd.f32 %v2388, %v2438
    %v2529 = vadd.f32 %v2389, %v2434
    %v2530 = vadd.f32 %v2390, %v2438
    %v2531 = vadd.f32 %v2391, %v2434
    %v2532 = vadd.f32 %v2392, %v2438
    %v2533 = vadd.f32 %v2393, %v2434
    %v2534 = vadd.f32 %v2394, %v2438
    %v2535 = vadd.f32 %v2395, %v2434
    %v2536 = vadd.f32 %v2396, %v2438
    %v2537 = vadd.f32 %v2397, %v2434
    %v2538 = vadd.f32 %v2398, %v2438
    %v2539 = vadd.f32 %v2399, %v2434
    %v2540 = vadd.f32 %v2400, %v2438
    %v2541 = vadd.f32 %v2401, %v2434
    %v2542 = vadd.f32 %v2402, %v2438
    %v2543 = vadd.f32 %v2403, %v2434
    %v2544 = vadd.f32 %v2404, %v2438
    %v2545 = vadd.f32 %v2405, %v2434
    %v2546 = vadd.f32 %v2406, %v2438
    %v2547 = vadd.f32 %v2407, %v2434
    %v2548 = vadd.f32 %v2408, %v2438
    %v2549 = vadd.f32 %v2409, %v2434
    %v2550 = vadd.f32 %v2410, %v2438
    %v2551 = vadd.f32 %v2411, %v2434
    %v2552 = vadd.f32 %v2412, %v2438
    %v2553 = vadd.f32 %v2413, %v2434
    %v2554 = vadd.f32 %v2414, %v2438
    %v2555 = vadd.f32 %v2415, %v2434
    %v2556 = vadd.f32 %v2416, %v2438
    %v2557 = vadd.f32 %v2417, %v2434
    %v2558 = vadd.f32 %v2418, %v2438
    %v2559 = vadd.f32 %v2419, %v2434
    %v2560 = vadd.f32 %v2420, %v2438
    %v2561 = vadd.f32 %v2421, %v2434
    %v2562 = vadd.f32 %v2422, %v2438
    %v2563 = vadd.f32 %v2423, %v2434
    %v2564 = vadd.f32 %v2424, %v2438
    %v2565 = vadd.f32 %v2425, %v2434
    %v2566 = vadd.f32 %v2426, %v2438
    %v2567 = vadd.f32 %v2427, %v2434
    %v2568 = vadd.f32 %v2428, %v2438
    %2569 = vst [vmem:[#allocation4] sm:$0xff] %v2441
    %2570 = vst [vmem:[#allocation4 + $0x8] sm:$0xff] %v2442
    %2571 = vst [vmem:[#allocation4 + $0x10] sm:$0xff] %v2443
    %2572 = vst [vmem:[#allocation4 + $0x18] sm:$0xff] %v2444
    %2573 = vst [vmem:[#allocation4 + $0x20] sm:$0xff] %v2445
    %2574 = vst [vmem:[#allocation4 + $0x28] sm:$0xff] %v2446
    %2575 = vst [vmem:[#allocation4 + $0x30] sm:$0xff] %v2447
    %2576 = vst [vmem:[#allocation4 + $0x38] sm:$0xff] %v2448
    %2577 = vst [vmem:[#allocation4 + $0x40] sm:$0xff] %v2449
    %2578 = vst [vmem:[#allocation4 + $0x48] sm:$0xff] %v2450
    %2579 = vst [vmem:[#allocation4 + $0x50] sm:$0xff] %v2451
    %2580 = vst [vmem:[#allocation4 + $0x58] sm:$0xff] %v2452
    %2581 = vst [vmem:[#allocation4 + $0x60] sm:$0xff] %v2453
    %2582 = vst [vmem:[#allocation4 + $0x68] sm:$0xff] %v2454
    %2583 = vst [vmem:[#allocation4 + $0x70] sm:$0xff] %v2455
    %2584 = vst [vmem:[#allocation4 + $0x78] sm:$0xff] %v2456
    %2585 = vst [vmem:[#allocation4 + $0x80] sm:$0xff] %v2457
    %2586 = vst [vmem:[#allocation4 + $0x88] sm:$0xff] %v2458
    %2587 = vst [vmem:[#allocation4 + $0x90] sm:$0xff] %v2459
    %2588 = vst [vmem:[#allocation4 + $0x98] sm:$0xff] %v2460
    %2589 = vst [vmem:[#allocation4 + $0xa0] sm:$0xff] %v2461
    %2590 = vst [vmem:[#allocation4 + $0xa8] sm:$0xff] %v2462
    %2591 = vst [vmem:[#allocation4 + $0xb0] sm:$0xff] %v2463
    %2592 = vst [vmem:[#allocation4 + $0xb8] sm:$0xff] %v2464
    %2593 = vst [vmem:[#allocation4 + $0xc0] sm:$0xff] %v2465
    %2594 = vst [vmem:[#allocation4 + $0xc8] sm:$0xff] %v2466
    %2595 = vst [vmem:[#allocation4 + $0xd0] sm:$0xff] %v2467
    %2596 = vst [vmem:[#allocation4 + $0xd8] sm:$0xff] %v2468
    %2597 = vst [vmem:[#allocation4 + $0xe0] sm:$0xff] %v2469
    %2598 = vst [vmem:[#allocation4 + $0xe8] sm:$0xff] %v2470
    %2599 = vst [vmem:[#allocation4 + $0xf0] sm:$0xff] %v2471
    %2600 = vst [vmem:[#allocation4 + $0xf8] sm:$0xff] %v2472
    %2601 = vst [vmem:[#allocation4 + $0x100] sm:$0xff] %v2473
    %2602 = vst [vmem:[#allocation4 + $0x108] sm:$0xff] %v2474
    %2603 = vst [vmem:[#allocation4 + $0x110] sm:$0xff] %v2475
    %2604 = vst [vmem:[#allocation4 + $0x118] sm:$0xff] %v2476
    %2605 = vst [vmem:[#allocation4 + $0x120] sm:$0xff] %v2477
    %2606 = vst [vmem:[#allocation4 + $0x128] sm:$0xff] %v2478
    %2607 = vst [vmem:[#allocation4 + $0x130] sm:$0xff] %v2479
    %2608 = vst [vmem:[#allocation4 + $0x138] sm:$0xff] %v2480
    %2609 = vst [vmem:[#allocation4 + $0x140] sm:$0xff] %v2481
    %2610 = vst [vmem:[#allocation4 + $0x148] sm:$0xff] %v2482
    %2611 = vst [vmem:[#allocation4 + $0x150] sm:$0xff] %v2483
    %2612 = vst [vmem:[#allocation4 + $0x158] sm:$0xff] %v2484
    %2613 = vst [vmem:[#allocation4 + $0x160] sm:$0xff] %v2485
    %2614 = vst [vmem:[#allocation4 + $0x168] sm:$0xff] %v2486
    %2615 = vst [vmem:[#allocation4 + $0x170] sm:$0xff] %v2487
    %2616 = vst [vmem:[#allocation4 + $0x178] sm:$0xff] %v2488
    %2617 = vst [vmem:[#allocation4 + $0x180] sm:$0xff] %v2489
    %2618 = vst [vmem:[#allocation4 + $0x188] sm:$0xff] %v2490
    %2619 = vst [vmem:[#allocation4 + $0x190] sm:$0xff] %v2491
    %2620 = vst [vmem:[#allocation4 + $0x198] sm:$0xff] %v2492
    %2621 = vst [vmem:[#allocation4 + $0x1a0] sm:$0xff] %v2493
    %2622 = vst [vmem:[#allocation4 + $0x1a8] sm:$0xff] %v2494
    %2623 = vst [vmem:[#allocation4 + $0x1b0] sm:$0xff] %v2495
    %2624 = vst [vmem:[#allocation4 + $0x1b8] sm:$0xff] %v2496
    %2625 = vst [vmem:[#allocation4 + $0x1c0] sm:$0xff] %v2497
    %2626 = vst [vmem:[#allocation4 + $0x1c8] sm:$0xff] %v2498
    %2627 = vst [vmem:[#allocation4 + $0x1d0] sm:$0xff] %v2499
    %2628 = vst [vmem:[#allocation4 + $0x1d8] sm:$0xff] %v2500
    %2629 = vst [vmem:[#allocation4 + $0x1e0] sm:$0xff] %v2501
    %2630 = vst [vmem:[#allocation4 + $0x1e8] sm:$0xff] %v2502
    %2631 = vst [vmem:[#allocation4 + $0x1f0] sm:$0xff] %v2503
    %2632 = vst [vmem:[#allocation4 + $0x1f8] sm:$0xff] %v2504
    %2633 = vst [vmem:[#allocation4 + $0x200] sm:$0xff] %v2505
    %2634 = vst [vmem:[#allocation4 + $0x208] sm:$0xff] %v2506
    %2635 = vst [vmem:[#allocation4 + $0x210] sm:$0xff] %v2507
    %2636 = vst [vmem:[#allocation4 + $0x218] sm:$0xff] %v2508
    %2637 = vst [vmem:[#allocation4 + $0x220] sm:$0xff] %v2509
    %2638 = vst [vmem:[#allocation4 + $0x228] sm:$0xff] %v2510
    %2639 = vst [vmem:[#allocation4 + $0x230] sm:$0xff] %v2511
    %2640 = vst [vmem:[#allocation4 + $0x238] sm:$0xff] %v2512
    %2641 = vst [vmem:[#allocation4 + $0x240] sm:$0xff] %v2513
    %2642 = vst [vmem:[#allocation4 + $0x248] sm:$0xff] %v2514
    %2643 = vst [vmem:[#allocation4 + $0x250] sm:$0xff] %v2515
    %2644 = vst [vmem:[#allocation4 + $0x258] sm:$0xff] %v2516
    %2645 = vst [vmem:[#allocation4 + $0x260] sm:$0xff] %v2517
    %2646 = vst [vmem:[#allocation4 + $0x268] sm:$0xff] %v2518
    %2647 = vst [vmem:[#allocation4 + $0x270] sm:$0xff] %v2519
    %2648 = vst [vmem:[#allocation4 + $0x278] sm:$0xff] %v2520
    %2649 = vst [vmem:[#allocation4 + $0x280] sm:$0xff] %v2521
    %2650 = vst [vmem:[#allocation4 + $0x288] sm:$0xff] %v2522
    %2651 = vst [vmem:[#allocation4 + $0x290] sm:$0xff] %v2523
    %2652 = vst [vmem:[#allocation4 + $0x298] sm:$0xff] %v2524
    %2653 = vst [vmem:[#allocation4 + $0x2a0] sm:$0xff] %v2525
    %2654 = vst [vmem:[#allocation4 + $0x2a8] sm:$0xff] %v2526
    %2655 = vst [vmem:[#allocation4 + $0x2b0] sm:$0xff] %v2527
    %2656 = vst [vmem:[#allocation4 + $0x2b8] sm:$0xff] %v2528
    %2657 = vst [vmem:[#allocation4 + $0x2c0] sm:$0xff] %v2529
    %2658 = vst [vmem:[#allocation4 + $0x2c8] sm:$0xff] %v2530
    %2659 = vst [vmem:[#allocation4 + $0x2d0] sm:$0xff] %v2531
    %2660 = vst [vmem:[#allocation4 + $0x2d8] sm:$0xff] %v2532
    %2661 = vst [vmem:[#allocation4 + $0x2e0] sm:$0xff] %v2533
    %2662 = vst [vmem:[#allocation4 + $0x2e8] sm:$0xff] %v2534
    %2663 = vst [vmem:[#allocation4 + $0x2f0] sm:$0xff] %v2535
    %2664 = vst [vmem:[#allocation4 + $0x2f8] sm:$0xff] %v2536
    %2665 = vst [vmem:[#allocation4 + $0x300] sm:$0xff] %v2537
    %2666 = vst [vmem:[#allocation4 + $0x308] sm:$0xff] %v2538
    %2667 = vst [vmem:[#allocation4 + $0x310] sm:$0xff] %v2539
    %2668 = vst [vmem:[#allocation4 + $0x318] sm:$0xff] %v2540
    %2669 = vst [vmem:[#allocation4 + $0x320] sm:$0xff] %v2541
    %2670 = vst [vmem:[#allocation4 + $0x328] sm:$0xff] %v2542
    %2671 = vst [vmem:[#allocation4 + $0x330] sm:$0xff] %v2543
    %2672 = vst [vmem:[#allocation4 + $0x338] sm:$0xff] %v2544
    %2673 = vst [vmem:[#allocation4 + $0x340] sm:$0xff] %v2545
    %2674 = vst [vmem:[#allocation4 + $0x348] sm:$0xff] %v2546
    %2675 = vst [vmem:[#allocation4 + $0x350] sm:$0xff] %v2547
    %2676 = vst [vmem:[#allocation4 + $0x358] sm:$0xff] %v2548
    %2677 = vst [vmem:[#allocation4 + $0x360] sm:$0xff] %v2549
    %2678 = vst [vmem:[#allocation4 + $0x368] sm:$0xff] %v2550
    %2679 = vst [vmem:[#allocation4 + $0x370] sm:$0xff] %v2551
    %2680 = vst [vmem:[#allocation4 + $0x378] sm:$0xff] %v2552
    %2681 = vst [vmem:[#allocation4 + $0x380] sm:$0xff] %v2553
    %2682 = vst [vmem:[#allocation4 + $0x388] sm:$0xff] %v2554
    %2683 = vst [vmem:[#allocation4 + $0x390] sm:$0xff] %v2555
    %2684 = vst [vmem:[#allocation4 + $0x398] sm:$0xff] %v2556
    %2685 = vst [vmem:[#allocation4 + $0x3a0] sm:$0xff] %v2557
    %2686 = vst [vmem:[#allocation4 + $0x3a8] sm:$0xff] %v2558
    %2687 = vst [vmem:[#allocation4 + $0x3b0] sm:$0xff] %v2559
    %2688 = vst [vmem:[#allocation4 + $0x3b8] sm:$0xff] %v2560
    %2689 = vst [vmem:[#allocation4 + $0x3c0] sm:$0xff] %v2561
    %2690 = vst [vmem:[#allocation4 + $0x3c8] sm:$0xff] %v2562
    %2691 = vst [vmem:[#allocation4 + $0x3d0] sm:$0xff] %v2563
    %2692 = vst [vmem:[#allocation4 + $0x3d8] sm:$0xff] %v2564
    %2693 = vst [vmem:[#allocation4 + $0x3e0] sm:$0xff] %v2565
    %2694 = vst [vmem:[#allocation4 + $0x3e8] sm:$0xff] %v2566
    %2695 = vst [vmem:[#allocation4 + $0x3f0] sm:$0xff] %v2567
    %2696 = vst [vmem:[#allocation4 + $0x3f8] sm:$0xff] %v2568
    %v2697 = vld [vmem:[%s8] sm:$0xff]
    %v2698 = vld [vmem:[%s8 + $0x8] sm:$0xff]
    %v2699 = vld [vmem:[%s8 + $0x10] sm:$0xff]
    %v2700 = vld [vmem:[%s8 + $0x18] sm:$0xff]
    %v2701 = vld [vmem:[%s8 + $0x20] sm:$0xff]
    %v2702 = vld [vmem:[%s8 + $0x28] sm:$0xff]
    %v2703 = vld [vmem:[%s8 + $0x30] sm:$0xff]
    %v2704 = vld [vmem:[%s8 + $0x38] sm:$0xff]
    %v2705 = vld [vmem:[%s8 + $0x40] sm:$0xff]
    %v2706 = vld [vmem:[%s8 + $0x48] sm:$0xff]
    %v2707 = vld [vmem:[%s8 + $0x50] sm:$0xff]
    %v2708 = vld [vmem:[%s8 + $0x58] sm:$0xff]
    %v2709 = vld [vmem:[%s8 + $0x60] sm:$0xff]
    %v2710 = vld [vmem:[%s8 + $0x68] sm:$0xff]
    %v2711 = vld [vmem:[%s8 + $0x70] sm:$0xff]
    %v2712 = vld [vmem:[%s8 + $0x78] sm:$0xff]
    %v2713 = vpack.c.bf16 %v2699, %v2697
    %v2714 = vpack.c.bf16 %v2700, %v2698
    %v2715 = vpack.c.bf16 %v2703, %v2701
    %v2716 = vpack.c.bf16 %v2704, %v2702
    %v2717 = vpack.c.bf16 %v2707, %v2705
    %v2718 = vpack.c.bf16 %v2708, %v2706
    %v2719 = vpack.c.bf16 %v2711, %v2709
    %v2720 = vpack.c.bf16 %v2712, %v2710
    %v2721 = vld [vmem:[%s10] sm:$0xff]
    %v2722 = vld [vmem:[%s10 + $0x8] sm:$0xff]
    %v2723 = vld [vmem:[%s10 + $0x10] sm:$0xff]
    %v2724 = vld [vmem:[%s10 + $0x18] sm:$0xff]
    %v2725 = vld [vmem:[%s10 + $0x20] sm:$0xff]
    %v2726 = vld [vmem:[%s10 + $0x28] sm:$0xff]
    %v2727 = vld [vmem:[%s10 + $0x30] sm:$0xff]
    %v2728 = vld [vmem:[%s10 + $0x38] sm:$0xff]
    %v2729 = vld [vmem:[%s10 + $0x40] sm:$0xff]
    %v2730 = vld [vmem:[%s10 + $0x48] sm:$0xff]
    %v2731 = vld [vmem:[%s10 + $0x50] sm:$0xff]
    %v2732 = vld [vmem:[%s10 + $0x58] sm:$0xff]
    %v2733 = vld [vmem:[%s10 + $0x60] sm:$0xff]
    %v2734 = vld [vmem:[%s10 + $0x68] sm:$0xff]
    %v2735 = vld [vmem:[%s10 + $0x70] sm:$0xff]
    %v2736 = vld [vmem:[%s10 + $0x78] sm:$0xff]
    %v2737 = vld [vmem:[%s10 + $0x80] sm:$0xff]
    %v2738 = vld [vmem:[%s10 + $0x88] sm:$0xff]
    %v2739 = vld [vmem:[%s10 + $0x90] sm:$0xff]
    %v2740 = vld [vmem:[%s10 + $0x98] sm:$0xff]
    %v2741 = vld [vmem:[%s10 + $0xa0] sm:$0xff]
    %v2742 = vld [vmem:[%s10 + $0xa8] sm:$0xff]
    %v2743 = vld [vmem:[%s10 + $0xb0] sm:$0xff]
    %v2744 = vld [vmem:[%s10 + $0xb8] sm:$0xff]
    %v2745 = vld [vmem:[%s10 + $0xc0] sm:$0xff]
    %v2746 = vld [vmem:[%s10 + $0xc8] sm:$0xff]
    %v2747 = vld [vmem:[%s10 + $0xd0] sm:$0xff]
    %v2748 = vld [vmem:[%s10 + $0xd8] sm:$0xff]
    %v2749 = vld [vmem:[%s10 + $0xe0] sm:$0xff]
    %v2750 = vld [vmem:[%s10 + $0xe8] sm:$0xff]
    %v2751 = vld [vmem:[%s10 + $0xf0] sm:$0xff]
    %v2752 = vld [vmem:[%s10 + $0xf8] sm:$0xff]
    %v2753 = vld [vmem:[%s11] sm:$0x3]
    %v2755 = vlaneseq
    %v2756 = vshrl.u32 %v2755, 7
    %v2757 = vsub.s32 0, %v2756
    %v2758 = vrot.slane %v2753, %v2757
    %v2759 = vlaneseq
    %v2760 = vshrl.u32 %v2759, 7
    %v2761 = vsub.s32 1, %v2760
    %v2762 = vrot.slane %v2753, %v2761
    %v2797 = vunpack.c.l.b16 %v2721
    %v2798 = vunpack.c.h.b16 %v2721
    %v2799 = vunpack.c.l.b16 %v2722
    %v2800 = vunpack.c.h.b16 %v2722
    %v2801 = vunpack.c.l.b16 %v2723
    %v2802 = vunpack.c.h.b16 %v2723
    %v2803 = vunpack.c.l.b16 %v2724
    %v2804 = vunpack.c.h.b16 %v2724
    %v2805 = vunpack.c.l.b16 %v2725
    %v2806 = vunpack.c.h.b16 %v2725
    %v2807 = vunpack.c.l.b16 %v2726
    %v2808 = vunpack.c.h.b16 %v2726
    %v2809 = vunpack.c.l.b16 %v2727
    %v2810 = vunpack.c.h.b16 %v2727
    %v2811 = vunpack.c.l.b16 %v2728
    %v2812 = vunpack.c.h.b16 %v2728
    %v2813 = vunpack.c.l.b16 %v2729
    %v2814 = vunpack.c.h.b16 %v2729
    %v2815 = vunpack.c.l.b16 %v2730
    %v2816 = vunpack.c.h.b16 %v2730
    %v2817 = vunpack.c.l.b16 %v2731
    %v2818 = vunpack.c.h.b16 %v2731
    %v2819 = vunpack.c.l.b16 %v2732
    %v2820 = vunpack.c.h.b16 %v2732
    %v2821 = vunpack.c.l.b16 %v2733
    %v2822 = vunpack.c.h.b16 %v2733
    %v2823 = vunpack.c.l.b16 %v2734
    %v2824 = vunpack.c.h.b16 %v2734
    %v2825 = vunpack.c.l.b16 %v2735
    %v2826 = vunpack.c.h.b16 %v2735
    %v2827 = vunpack.c.l.b16 %v2736
    %v2828 = vunpack.c.h.b16 %v2736
    %v2829 = vunpack.c.l.b16 %v2737
    %v2830 = vunpack.c.h.b16 %v2737
    %v2831 = vunpack.c.l.b16 %v2738
    %v2832 = vunpack.c.h.b16 %v2738
    %v2833 = vunpack.c.l.b16 %v2739
    %v2834 = vunpack.c.h.b16 %v2739
    %v2835 = vunpack.c.l.b16 %v2740
    %v2836 = vunpack.c.h.b16 %v2740
    %v2837 = vunpack.c.l.b16 %v2741
    %v2838 = vunpack.c.h.b16 %v2741
    %v2839 = vunpack.c.l.b16 %v2742
    %v2840 = vunpack.c.h.b16 %v2742
    %v2841 = vunpack.c.l.b16 %v2743
    %v2842 = vunpack.c.h.b16 %v2743
    %v2843 = vunpack.c.l.b16 %v2744
    %v2844 = vunpack.c.h.b16 %v2744
    %v2845 = vunpack.c.l.b16 %v2745
    %v2846 = vunpack.c.h.b16 %v2745
    %v2847 = vunpack.c.l.b16 %v2746
    %v2848 = vunpack.c.h.b16 %v2746
    %v2849 = vunpack.c.l.b16 %v2747
    %v2850 = vunpack.c.h.b16 %v2747
    %v2851 = vunpack.c.l.b16 %v2748
    %v2852 = vunpack.c.h.b16 %v2748
    %v2853 = vunpack.c.l.b16 %v2749
    %v2854 = vunpack.c.h.b16 %v2749
    %v2855 = vunpack.c.l.b16 %v2750
    %v2856 = vunpack.c.h.b16 %v2750
    %v2857 = vunpack.c.l.b16 %v2751
    %v2858 = vunpack.c.h.b16 %v2751
    %v2859 = vunpack.c.l.b16 %v2752
    %v2860 = vunpack.c.h.b16 %v2752
    %v2861 = vpack.c.b16 %v2799, %v2797
    %v2862 = vpack.c.b16 %v2800, %v2798
    %v2863 = vpack.c.b16 %v2803, %v2801
    %v2864 = vpack.c.b16 %v2804, %v2802
    %v2865 = vpack.c.b16 %v2807, %v2805
    %v2866 = vpack.c.b16 %v2808, %v2806
    %v2867 = vpack.c.b16 %v2811, %v2809
    %v2868 = vpack.c.b16 %v2812, %v2810
    %v2869 = vpack.c.b16 %v2815, %v2813
    %v2870 = vpack.c.b16 %v2816, %v2814
    %v2871 = vpack.c.b16 %v2819, %v2817
    %v2872 = vpack.c.b16 %v2820, %v2818
    %v2873 = vpack.c.b16 %v2823, %v2821
    %v2874 = vpack.c.b16 %v2824, %v2822
    %v2875 = vpack.c.b16 %v2827, %v2825
    %v2876 = vpack.c.b16 %v2828, %v2826
    %v2877 = vpack.c.b16 %v2831, %v2829
    %v2878 = vpack.c.b16 %v2832, %v2830
    %v2879 = vpack.c.b16 %v2835, %v2833
    %v2880 = vpack.c.b16 %v2836, %v2834
    %v2881 = vpack.c.b16 %v2839, %v2837
    %v2882 = vpack.c.b16 %v2840, %v2838
    %v2883 = vpack.c.b16 %v2843, %v2841
    %v2884 = vpack.c.b16 %v2844, %v2842
    %v2885 = vpack.c.b16 %v2847, %v2845
    %v2886 = vpack.c.b16 %v2848, %v2846
    %v2887 = vpack.c.b16 %v2851, %v2849
    %v2888 = vpack.c.b16 %v2852, %v2850
    %v2889 = vpack.c.b16 %v2855, %v2853
    %v2890 = vpack.c.b16 %v2856, %v2854
    %v2891 = vpack.c.b16 %v2859, %v2857
    %v2892 = vpack.c.b16 %v2860, %v2858
    %2925 = vmatprep.subr.bf16.mxu0 %v2876
    %2926 = vmatpush1.bf16.msra.mxu0 %v2875
    %2927 = vmatprep.subr.bf16.mxu0 %v2874
    %2928 = vmatpush1.bf16.msra.mxu0 %v2873
    %2929 = vmatprep.subr.bf16.mxu0 %v2872
    %2930 = vmatpush1.bf16.msra.mxu0 %v2871
    %2931 = vmatprep.subr.bf16.mxu0 %v2870
    %2932 = vmatpush1.bf16.msra.mxu0 %v2869
    %2933 = vmatprep.subr.bf16.mxu0 %v2868
    %2934 = vmatpush1.bf16.msra.mxu0 %v2867
    %2935 = vmatprep.subr.bf16.mxu0 %v2866
    %2936 = vmatpush1.bf16.msra.mxu0 %v2865
    %2937 = vmatprep.subr.bf16.mxu0 %v2864
    %2938 = vmatpush1.bf16.msra.mxu0 %v2863
    %2939 = vmatprep.subr.bf16.mxu0 %v2862
    %2940 = vmatpush1.bf16.msra.mxu0 %v2861
    %2941 = vmatprep.subr.bf16.mxu0 %v2892
    %2942 = vmatpush2.bf16.msra.mxu0 %v2891
    %2943 = vmatprep.subr.bf16.mxu0 %v2890
    %2944 = vmatpush2.bf16.msra.mxu0 %v2889
    %2945 = vmatprep.subr.bf16.mxu0 %v2888
    %2946 = vmatpush2.bf16.msra.mxu0 %v2887
    %2947 = vmatprep.subr.bf16.mxu0 %v2886
    %2948 = vmatpush2.bf16.msra.mxu0 %v2885
    %2949 = vmatprep.subr.bf16.mxu0 %v2884
    %2950 = vmatpush2.bf16.msra.mxu0 %v2883
    %2951 = vmatprep.subr.bf16.mxu0 %v2882
    %2952 = vmatpush2.bf16.msra.mxu0 %v2881
    %2953 = vmatprep.subr.bf16.mxu0 %v2880
    %2954 = vmatpush2.bf16.msra.mxu0 %v2879
    %2955 = vmatprep.subr.bf16.mxu0 %v2878
    %2956 = vmatpush2.bf16.msra.mxu0 %v2877
    %2957 = vmatprep.mubr.bf16.mxu0 %v2714
    %2958 = vmatmul.mubr.bf16.gmra.mxu0 %v2713
    %v2959 = vpop.f32.mrf.mxu0
    %v2960 = vadd.f32 %v2758, %v2959
    %v2961 = vpop.f32.mrf.mxu0
    %v2962 = vadd.f32 %v2762, %v2961
    %v2963 = vpop.f32.mrf.mxu0
    %v2964 = vadd.f32 %v2758, %v2963
    %v2965 = vpop.f32.mrf.mxu0
    %v2966 = vadd.f32 %v2762, %v2965
    %2967 = vmatprep.mubr.bf16.mxu0 %v2716
    %2968 = vmatmul.mubr.bf16.gmra.mxu0 %v2715
    %v2969 = vpop.f32.mrf.mxu0
    %v2970 = vadd.f32 %v2758, %v2969
    %v2971 = vpop.f32.mrf.mxu0
    %v2972 = vadd.f32 %v2762, %v2971
    %v2973 = vpop.f32.mrf.mxu0
    %v2974 = vadd.f32 %v2758, %v2973
    %v2975 = vpop.f32.mrf.mxu0
    %v2976 = vadd.f32 %v2762, %v2975
    %2977 = vmatprep.mubr.bf16.mxu0 %v2718
    %2978 = vmatmul.mubr.bf16.gmra.mxu0 %v2717
    %v2979 = vpop.f32.mrf.mxu0
    %v2980 = vadd.f32 %v2758, %v2979
    %v2981 = vpop.f32.mrf.mxu0
    %v2982 = vadd.f32 %v2762, %v2981
    %v2983 = vpop.f32.mrf.mxu0
    %v2984 = vadd.f32 %v2758, %v2983
    %v2985 = vpop.f32.mrf.mxu0
    %v2986 = vadd.f32 %v2762, %v2985
    %2987 = vmatprep.mubr.bf16.mxu0 %v2720
    %2988 = vmatmul.mubr.bf16.gmra.mxu0 %v2719
    %v2989 = vpop.f32.mrf.mxu0
    %v2990 = vadd.f32 %v2758, %v2989
    %v2991 = vpop.f32.mrf.mxu0
    %v2992 = vadd.f32 %v2762, %v2991
    %v2993 = vpop.f32.mrf.mxu0
    %v2994 = vadd.f32 %v2758, %v2993
    %v2995 = vpop.f32.mrf.mxu0
    %v2996 = vadd.f32 %v2762, %v2995
    %2997 = vdwg.mxu0
    %v2998 = vmax.f32 %v2960, 0.0
    %v2999 = vmax.f32 %v2962, 0.0
    %v3000 = vmax.f32 %v2964, 0.0
    %v3001 = vmax.f32 %v2966, 0.0
    %v3002 = vmax.f32 %v2970, 0.0
    %v3003 = vmax.f32 %v2972, 0.0
    %v3004 = vmax.f32 %v2974, 0.0
    %v3005 = vmax.f32 %v2976, 0.0
    %v3006 = vmax.f32 %v2980, 0.0
    %v3007 = vmax.f32 %v2982, 0.0
    %v3008 = vmax.f32 %v2984, 0.0
    %v3009 = vmax.f32 %v2986, 0.0
    %v3010 = vmax.f32 %v2990, 0.0
    %v3011 = vmax.f32 %v2992, 0.0
    %v3012 = vmax.f32 %v2994, 0.0
    %v3013 = vmax.f32 %v2996, 0.0
    %v3014 = vpack.c.bf16 %v3000, %v2998
    %v3015 = vpack.c.bf16 %v3001, %v2999
    %v3016 = vpack.c.bf16 %v3004, %v3002
    %v3017 = vpack.c.bf16 %v3005, %v3003
    %v3018 = vpack.c.bf16 %v3008, %v3006
    %v3019 = vpack.c.bf16 %v3009, %v3007
    %v3020 = vpack.c.bf16 %v3012, %v3010
    %v3021 = vpack.c.bf16 %v3013, %v3011
    %v3022 = vld [vmem:[%s12] sm:$0xff]
    %v3023 = vld [vmem:[%s12 + $0x8] sm:$0xff]
    %v3024 = vld [vmem:[%s12 + $0x10] sm:$0xff]
    %v3025 = vld [vmem:[%s12 + $0x18] sm:$0xff]
    %v3026 = vld [vmem:[%s12 + $0x20] sm:$0xff]
    %v3027 = vld [vmem:[%s12 + $0x28] sm:$0xff]
    %v3028 = vld [vmem:[%s12 + $0x30] sm:$0xff]
    %v3029 = vld [vmem:[%s12 + $0x38] sm:$0xff]
    %v3030 = vld [vmem:[%s12 + $0x40] sm:$0xff]
    %v3031 = vld [vmem:[%s12 + $0x48] sm:$0xff]
    %v3032 = vld [vmem:[%s12 + $0x50] sm:$0xff]
    %v3033 = vld [vmem:[%s12 + $0x58] sm:$0xff]
    %v3034 = vld [vmem:[%s12 + $0x60] sm:$0xff]
    %v3035 = vld [vmem:[%s12 + $0x68] sm:$0xff]
    %v3036 = vld [vmem:[%s12 + $0x70] sm:$0xff]
    %v3037 = vld [vmem:[%s12 + $0x78] sm:$0xff]
    %v3038 = vld [vmem:[%s12 + $0x80] sm:$0xff]
    %v3039 = vld [vmem:[%s12 + $0x88] sm:$0xff]
    %v3040 = vld [vmem:[%s12 + $0x90] sm:$0xff]
    %v3041 = vld [vmem:[%s12 + $0x98] sm:$0xff]
    %v3042 = vld [vmem:[%s12 + $0xa0] sm:$0xff]
    %v3043 = vld [vmem:[%s12 + $0xa8] sm:$0xff]
    %v3044 = vld [vmem:[%s12 + $0xb0] sm:$0xff]
    %v3045 = vld [vmem:[%s12 + $0xb8] sm:$0xff]
    %v3046 = vld [vmem:[%s12 + $0xc0] sm:$0xff]
    %v3047 = vld [vmem:[%s12 + $0xc8] sm:$0xff]
    %v3048 = vld [vmem:[%s12 + $0xd0] sm:$0xff]
    %v3049 = vld [vmem:[%s12 + $0xd8] sm:$0xff]
    %v3050 = vld [vmem:[%s12 + $0xe0] sm:$0xff]
    %v3051 = vld [vmem:[%s12 + $0xe8] sm:$0xff]
    %v3052 = vld [vmem:[%s12 + $0xf0] sm:$0xff]
    %v3053 = vld [vmem:[%s12 + $0xf8] sm:$0xff]
    %v3054 = vld [vmem:[%s13] sm:$0x3]
    %v3056 = vlaneseq
    %v3057 = vshrl.u32 %v3056, 7
    %v3058 = vsub.s32 0, %v3057
    %v3059 = vrot.slane %v3054, %v3058
    %v3060 = vlaneseq
    %v3061 = vshrl.u32 %v3060, 7
    %v3062 = vsub.s32 1, %v3061
    %v3063 = vrot.slane %v3054, %v3062
    %v3098 = vunpack.c.l.b16 %v3022
    %v3099 = vunpack.c.h.b16 %v3022
    %v3100 = vunpack.c.l.b16 %v3023
    %v3101 = vunpack.c.h.b16 %v3023
    %v3102 = vunpack.c.l.b16 %v3024
    %v3103 = vunpack.c.h.b16 %v3024
    %v3104 = vunpack.c.l.b16 %v3025
    %v3105 = vunpack.c.h.b16 %v3025
    %v3106 = vunpack.c.l.b16 %v3026
    %v3107 = vunpack.c.h.b16 %v3026
    %v3108 = vunpack.c.l.b16 %v3027
    %v3109 = vunpack.c.h.b16 %v3027
    %v3110 = vunpack.c.l.b16 %v3028
    %v3111 = vunpack.c.h.b16 %v3028
    %v3112 = vunpack.c.l.b16 %v3029
    %v3113 = vunpack.c.h.b16 %v3029
    %v3114 = vunpack.c.l.b16 %v3030
    %v3115 = vunpack.c.h.b16 %v3030
    %v3116 = vunpack.c.l.b16 %v3031
    %v3117 = vunpack.c.h.b16 %v3031
    %v3118 = vunpack.c.l.b16 %v3032
    %v3119 = vunpack.c.h.b16 %v3032
    %v3120 = vunpack.c.l.b16 %v3033
    %v3121 = vunpack.c.h.b16 %v3033
    %v3122 = vunpack.c.l.b16 %v3034
    %v3123 = vunpack.c.h.b16 %v3034
    %v3124 = vunpack.c.l.b16 %v3035
    %v3125 = vunpack.c.h.b16 %v3035
    %v3126 = vunpack.c.l.b16 %v3036
    %v3127 = vunpack.c.h.b16 %v3036
    %v3128 = vunpack.c.l.b16 %v3037
    %v3129 = vunpack.c.h.b16 %v3037
    %v3130 = vunpack.c.l.b16 %v3038
    %v3131 = vunpack.c.h.b16 %v3038
    %v3132 = vunpack.c.l.b16 %v3039
    %v3133 = vunpack.c.h.b16 %v3039
    %v3134 = vunpack.c.l.b16 %v3040
    %v3135 = vunpack.c.h.b16 %v3040
    %v3136 = vunpack.c.l.b16 %v3041
    %v3137 = vunpack.c.h.b16 %v3041
    %v3138 = vunpack.c.l.b16 %v3042
    %v3139 = vunpack.c.h.b16 %v3042
    %v3140 = vunpack.c.l.b16 %v3043
    %v3141 = vunpack.c.h.b16 %v3043
    %v3142 = vunpack.c.l.b16 %v3044
    %v3143 = vunpack.c.h.b16 %v3044
    %v3144 = vunpack.c.l.b16 %v3045
    %v3145 = vunpack.c.h.b16 %v3045
    %v3146 = vunpack.c.l.b16 %v3046
    %v3147 = vunpack.c.h.b16 %v3046
    %v3148 = vunpack.c.l.b16 %v3047
    %v3149 = vunpack.c.h.b16 %v3047
    %v3150 = vunpack.c.l.b16 %v3048
    %v3151 = vunpack.c.h.b16 %v3048
    %v3152 = vunpack.c.l.b16 %v3049
    %v3153 = vunpack.c.h.b16 %v3049
    %v3154 = vunpack.c.l.b16 %v3050
    %v3155 = vunpack.c.h.b16 %v3050
    %v3156 = vunpack.c.l.b16 %v3051
    %v3157 = vunpack.c.h.b16 %v3051
    %v3158 = vunpack.c.l.b16 %v3052
    %v3159 = vunpack.c.h.b16 %v3052
    %v3160 = vunpack.c.l.b16 %v3053
    %v3161 = vunpack.c.h.b16 %v3053
    %v3162 = vpack.c.b16 %v3100, %v3098
    %v3163 = vpack.c.b16 %v3101, %v3099
    %v3164 = vpack.c.b16 %v3104, %v3102
    %v3165 = vpack.c.b16 %v3105, %v3103
    %v3166 = vpack.c.b16 %v3108, %v3106
    %v3167 = vpack.c.b16 %v3109, %v3107
    %v3168 = vpack.c.b16 %v3112, %v3110
    %v3169 = vpack.c.b16 %v3113, %v3111
    %v3170 = vpack.c.b16 %v3116, %v3114
    %v3171 = vpack.c.b16 %v3117, %v3115
    %v3172 = vpack.c.b16 %v3120, %v3118
    %v3173 = vpack.c.b16 %v3121, %v3119
    %v3174 = vpack.c.b16 %v3124, %v3122
    %v3175 = vpack.c.b16 %v3125, %v3123
    %v3176 = vpack.c.b16 %v3128, %v3126
    %v3177 = vpack.c.b16 %v3129, %v3127
    %v3178 = vpack.c.b16 %v3132, %v3130
    %v3179 = vpack.c.b16 %v3133, %v3131
    %v3180 = vpack.c.b16 %v3136, %v3134
    %v3181 = vpack.c.b16 %v3137, %v3135
    %v3182 = vpack.c.b16 %v3140, %v3138
    %v3183 = vpack.c.b16 %v3141, %v3139
    %v3184 = vpack.c.b16 %v3144, %v3142
    %v3185 = vpack.c.b16 %v3145, %v3143
    %v3186 = vpack.c.b16 %v3148, %v3146
    %v3187 = vpack.c.b16 %v3149, %v3147
    %v3188 = vpack.c.b16 %v3152, %v3150
    %v3189 = vpack.c.b16 %v3153, %v3151
    %v3190 = vpack.c.b16 %v3156, %v3154
    %v3191 = vpack.c.b16 %v3157, %v3155
    %v3192 = vpack.c.b16 %v3160, %v3158
    %v3193 = vpack.c.b16 %v3161, %v3159
    %3226 = vmatprep.subr.bf16.mxu0 %v3177
    %3227 = vmatpush1.bf16.msra.mxu0 %v3176
    %3228 = vmatprep.subr.bf16.mxu0 %v3175
    %3229 = vmatpush1.bf16.msra.mxu0 %v3174
    %3230 = vmatprep.subr.bf16.mxu0 %v3173
    %3231 = vmatpush1.bf16.msra.mxu0 %v3172
    %3232 = vmatprep.subr.bf16.mxu0 %v3171
    %3233 = vmatpush1.bf16.msra.mxu0 %v3170
    %3234 = vmatprep.subr.bf16.mxu0 %v3169
    %3235 = vmatpush1.bf16.msra.mxu0 %v3168
    %3236 = vmatprep.subr.bf16.mxu0 %v3167
    %3237 = vmatpush1.bf16.msra.mxu0 %v3166
    %3238 = vmatprep.subr.bf16.mxu0 %v3165
    %3239 = vmatpush1.bf16.msra.mxu0 %v3164
    %3240 = vmatprep.subr.bf16.mxu0 %v3163
    %3241 = vmatpush1.bf16.msra.mxu0 %v3162
    %3242 = vmatprep.subr.bf16.mxu0 %v3193
    %3243 = vmatpush2.bf16.msra.mxu0 %v3192
    %3244 = vmatprep.subr.bf16.mxu0 %v3191
    %3245 = vmatpush2.bf16.msra.mxu0 %v3190
    %3246 = vmatprep.subr.bf16.mxu0 %v3189
    %3247 = vmatpush2.bf16.msra.mxu0 %v3188
    %3248 = vmatprep.subr.bf16.mxu0 %v3187
    %3249 = vmatpush2.bf16.msra.mxu0 %v3186
    %3250 = vmatprep.subr.bf16.mxu0 %v3185
    %3251 = vmatpush2.bf16.msra.mxu0 %v3184
    %3252 = vmatprep.subr.bf16.mxu0 %v3183
    %3253 = vmatpush2.bf16.msra.mxu0 %v3182
    %3254 = vmatprep.subr.bf16.mxu0 %v3181
    %3255 = vmatpush2.bf16.msra.mxu0 %v3180
    %3256 = vmatprep.subr.bf16.mxu0 %v3179
    %3257 = vmatpush2.bf16.msra.mxu0 %v3178
    %3258 = vmatprep.mubr.bf16.mxu0 %v3015
    %3259 = vmatmul.mubr.bf16.gmra.mxu0 %v3014
    %v3260 = vpop.f32.mrf.mxu0
    %v3261 = vadd.f32 %v3059, %v3260
    %v3262 = vpop.f32.mrf.mxu0
    %v3263 = vadd.f32 %v3063, %v3262
    %v3264 = vpop.f32.mrf.mxu0
    %v3265 = vadd.f32 %v3059, %v3264
    %v3266 = vpop.f32.mrf.mxu0
    %v3267 = vadd.f32 %v3063, %v3266
    %3268 = vmatprep.mubr.bf16.mxu0 %v3017
    %3269 = vmatmul.mubr.bf16.gmra.mxu0 %v3016
    %v3270 = vpop.f32.mrf.mxu0
    %v3271 = vadd.f32 %v3059, %v3270
    %v3272 = vpop.f32.mrf.mxu0
    %v3273 = vadd.f32 %v3063, %v3272
    %v3274 = vpop.f32.mrf.mxu0
    %v3275 = vadd.f32 %v3059, %v3274
    %v3276 = vpop.f32.mrf.mxu0
    %v3277 = vadd.f32 %v3063, %v3276
    %3278 = vmatprep.mubr.bf16.mxu0 %v3019
    %3279 = vmatmul.mubr.bf16.gmra.mxu0 %v3018
    %v3280 = vpop.f32.mrf.mxu0
    %v3281 = vadd.f32 %v3059, %v3280
    %v3282 = vpop.f32.mrf.mxu0
    %v3283 = vadd.f32 %v3063, %v3282
    %v3284 = vpop.f32.mrf.mxu0
    %v3285 = vadd.f32 %v3059, %v3284
    %v3286 = vpop.f32.mrf.mxu0
    %v3287 = vadd.f32 %v3063, %v3286
    %3288 = vmatprep.mubr.bf16.mxu0 %v3021
    %3289 = vmatmul.mubr.bf16.gmra.mxu0 %v3020
    %v3290 = vpop.f32.mrf.mxu0
    %v3291 = vadd.f32 %v3059, %v3290
    %v3292 = vpop.f32.mrf.mxu0
    %v3293 = vadd.f32 %v3063, %v3292
    %v3294 = vpop.f32.mrf.mxu0
    %v3295 = vadd.f32 %v3059, %v3294
    %v3296 = vpop.f32.mrf.mxu0
    %v3297 = vadd.f32 %v3063, %v3296
    %3298 = vdwg.mxu0
    %v3299 = vmax.f32 %v3261, 0.0
    %v3300 = vmax.f32 %v3263, 0.0
    %v3301 = vmax.f32 %v3265, 0.0
    %v3302 = vmax.f32 %v3267, 0.0
    %v3303 = vmax.f32 %v3271, 0.0
    %v3304 = vmax.f32 %v3273, 0.0
    %v3305 = vmax.f32 %v3275, 0.0
    %v3306 = vmax.f32 %v3277, 0.0
    %v3307 = vmax.f32 %v3281, 0.0
    %v3308 = vmax.f32 %v3283, 0.0
    %v3309 = vmax.f32 %v3285, 0.0
    %v3310 = vmax.f32 %v3287, 0.0
    %v3311 = vmax.f32 %v3291, 0.0
    %v3312 = vmax.f32 %v3293, 0.0
    %v3313 = vmax.f32 %v3295, 0.0
    %v3314 = vmax.f32 %v3297, 0.0
    %v3315 = vld [vmem:[%s14] sm:$0xff]
    %v3316 = vld [vmem:[%s14 + $0x8] sm:$0xff]
    %v3317 = vld [vmem:[%s14 + $0x10] sm:$0xff]
    %v3318 = vld [vmem:[%s14 + $0x18] sm:$0xff]
    %v3319 = vld [vmem:[%s14 + $0x20] sm:$0xff]
    %v3320 = vld [vmem:[%s14 + $0x28] sm:$0xff]
    %v3321 = vld [vmem:[%s14 + $0x30] sm:$0xff]
    %v3322 = vld [vmem:[%s14 + $0x38] sm:$0xff]
    %v3323 = vld [vmem:[%s14 + $0x40] sm:$0xff]
    %v3324 = vld [vmem:[%s14 + $0x48] sm:$0xff]
    %v3325 = vld [vmem:[%s14 + $0x50] sm:$0xff]
    %v3326 = vld [vmem:[%s14 + $0x58] sm:$0xff]
    %v3327 = vld [vmem:[%s14 + $0x60] sm:$0xff]
    %v3328 = vld [vmem:[%s14 + $0x68] sm:$0xff]
    %v3329 = vld [vmem:[%s14 + $0x70] sm:$0xff]
    %v3330 = vld [vmem:[%s14 + $0x78] sm:$0xff]
    %v3331 = vld [vmem:[%s14 + $0x80] sm:$0xff]
    %v3332 = vld [vmem:[%s14 + $0x88] sm:$0xff]
    %v3333 = vld [vmem:[%s14 + $0x90] sm:$0xff]
    %v3334 = vld [vmem:[%s14 + $0x98] sm:$0xff]
    %v3335 = vld [vmem:[%s14 + $0xa0] sm:$0xff]
    %v3336 = vld [vmem:[%s14 + $0xa8] sm:$0xff]
    %v3337 = vld [vmem:[%s14 + $0xb0] sm:$0xff]
    %v3338 = vld [vmem:[%s14 + $0xb8] sm:$0xff]
    %v3339 = vld [vmem:[%s14 + $0xc0] sm:$0xff]
    %v3340 = vld [vmem:[%s14 + $0xc8] sm:$0xff]
    %v3341 = vld [vmem:[%s14 + $0xd0] sm:$0xff]
    %v3342 = vld [vmem:[%s14 + $0xd8] sm:$0xff]
    %v3343 = vld [vmem:[%s14 + $0xe0] sm:$0xff]
    %v3344 = vld [vmem:[%s14 + $0xe8] sm:$0xff]
    %v3345 = vld [vmem:[%s14 + $0xf0] sm:$0xff]
    %v3346 = vld [vmem:[%s14 + $0xf8] sm:$0xff]
    %v3347 = vld [vmem:[%s15] sm:$0x1]
    %v3349 = vlaneseq
    %v3350 = vshrl.u32 %v3349, 7
    %v3351 = vsub.s32 0, %v3350
    %v3352 = vrot.slane %v3347, %v3351
    %3354 = vmatprep.subr.mxu0 0.0
    %3355 = vmatpush1.msra.mxu0 %v3330
    %3356 = vmatprep.subr.mxu0 0.0
    %3357 = vmatpush1.msra.mxu0 %v3329
    %3358 = vmatprep.subr.mxu0 0.0
    %3359 = vmatpush1.msra.mxu0 %v3328
    %3360 = vmatprep.subr.mxu0 0.0
    %3361 = vmatpush1.msra.mxu0 %v3327
    %3362 = vmatprep.subr.mxu0 0.0
    %3363 = vmatpush1.msra.mxu0 %v3326
    %3364 = vmatprep.subr.mxu0 0.0
    %3365 = vmatpush1.msra.mxu0 %v3325
    %3366 = vmatprep.subr.mxu0 0.0
    %3367 = vmatpush1.msra.mxu0 %v3324
    %3368 = vmatprep.subr.mxu0 0.0
    %3369 = vmatpush1.msra.mxu0 %v3323
    %3370 = vmatprep.subr.mxu0 0.0
    %3371 = vmatpush1.msra.mxu0 %v3322
    %3372 = vmatprep.subr.mxu0 0.0
    %3373 = vmatpush1.msra.mxu0 %v3321
    %3374 = vmatprep.subr.mxu0 0.0
    %3375 = vmatpush1.msra.mxu0 %v3320
    %3376 = vmatprep.subr.mxu0 0.0
    %3377 = vmatpush1.msra.mxu0 %v3319
    %3378 = vmatprep.subr.mxu0 0.0
    %3379 = vmatpush1.msra.mxu0 %v3318
    %3380 = vmatprep.subr.mxu0 0.0
    %3381 = vmatpush1.msra.mxu0 %v3317
    %3382 = vmatprep.subr.mxu0 0.0
    %3383 = vmatpush1.msra.mxu0 %v3316
    %3384 = vmatprep.subr.mxu0 0.0
    %3385 = vmatpush1.msra.mxu0 %v3315
    %3386 = vmatprep.subr.mxu0 0.0
    %3387 = vmatpush2.msra.mxu0 %v3346
    %3388 = vmatprep.subr.mxu0 0.0
    %3389 = vmatpush2.msra.mxu0 %v3345
    %3390 = vmatprep.subr.mxu0 0.0
    %3391 = vmatpush2.msra.mxu0 %v3344
    %3392 = vmatprep.subr.mxu0 0.0
    %3393 = vmatpush2.msra.mxu0 %v3343
    %3394 = vmatprep.subr.mxu0 0.0
    %3395 = vmatpush2.msra.mxu0 %v3342
    %3396 = vmatprep.subr.mxu0 0.0
    %3397 = vmatpush2.msra.mxu0 %v3341
    %3398 = vmatprep.subr.mxu0 0.0
    %3399 = vmatpush2.msra.mxu0 %v3340
    %3400 = vmatprep.subr.mxu0 0.0
    %3401 = vmatpush2.msra.mxu0 %v3339
    %3402 = vmatprep.subr.mxu0 0.0
    %3403 = vmatpush2.msra.mxu0 %v3338
    %3404 = vmatprep.subr.mxu0 0.0
    %3405 = vmatpush2.msra.mxu0 %v3337
    %3406 = vmatprep.subr.mxu0 0.0
    %3407 = vmatpush2.msra.mxu0 %v3336
    %3408 = vmatprep.subr.mxu0 0.0
    %3409 = vmatpush2.msra.mxu0 %v3335
    %3410 = vmatprep.subr.mxu0 0.0
    %3411 = vmatpush2.msra.mxu0 %v3334
    %3412 = vmatprep.subr.mxu0 0.0
    %3413 = vmatpush2.msra.mxu0 %v3333
    %3414 = vmatprep.subr.mxu0 0.0
    %3415 = vmatpush2.msra.mxu0 %v3332
    %3416 = vmatprep.subr.mxu0 0.0
    %3417 = vmatpush2.msra.mxu0 %v3331
    %3418 = vmatprep.mubr.f32.mxu0 %v3300
    %3419 = vmatmul.mubr.f32.gmra.mxu0 %v3299
    %v3420 = vpop.f32.mrf.mxu0
    %v3421 = vadd.f32 %v3352, %v3420
    %v3422 = vpop.f32.mrf.mxu0
    %3423 = vmatprep.mubr.f32.mxu0 %v3302
    %3424 = vmatmul.mubr.f32.gmra.mxu0 %v3301
    %v3425 = vpop.f32.mrf.mxu0
    %v3426 = vadd.f32 %v3352, %v3425
    %v3427 = vpop.f32.mrf.mxu0
    %3428 = vmatprep.mubr.f32.mxu0 %v3304
    %3429 = vmatmul.mubr.f32.gmra.mxu0 %v3303
    %v3430 = vpop.f32.mrf.mxu0
    %v3431 = vadd.f32 %v3352, %v3430
    %v3432 = vpop.f32.mrf.mxu0
    %3433 = vmatprep.mubr.f32.mxu0 %v3306
    %3434 = vmatmul.mubr.f32.gmra.mxu0 %v3305
    %v3435 = vpop.f32.mrf.mxu0
    %v3436 = vadd.f32 %v3352, %v3435
    %v3437 = vpop.f32.mrf.mxu0
    %3438 = vmatprep.mubr.f32.mxu0 %v3308
    %3439 = vmatmul.mubr.f32.gmra.mxu0 %v3307
    %v3440 = vpop.f32.mrf.mxu0
    %v3441 = vadd.f32 %v3352, %v3440
    %v3442 = vpop.f32.mrf.mxu0
    %3443 = vmatprep.mubr.f32.mxu0 %v3310
    %3444 = vmatmul.mubr.f32.gmra.mxu0 %v3309
    %v3445 = vpop.f32.mrf.mxu0
    %v3446 = vadd.f32 %v3352, %v3445
    %v3447 = vpop.f32.mrf.mxu0
    %3448 = vmatprep.mubr.f32.mxu0 %v3312
    %3449 = vmatmul.mubr.f32.gmra.mxu0 %v3311
    %v3450 = vpop.f32.mrf.mxu0
    %v3451 = vadd.f32 %v3352, %v3450
    %v3452 = vpop.f32.mrf.mxu0
    %3453 = vmatprep.mubr.f32.mxu0 %v3314
    %3454 = vmatmul.mubr.f32.gmra.mxu0 %v3313
    %v3455 = vpop.f32.mrf.mxu0
    %v3456 = vadd.f32 %v3352, %v3455
    %v3457 = vpop.f32.mrf.mxu0
    %3458 = vdwg.mxu0
    %v3459 = vld [vmem:[%s9] sm:$0xff]
    %v3460 = vld [vmem:[%s9 + $0x8] sm:$0xff]
    %v3461 = vld [vmem:[%s9 + $0x10] sm:$0xff]
    %v3462 = vld [vmem:[%s9 + $0x18] sm:$0xff]
    %v3463 = vld [vmem:[%s9 + $0x20] sm:$0xff]
    %v3464 = vld [vmem:[%s9 + $0x28] sm:$0xff]
    %v3465 = vld [vmem:[%s9 + $0x30] sm:$0xff]
    %v3466 = vld [vmem:[%s9 + $0x38] sm:$0xff]
    %v3467 = vmax.f32 %v3459, 0.0
    %v3468 = vmax.f32 %v3460, 0.0
    %v3469 = vmax.f32 %v3461, 0.0
    %v3470 = vmax.f32 %v3462, 0.0
    %v3471 = vmax.f32 %v3463, 0.0
    %v3472 = vmax.f32 %v3464, 0.0
    %v3473 = vmax.f32 %v3465, 0.0
    %v3474 = vmax.f32 %v3466, 0.0
    %v3475 = vmin.f32 %v3467, 1.0
    %v3476 = vmin.f32 %v3468, 1.0
    %v3477 = vmin.f32 %v3469, 1.0
    %v3478 = vmin.f32 %v3470, 1.0
    %v3479 = vmin.f32 %v3471, 1.0
    %v3480 = vmin.f32 %v3472, 1.0
    %v3481 = vmin.f32 %v3473, 1.0
    %v3482 = vmin.f32 %v3474, 1.0
    %v3483 = vmax.f32 %v3475, 0.001
    %v3484 = vmax.f32 %v3476, 0.001
    %v3485 = vmax.f32 %v3477, 0.001
    %v3486 = vmax.f32 %v3478, 0.001
    %v3487 = vmax.f32 %v3479, 0.001
    %v3488 = vmax.f32 %v3480, 0.001
    %v3489 = vmax.f32 %v3481, 0.001
    %v3490 = vmax.f32 %v3482, 0.001
    %v3491 = vsub.f32 1.0, %v3475
    %v3492 = vsub.f32 1.0, %v3476
    %v3493 = vsub.f32 1.0, %v3477
    %v3494 = vsub.f32 1.0, %v3478
    %v3495 = vsub.f32 1.0, %v3479
    %v3496 = vsub.f32 1.0, %v3480
    %v3497 = vsub.f32 1.0, %v3481
    %v3498 = vsub.f32 1.0, %v3482
    %v3499 = vmax.f32 %v3491, 0.001
    %v3500 = vmax.f32 %v3492, 0.001
    %v3501 = vmax.f32 %v3493, 0.001
    %v3502 = vmax.f32 %v3494, 0.001
    %v3503 = vmax.f32 %v3495, 0.001
    %v3504 = vmax.f32 %v3496, 0.001
    %v3505 = vmax.f32 %v3497, 0.001
    %v3506 = vmax.f32 %v3498, 0.001
    %v3507 = vrcp.pop %v3499
    %v3508 = vmul.f32 %v3483, %v3507
    %v3509 = vrcp.pop %v3500
    %v3510 = vmul.f32 %v3484, %v3509
    %v3511 = vrcp.pop %v3501
    %v3512 = vmul.f32 %v3485, %v3511
    %v3513 = vrcp.pop %v3502
    %v3514 = vmul.f32 %v3486, %v3513
    %v3515 = vrcp.pop %v3503
    %v3516 = vmul.f32 %v3487, %v3515
    %v3517 = vrcp.pop %v3504
    %v3518 = vmul.f32 %v3488, %v3517
    %v3519 = vrcp.pop %v3505
    %v3520 = vmul.f32 %v3489, %v3519
    %v3521 = vrcp.pop %v3506
    %v3522 = vmul.f32 %v3490, %v3521
    %v3523 = vlog2.pop %v3508
    %v3524 = vmul.f32 %v3523, 0.6931472
    %v3525 = vlog2.pop %v3510
    %v3526 = vmul.f32 %v3525, 0.6931472
    %v3527 = vlog2.pop %v3512
    %v3528 = vmul.f32 %v3527, 0.6931472
    %v3529 = vlog2.pop %v3514
    %v3530 = vmul.f32 %v3529, 0.6931472
    %v3531 = vlog2.pop %v3516
    %v3532 = vmul.f32 %v3531, 0.6931472
    %v3533 = vlog2.pop %v3518
    %v3534 = vmul.f32 %v3533, 0.6931472
    %v3535 = vlog2.pop %v3520
    %v3536 = vmul.f32 %v3535, 0.6931472
    %v3537 = vlog2.pop %v3522
    %v3538 = vmul.f32 %v3537, 0.6931472
    %v3539 = vadd.f32 %v3421, %v3524
    %v3540 = vadd.f32 %v3426, %v3526
    %v3541 = vadd.f32 %v3431, %v3528
    %v3542 = vadd.f32 %v3436, %v3530
    %v3543 = vadd.f32 %v3441, %v3532
    %v3544 = vadd.f32 %v3446, %v3534
    %v3545 = vadd.f32 %v3451, %v3536
    %v3546 = vadd.f32 %v3456, %v3538
    %v3547 = vxor.u32 %v3539, 2147483648
    %v3548 = vxor.u32 %v3540, 2147483648
    %v3549 = vxor.u32 %v3541, 2147483648
    %v3550 = vxor.u32 %v3542, 2147483648
    %v3551 = vxor.u32 %v3543, 2147483648
    %v3552 = vxor.u32 %v3544, 2147483648
    %v3553 = vxor.u32 %v3545, 2147483648
    %v3554 = vxor.u32 %v3546, 2147483648
    %v3555 = vmul.f32 %v3547, 1.442695
    %v3556 = vpow.pop %v3555
    %v3557 = vmul.f32 %v3548, 1.442695
    %v3558 = vpow.pop %v3557
    %v3559 = vmul.f32 %v3549, 1.442695
    %v3560 = vpow.pop %v3559
    %v3561 = vmul.f32 %v3550, 1.442695
    %v3562 = vpow.pop %v3561
    %v3563 = vmul.f32 %v3551, 1.442695
    %v3564 = vpow.pop %v3563
    %v3565 = vmul.f32 %v3552, 1.442695
    %v3566 = vpow.pop %v3565
    %v3567 = vmul.f32 %v3553, 1.442695
    %v3568 = vpow.pop %v3567
    %v3569 = vmul.f32 %v3554, 1.442695
    %v3570 = vpow.pop %v3569
    %v3571 = vadd.f32 %v3556, 1.0
    %v3572 = vadd.f32 %v3558, 1.0
    %v3573 = vadd.f32 %v3560, 1.0
    %v3574 = vadd.f32 %v3562, 1.0
    %v3575 = vadd.f32 %v3564, 1.0
    %v3576 = vadd.f32 %v3566, 1.0
    %v3577 = vadd.f32 %v3568, 1.0
    %v3578 = vadd.f32 %v3570, 1.0
    %v3579 = vrcp.pop %v3571
    %v3580 = vmul.f32 1.0, %v3579
    %v3581 = vrcp.pop %v3572
    %v3582 = vmul.f32 1.0, %v3581
    %v3583 = vrcp.pop %v3573
    %v3584 = vmul.f32 1.0, %v3583
    %v3585 = vrcp.pop %v3574
    %v3586 = vmul.f32 1.0, %v3585
    %v3587 = vrcp.pop %v3575
    %v3588 = vmul.f32 1.0, %v3587
    %v3589 = vrcp.pop %v3576
    %v3590 = vmul.f32 1.0, %v3589
    %v3591 = vrcp.pop %v3577
    %v3592 = vmul.f32 1.0, %v3591
    %v3593 = vrcp.pop %v3578
    %v3594 = vmul.f32 1.0, %v3593
    %3595 = vst.msk [vmem:[%s19] sm:$0xff] %vm268, %v3580
    %3596 = vst.msk [vmem:[%s19 + $0x8] sm:$0xff] %vm268, %v3582
    %3597 = vst.msk [vmem:[%s19 + $0x10] sm:$0xff] %vm268, %v3584
    %3598 = vst.msk [vmem:[%s19 + $0x18] sm:$0xff] %vm268, %v3586
    %3599 = vst.msk [vmem:[%s19 + $0x20] sm:$0xff] %vm268, %v3588
    %3600 = vst.msk [vmem:[%s19 + $0x28] sm:$0xff] %vm268, %v3590
    %3601 = vst.msk [vmem:[%s19 + $0x30] sm:$0xff] %vm268, %v3592
    %3602 = vst.msk [vmem:[%s19 + $0x38] sm:$0xff] %vm268, %v3594
    %3603 = vmatprep.subr.mxu0 0.0
    %3604 = vmatpush1.xpose.msra.mxu0 0.0
    %3605 = vmatprep.subr.mxu0 0.0
    %3606 = vmatpush1.xpose.msra.mxu0 0.0
    %3607 = vmatprep.subr.mxu0 0.0
    %3608 = vmatpush1.xpose.msra.mxu0 0.0
    %3609 = vmatprep.subr.mxu0 0.0
    %3610 = vmatpush1.xpose.msra.mxu0 0.0
    %3611 = vmatprep.subr.mxu0 0.0
    %3612 = vmatpush1.xpose.msra.mxu0 0.0
    %3613 = vmatprep.subr.mxu0 0.0
    %3614 = vmatpush1.xpose.msra.mxu0 0.0
    %3615 = vmatprep.subr.mxu0 0.0
    %3616 = vmatpush1.xpose.msra.mxu0 0.0
    %3617 = vmatprep.subr.mxu0 %v183
    %3618 = vmatpush1.xpose.msra.mxu0 %v181
    %3619 = vmatprep.subr.mxu0 0.0
    %3620 = vmatpush1.xpose.msra.mxu0 0.0
    %3621 = vmatprep.subr.mxu0 0.0
    %3622 = vmatpush1.xpose.msra.mxu0 0.0
    %3623 = vmatprep.subr.mxu0 0.0
    %3624 = vmatpush1.xpose.msra.mxu0 0.0
    %3625 = vmatprep.subr.mxu0 0.0
    %3626 = vmatpush1.xpose.msra.mxu0 0.0
    %3627 = vmatprep.subr.mxu0 0.0
    %3628 = vmatpush1.xpose.msra.mxu0 0.0
    %3629 = vmatprep.subr.mxu0 0.0
    %3630 = vmatpush1.xpose.msra.mxu0 0.0
    %3631 = vmatprep.subr.mxu0 0.0
    %3632 = vmatpush1.xpose.msra.mxu0 0.0
    %3633 = vmatprep.subr.mxu0 %v177
    %3634 = vmatpush1.xpose.msra.mxu0 %v175
    %3635 = vmatprep.subr.mxu0 0.0
    %3636 = vmatpush2.xpose.msra.mxu0 0.0
    %3637 = vmatprep.subr.mxu0 0.0
    %3638 = vmatpush2.xpose.msra.mxu0 0.0
    %3639 = vmatprep.subr.mxu0 0.0
    %3640 = vmatpush2.xpose.msra.mxu0 0.0
    %3641 = vmatprep.subr.mxu0 0.0
    %3642 = vmatpush2.xpose.msra.mxu0 0.0
    %3643 = vmatprep.subr.mxu0 0.0
    %3644 = vmatpush2.xpose.msra.mxu0 0.0
    %3645 = vmatprep.subr.mxu0 0.0
    %3646 = vmatpush2.xpose.msra.mxu0 0.0
    %3647 = vmatprep.subr.mxu0 0.0
    %3648 = vmatpush2.xpose.msra.mxu0 0.0
    %3649 = vmatprep.subr.mxu0 0.0
    %3650 = vmatpush2.xpose.msra.mxu0 0.0
    %3651 = vmatprep.subr.mxu0 0.0
    %3652 = vmatpush2.xpose.msra.mxu0 0.0
    %3653 = vmatprep.subr.mxu0 0.0
    %3654 = vmatpush2.xpose.msra.mxu0 0.0
    %3655 = vmatprep.subr.mxu0 0.0
    %3656 = vmatpush2.xpose.msra.mxu0 0.0
    %3657 = vmatprep.subr.mxu0 0.0
    %3658 = vmatpush2.xpose.msra.mxu0 0.0
    %3659 = vmatprep.subr.mxu0 0.0
    %3660 = vmatpush2.xpose.msra.mxu0 0.0
    %3661 = vmatprep.subr.mxu0 0.0
    %3662 = vmatpush2.xpose.msra.mxu0 0.0
    %3663 = vmatprep.subr.mxu0 0.0
    %3664 = vmatpush2.xpose.msra.mxu0 0.0
    %3665 = vmatprep.subr.mxu0 0.0
    %3666 = vmatpush2.xpose.msra.mxu0 0.0
    %3667 = vmatprep.mubr.f32.mxu0 %v2698
    %3668 = vmatmul.mubr.f32.gmra.mxu0 %v2697
    %v3669 = vpop.f32.mrf.mxu0
    %v3670 = vadd.f32 0.0, %v3669
    %v3671 = vpop.f32.mrf.mxu0
    %3672 = vmatprep.mubr.f32.mxu0 %v2700
    %3673 = vmatmul.mubr.f32.gmra.mxu0 %v2699
    %v3674 = vpop.f32.mrf.mxu0
    %v3675 = vadd.f32 0.0, %v3674
    %v3676 = vpop.f32.mrf.mxu0
    %3677 = vmatprep.mubr.f32.mxu0 %v2702
    %3678 = vmatmul.mubr.f32.gmra.mxu0 %v2701
    %v3679 = vpop.f32.mrf.mxu0
    %v3680 = vadd.f32 0.0, %v3679
    %v3681 = vpop.f32.mrf.mxu0
    %3682 = vmatprep.mubr.f32.mxu0 %v2704
    %3683 = vmatmul.mubr.f32.gmra.mxu0 %v2703
    %v3684 = vpop.f32.mrf.mxu0
    %v3685 = vadd.f32 0.0, %v3684
    %v3686 = vpop.f32.mrf.mxu0
    %3687 = vmatprep.mubr.f32.mxu0 %v2706
    %3688 = vmatmul.mubr.f32.gmra.mxu0 %v2705
    %v3689 = vpop.f32.mrf.mxu0
    %v3690 = vadd.f32 0.0, %v3689
    %v3691 = vpop.f32.mrf.mxu0
    %3692 = vmatprep.mubr.f32.mxu0 %v2708
    %3693 = vmatmul.mubr.f32.gmra.mxu0 %v2707
    %v3694 = vpop.f32.mrf.mxu0
    %v3695 = vadd.f32 0.0, %v3694
    %v3696 = vpop.f32.mrf.mxu0
    %3697 = vmatprep.mubr.f32.mxu0 %v2710
    %3698 = vmatmul.mubr.f32.gmra.mxu0 %v2709
    %v3699 = vpop.f32.mrf.mxu0
    %v3700 = vadd.f32 0.0, %v3699
    %v3701 = vpop.f32.mrf.mxu0
    %3702 = vmatprep.mubr.f32.mxu0 %v2712
    %3703 = vmatmul.mubr.f32.gmra.mxu0 %v2711
    %v3704 = vpop.f32.mrf.mxu0
    %v3705 = vadd.f32 0.0, %v3704
    %v3706 = vpop.f32.mrf.mxu0
    %3707 = vdwg.mxu0
    %v3708 = vld [vmem:[%s16] sm:$0x1]
    %vm3709 = vcmp.gt.s32.totalorder %v3708, 0
    %v3710 = vsel %vm3709, 1, 0
    %v3711 = vlaneseq
    %v3712 = vshrl.u32 %v3711, 7
    %v3713 = vsub.s32 0, %v3712
    %v3714 = vrot.slane %v3710, %v3713
    %vm3715 = vcmp.eq.s32.totalorder %v3714, 1
    %v3716 = vsel %vm3715, %v3670, -inf
    %v3717 = vsel %vm3715, %v3675, -inf
    %v3718 = vsel %vm3715, %v3680, -inf
    %v3719 = vsel %vm3715, %v3685, -inf
    %v3720 = vsel %vm3715, %v3690, -inf
    %v3721 = vsel %vm3715, %v3695, -inf
    %v3722 = vsel %vm3715, %v3700, -inf
    %v3723 = vsel %vm3715, %v3705, -inf
    %3724 = vst [vmem:[%s20] sm:$0xff] %v3716
    %3725 = vst [vmem:[%s20 + $0x8] sm:$0xff] %v3717
    %3726 = vst [vmem:[%s20 + $0x10] sm:$0xff] %v3718
    %3727 = vst [vmem:[%s20 + $0x18] sm:$0xff] %v3719
    %3728 = vst [vmem:[%s20 + $0x20] sm:$0xff] %v3720
    %3729 = vst [vmem:[%s20 + $0x28] sm:$0xff] %v3721
    %3730 = vst [vmem:[%s20 + $0x30] sm:$0xff] %v3722
    %3731 = vst [vmem:[%s20 + $0x38] sm:$0xff] %v3723
    // Predicated region
    $region70: #{grounding_dino_heads.1} parent=1 // pred_check
      _
    $region71: #{grounding_dino_heads.1} parent=1 // pred_check_branch
      %3733 = sbr.rel (0) target = $region73
    $region72: #{grounding_dino_heads.1} parent=1 // pred_region
      %s3735 = ssub.s32 512, 512
      %3736 = vsyncadd [#allocation3], %s3735
      %s3737 = sshll.u32 [#allocation2], 4
      %s3738 = int_to_ptr.vmem [resolvable:$true] %s3737
      %3743 = dma.vmem_to_hbm [thread:$0]  %s3738, 512, %s17, [#allocation3], 256, 256, 16
    $region73: #{grounding_dino_heads.1} parent=1 // pred_fallthru
      _
    // Predicated region
    $region74: #{grounding_dino_heads.1} parent=1 // pred_check
      _
    $region75: #{grounding_dino_heads.1} parent=1 // pred_check_branch
      %3745 = sbr.rel (0) target = $region77
    $region76: #{grounding_dino_heads.1} parent=1 // pred_region
      %s3747 = ssub.s32 16384, 16384
      %3748 = vsyncadd [#allocation5], %s3747
      %s3749 = sshll.u32 [#allocation4], 4
      %s3750 = int_to_ptr.vmem [resolvable:$true] %s3749
      %3755 = dma.vmem_to_hbm [thread:$0]  %s3750, 16384, %s18, [#allocation5], 256, 256, 16
    $region77: #{grounding_dino_heads.1} parent=1 // pred_fallthru
      _
    // Predicated region
    $region78: #{grounding_dino_heads.1} parent=1 // pred_check
      _
    $region79: #{grounding_dino_heads.1} parent=1 // pred_check_branch
      %3757 = sbr.rel (0) target = $region81
    $region80: #{grounding_dino_heads.1} parent=1 // pred_region
      _
    $region81: #{grounding_dino_heads.1} parent=1 // pred_fallthru
      _
    // Predicated region
    $region82: #{grounding_dino_heads.1} parent=1 // pred_check
      _
    $region83: #{grounding_dino_heads.1} parent=1 // pred_check_branch
      %3759 = sbr.rel (0) target = $region85
    $region84: #{grounding_dino_heads.1} parent=1 // pred_region
      _
    $region85: #{grounding_dino_heads.1} parent=1 // pred_fallthru
      _
    // Predicated region
    $region86: #{grounding_dino_heads.1} parent=1 // pred_check
      _
    $region87: #{grounding_dino_heads.1} parent=1 // pred_check_branch
      %3761 = sbr.rel (0) target = $region89
    $region88: #{grounding_dino_heads.1} parent=1 // pred_region
      %3762 = dma.done [#allocation3], 512
    $region89: #{grounding_dino_heads.1} parent=1 // pred_fallthru
      _
    // Predicated region
    $region90: #{grounding_dino_heads.1} parent=1 // pred_check
      _
    $region91: #{grounding_dino_heads.1} parent=1 // pred_check_branch
      %3764 = sbr.rel (0) target = $region93
    $region92: #{grounding_dino_heads.1} parent=1 // pred_region
      %3765 = dma.done [#allocation5], 16384
    $region93: #{grounding_dino_heads.1} parent=1 // pred_fallthru
      _
    // Predicated region
    $region94: #{grounding_dino_heads.1} parent=1 // pred_check
      _
    $region95: #{grounding_dino_heads.1} parent=1 // pred_check_branch
      %3767 = sbr.rel (0) target = $region97
    $region96: #{grounding_dino_heads.1} parent=1 // pred_region
      _
    $region97: #{grounding_dino_heads.1} parent=1 // pred_fallthru
      _
    // Predicated region
    $region98: #{grounding_dino_heads.1} parent=1 // pred_check
      _
    $region99: #{grounding_dino_heads.1} parent=1 // pred_check_branch
      %3769 = sbr.rel (0) target = $region101
    $region100: #{grounding_dino_heads.1} parent=1 // pred_region
      _
    $region101: #{grounding_dino_heads.1} parent=1 // pred_fallthru
      _
    %3770 = vsyncpa [#allocation3], 1
    %3771 = vsyncpa [#allocation5], 1

</llo_original>
